<compile_context>
chip_gen: v6e
topology: v6e:2x2x1
jax: 0.10.0
libtpu: 0.0.40
codegen_flags: <defaults>
</compile_context>

<pallas_src>
import functools

import jax
import jax.numpy as jnp
from jax.experimental import pallas as pl
from jax.experimental.pallas import tpu as pltpu


# ----------------------------------------------------------------------------
# Fused AuViSubNet kernel: LSTM (last valid hidden state) + Linear
# ----------------------------------------------------------------------------
def _auvi_kernel(x_ref, len_ref, w_ih_ref, w_hh_ref, b_ref, w_out_ref, b_out_ref,
                 y_ref, *, B, T):
    """
    x_ref     : (T*B, Din) f32   time-major flattened sequence (row = t*B + b)
    len_ref   : (B, 1)     int32 valid lengths per sample
    w_ih_ref  : (4, Din, H) f32  per-gate input weights   (gate order i,f,g,o)
    w_hh_ref  : (4, H, H)   f32  per-gate recurrent weights
    b_ref     : (4, 1, H)   f32  per-gate combined bias (b_ih + b_hh)
    w_out_ref : (H, Dout)   f32  linear_1.weight.T
    b_out_ref : (1, Dout)   f32  linear_1.bias
    y_ref     : (B, Dout)   f32  output
    """
    lens = len_ref[...]                                   # (B, 1) int32
    x = x_ref[...]                                        # (T*B, Din)
    H = w_hh_ref.shape[-1]

    # Hoisted input projection: one (T*B, Din) x (Din, H) matmul per gate,
    # bias added once (outside the recurrence).
    xp = [jnp.dot(x, w_ih_ref[g], preferred_element_type=jnp.float32) + b_ref[g]
          for g in range(4)]                              # 4 x (T*B, H)
    w_hh = [w_hh_ref[g] for g in range(4)]                # 4 x (H, H)

    h = jnp.zeros((B, H), jnp.float32)
    c = jnp.zeros((B, H), jnp.float32)

    # T is small and static -> fully unrolled recurrence (static slices only).
    for t in range(T):
        lo = t * B                                        # static row offset
        hh = [jnp.dot(h, w_hh[g], preferred_element_type=jnp.float32)
              for g in range(4)]                          # 4 x (B, H)
        i_g = jax.nn.sigmoid(xp[0][lo:lo + B, :] + hh[0])
        f_g = jax.nn.sigmoid(xp[1][lo:lo + B, :] + hh[1])
        g_g = jnp.tanh(xp[2][lo:lo + B, :] + hh[2])
        o_g = jax.nn.sigmoid(xp[3][lo:lo + B, :] + hh[3])
        c = f_g * c + i_g * g_g                           # c needs no length blend:
        h_new = o_g * jnp.tanh(c)                         # padded steps only occur after
        h = jnp.where(t < lens, h_new, h)                 # the last valid step, and only
                                                          # h is read downstream.

    # Dropout = identity (eval mode); fused final Linear.
    y_ref[...] = (jnp.dot(h, w_out_ref[...], preferred_element_type=jnp.float32)
                  + b_out_ref[...])


def auvi_subnet_forward(params, x, lengths):
    """x: (B, T, in_size) f32, lengths: (B,) int -> (B, out_size) f32."""
    B, T, Din = x.shape
    Dout = params['w_out'].shape[-1]
    # Layout plumbing in the wrapper: time-major flatten so each LSTM step is a
    # contiguous, statically addressed block of B rows inside the kernel.
    x_tb = jnp.transpose(x, (1, 0, 2)).reshape(T * B, Din).astype(jnp.float32)
    lens = lengths.reshape(B, 1).astype(jnp.int32)

    vmem = lambda: pl.BlockSpec(memory_space=pltpu.MemorySpace.VMEM)
    return pl.pallas_call(
        functools.partial(_auvi_kernel, B=B, T=T),
        in_specs=[vmem() for _ in range(7)],
        out_specs=vmem(),
        out_shape=jax.ShapeDtypeStruct((B, Dout), jnp.float32),
    )(x_tb, lens, params['w_ih_g'], params['w_hh_g'], params['b_g'],
      params['w_out'], params['b_out'])


# ----------------------------------------------------------------------------
# Pure-JAX reference (exact pack_padded_sequence semantics: freeze h AND c)
# ----------------------------------------------------------------------------
def auvi_subnet_reference(params, x, lengths):
    B, T, _ = x.shape
    H = params['w_hh_g'].shape[-1]
    w_ih, w_hh, b = params['w_ih_g'], params['w_hh_g'], params['b_g']
    h = jnp.zeros((B, H), jnp.float32)
    c = jnp.zeros((B, H), jnp.float32)
    for t in range(T):
        xt = x[:, t, :].astype(jnp.float32)
        gates = [xt @ w_ih[g] + h @ w_hh[g] + b[g] for g in range(4)]
        i_g = jax.nn.sigmoid(gates[0])
        f_g = jax.nn.sigmoid(gates[1])
        g_g = jnp.tanh(gates[2])
        o_g = jax.nn.sigmoid(gates[3])
        c_new = f_g * c + i_g * g_g
        h_new = o_g * jnp.tanh(c_new)
        valid = (t < lengths)[:, None]
        h = jnp.where(valid, h_new, h)
        c = jnp.where(valid, c_new, c)
    return h @ params['w_out'] + params['b_out']


# ----------------------------------------------------------------------------
# Small synthetic configuration (audio branch of SELF_MM: in=8, hidden=16, out=16)
# ----------------------------------------------------------------------------
B, T = 2, 8
IN_SIZE, HIDDEN, OUT_SIZE = 8, 16, 16


def init_params(key):
    ks = jax.random.split(key, 5)
    s = 0.1
    return {
        # per-gate stacked weights, gate order (i, f, g, o)
        'w_ih_g': s * jax.random.normal(ks[0], (4, IN_SIZE, HIDDEN), jnp.float32),
        'w_hh_g': s * jax.random.normal(ks[1], (4, HIDDEN, HIDDEN), jnp.float32),
        'b_g':    s * jax.random.normal(ks[2], (4, 1, HIDDEN), jnp.float32),  # b_ih + b_hh
        'w_out':  s * jax.random.normal(ks[3], (HIDDEN, OUT_SIZE), jnp.float32),
        'b_out':  s * jax.random.normal(ks[4], (1, OUT_SIZE), jnp.float32),
    }


if __name__ == "__main__":
    key = jax.random.PRNGKey(0)
    k_param, k_x = jax.random.split(key, 2)

    params = init_params(k_param)
    x = jax.random.normal(k_x, (B, T, IN_SIZE), jnp.float32)
    lengths = jnp.array([8, 5], jnp.int32)   # padded sequence lengths

    y = jax.jit(auvi_subnet_forward)(params, x, lengths)
    y = jax.block_until_ready(y)

    y_ref = auvi_subnet_reference(params, x, lengths)
    assert y.shape == (B, OUT_SIZE)
    assert bool(jnp.allclose(y, y_ref, rtol=1e-4, atol=1e-5)), "mismatch vs reference"

    print("KERNEL_OK")
</pallas_src>

<mosaic_0001>
module attributes {stable_mosaic.version = 11 : i64} {
  func.func @_auvi_kernel(%arg0: memref<16x8xf32, #tpu.memory_space<vmem>>, %arg1: memref<2x1xi32, #tpu.memory_space<vmem>>, %arg2: memref<4x8x16xf32, #tpu.memory_space<vmem>>, %arg3: memref<4x16x16xf32, #tpu.memory_space<vmem>>, %arg4: memref<4x1x16xf32, #tpu.memory_space<vmem>>, %arg5: memref<16x16xf32, #tpu.memory_space<vmem>>, %arg6: memref<1x16xf32, #tpu.memory_space<vmem>>, %arg7: memref<2x16xf32, #tpu.memory_space<vmem>>) attributes {dimension_semantics = [], scalar_prefetch = 0 : i64, scratch_operands = 0 : i64, tpu.core_type = #tpu.core_type<tc>} {
    %c0 = arith.constant 0 : index
    %c0_0 = arith.constant 0 : index
    %0 = vector.load %arg1[%c0, %c0_0] : memref<2x1xi32, #tpu.memory_space<vmem>>, vector<2x1xi32>
    %c0_1 = arith.constant 0 : index
    %c0_2 = arith.constant 0 : index
    %1 = vector.load %arg0[%c0_1, %c0_2] : memref<16x8xf32, #tpu.memory_space<vmem>>, vector<16x8xf32>
    %c0_3 = arith.constant 0 : index
    %c0_4 = arith.constant 0 : index
    %c0_5 = arith.constant 0 : index
    %2 = vector.load %arg2[%c0_3, %c0_4, %c0_5] : memref<4x8x16xf32, #tpu.memory_space<vmem>>, vector<1x8x16xf32>
    %3 = vector.shape_cast %2 : vector<1x8x16xf32> to vector<8x16xf32>
    %cst = arith.constant dense<0.000000e+00> : vector<16x16xf32>
    %4 = tpu.matmul %1, %3, %cst {dimension_numbers = #tpu.dot_dimension_numbers<[1], [0], [0], [1], [0, 0, 1, 1], [], []>} : vector<16x8xf32>, vector<8x16xf32>, vector<16x16xf32> -> vector<16x16xf32>
    %c0_6 = arith.constant 0 : index
    %c0_7 = arith.constant 0 : index
    %c0_8 = arith.constant 0 : index
    %5 = vector.load %arg4[%c0_6, %c0_7, %c0_8] : memref<4x1x16xf32, #tpu.memory_space<vmem>>, vector<1x1x16xf32>
    %6 = vector.shape_cast %5 : vector<1x1x16xf32> to vector<1x16xf32>
    %7 = vector.broadcast %6 : vector<1x16xf32> to vector<16x16xf32>
    %8 = arith.addf %4, %7 : vector<16x16xf32>
    %c1 = arith.constant 1 : index
    %c0_9 = arith.constant 0 : index
    %c0_10 = arith.constant 0 : index
    %9 = vector.load %arg2[%c1, %c0_9, %c0_10] : memref<4x8x16xf32, #tpu.memory_space<vmem>>, vector<1x8x16xf32>
    %10 = vector.shape_cast %9 : vector<1x8x16xf32> to vector<8x16xf32>
    %cst_11 = arith.constant dense<0.000000e+00> : vector<16x16xf32>
    %11 = tpu.matmul %1, %10, %cst_11 {dimension_numbers = #tpu.dot_dimension_numbers<[1], [0], [0], [1], [0, 0, 1, 1], [], []>} : vector<16x8xf32>, vector<8x16xf32>, vector<16x16xf32> -> vector<16x16xf32>
    %c1_12 = arith.constant 1 : index
    %c0_13 = arith.constant 0 : index
    %c0_14 = arith.constant 0 : index
    %12 = vector.load %arg4[%c1_12, %c0_13, %c0_14] : memref<4x1x16xf32, #tpu.memory_space<vmem>>, vector<1x1x16xf32>
    %13 = vector.shape_cast %12 : vector<1x1x16xf32> to vector<1x16xf32>
    %14 = vector.broadcast %13 : vector<1x16xf32> to vector<16x16xf32>
    %15 = arith.addf %11, %14 : vector<16x16xf32>
    %c2 = arith.constant 2 : index
    %c0_15 = arith.constant 0 : index
    %c0_16 = arith.constant 0 : index
    %16 = vector.load %arg2[%c2, %c0_15, %c0_16] : memref<4x8x16xf32, #tpu.memory_space<vmem>>, vector<1x8x16xf32>
    %17 = vector.shape_cast %16 : vector<1x8x16xf32> to vector<8x16xf32>
    %cst_17 = arith.constant dense<0.000000e+00> : vector<16x16xf32>
    %18 = tpu.matmul %1, %17, %cst_17 {dimension_numbers = #tpu.dot_dimension_numbers<[1], [0], [0], [1], [0, 0, 1, 1], [], []>} : vector<16x8xf32>, vector<8x16xf32>, vector<16x16xf32> -> vector<16x16xf32>
    %c2_18 = arith.constant 2 : index
    %c0_19 = arith.constant 0 : index
    %c0_20 = arith.constant 0 : index
    %19 = vector.load %arg4[%c2_18, %c0_19, %c0_20] : memref<4x1x16xf32, #tpu.memory_space<vmem>>, vector<1x1x16xf32>
    %20 = vector.shape_cast %19 : vector<1x1x16xf32> to vector<1x16xf32>
    %21 = vector.broadcast %20 : vector<1x16xf32> to vector<16x16xf32>
    %22 = arith.addf %18, %21 : vector<16x16xf32>
    %c3 = arith.constant 3 : index
    %c0_21 = arith.constant 0 : index
    %c0_22 = arith.constant 0 : index
    %23 = vector.load %arg2[%c3, %c0_21, %c0_22] : memref<4x8x16xf32, #tpu.memory_space<vmem>>, vector<1x8x16xf32>
    %24 = vector.shape_cast %23 : vector<1x8x16xf32> to vector<8x16xf32>
    %cst_23 = arith.constant dense<0.000000e+00> : vector<16x16xf32>
    %25 = tpu.matmul %1, %24, %cst_23 {dimension_numbers = #tpu.dot_dimension_numbers<[1], [0], [0], [1], [0, 0, 1, 1], [], []>} : vector<16x8xf32>, vector<8x16xf32>, vector<16x16xf32> -> vector<16x16xf32>
    %c3_24 = arith.constant 3 : index
    %c0_25 = arith.constant 0 : index
    %c0_26 = arith.constant 0 : index
    %26 = vector.load %arg4[%c3_24, %c0_25, %c0_26] : memref<4x1x16xf32, #tpu.memory_space<vmem>>, vector<1x1x16xf32>
    %27 = vector.shape_cast %26 : vector<1x1x16xf32> to vector<1x16xf32>
    %28 = vector.broadcast %27 : vector<1x16xf32> to vector<16x16xf32>
    %29 = arith.addf %25, %28 : vector<16x16xf32>
    %c0_27 = arith.constant 0 : index
    %c0_28 = arith.constant 0 : index
    %c0_29 = arith.constant 0 : index
    %30 = vector.load %arg3[%c0_27, %c0_28, %c0_29] : memref<4x16x16xf32, #tpu.memory_space<vmem>>, vector<1x16x16xf32>
    %31 = vector.shape_cast %30 : vector<1x16x16xf32> to vector<16x16xf32>
    %c1_30 = arith.constant 1 : index
    %c0_31 = arith.constant 0 : index
    %c0_32 = arith.constant 0 : index
    %32 = vector.load %arg3[%c1_30, %c0_31, %c0_32] : memref<4x16x16xf32, #tpu.memory_space<vmem>>, vector<1x16x16xf32>
    %33 = vector.shape_cast %32 : vector<1x16x16xf32> to vector<16x16xf32>
    %c2_33 = arith.constant 2 : index
    %c0_34 = arith.constant 0 : index
    %c0_35 = arith.constant 0 : index
    %34 = vector.load %arg3[%c2_33, %c0_34, %c0_35] : memref<4x16x16xf32, #tpu.memory_space<vmem>>, vector<1x16x16xf32>
    %35 = vector.shape_cast %34 : vector<1x16x16xf32> to vector<16x16xf32>
    %c3_36 = arith.constant 3 : index
    %c0_37 = arith.constant 0 : index
    %c0_38 = arith.constant 0 : index
    %36 = vector.load %arg3[%c3_36, %c0_37, %c0_38] : memref<4x16x16xf32, #tpu.memory_space<vmem>>, vector<1x16x16xf32>
    %37 = vector.shape_cast %36 : vector<1x16x16xf32> to vector<16x16xf32>
    %cst_39 = arith.constant 0.000000e+00 : f32
    %38 = vector.broadcast %cst_39 : f32 to vector<2x16xf32>
    %cst_40 = arith.constant 0.000000e+00 : f32
    %39 = vector.broadcast %cst_40 : f32 to vector<2x16xf32>
    %cst_41 = arith.constant dense<0.000000e+00> : vector<2x16xf32>
    %40 = tpu.matmul %38, %31, %cst_41 {dimension_numbers = #tpu.dot_dimension_numbers<[1], [0], [0], [1], [0, 0, 1, 1], [], []>} : vector<2x16xf32>, vector<16x16xf32>, vector<2x16xf32> -> vector<2x16xf32>
    %cst_42 = arith.constant dense<0.000000e+00> : vector<2x16xf32>
    %41 = tpu.matmul %38, %33, %cst_42 {dimension_numbers = #tpu.dot_dimension_numbers<[1], [0], [0], [1], [0, 0, 1, 1], [], []>} : vector<2x16xf32>, vector<16x16xf32>, vector<2x16xf32> -> vector<2x16xf32>
    %cst_43 = arith.constant dense<0.000000e+00> : vector<2x16xf32>
    %42 = tpu.matmul %38, %35, %cst_43 {dimension_numbers = #tpu.dot_dimension_numbers<[1], [0], [0], [1], [0, 0, 1, 1], [], []>} : vector<2x16xf32>, vector<16x16xf32>, vector<2x16xf32> -> vector<2x16xf32>
    %cst_44 = arith.constant dense<0.000000e+00> : vector<2x16xf32>
    %43 = tpu.matmul %38, %37, %cst_44 {dimension_numbers = #tpu.dot_dimension_numbers<[1], [0], [0], [1], [0, 0, 1, 1], [], []>} : vector<2x16xf32>, vector<16x16xf32>, vector<2x16xf32> -> vector<2x16xf32>
    %44 = vector.extract_strided_slice %8 {offsets = [0, 0], sizes = [2, 16], strides = [1, 1]} : vector<16x16xf32> to vector<2x16xf32>
    %45 = arith.addf %44, %40 : vector<2x16xf32>
    %46 = arith.negf %45 : vector<2x16xf32>
    %47 = math.exp %46 : vector<2x16xf32>
    %cst_45 = arith.constant 1.000000e+00 : f32
    %48 = vector.broadcast %cst_45 : f32 to vector<2x16xf32>
    %49 = arith.addf %48, %47 : vector<2x16xf32>
    %50 = arith.divf %48, %49 : vector<2x16xf32>
    %51 = vector.extract_strided_slice %15 {offsets = [0, 0], sizes = [2, 16], strides = [1, 1]} : vector<16x16xf32> to vector<2x16xf32>
    %52 = arith.addf %51, %41 : vector<2x16xf32>
    %53 = arith.negf %52 : vector<2x16xf32>
    %54 = math.exp %53 : vector<2x16xf32>
    %cst_46 = arith.constant 1.000000e+00 : f32
    %55 = vector.broadcast %cst_46 : f32 to vector<2x16xf32>
    %56 = arith.addf %55, %54 : vector<2x16xf32>
    %57 = arith.divf %55, %56 : vector<2x16xf32>
    %58 = vector.extract_strided_slice %22 {offsets = [0, 0], sizes = [2, 16], strides = [1, 1]} : vector<16x16xf32> to vector<2x16xf32>
    %59 = arith.addf %58, %42 : vector<2x16xf32>
    %60 = math.tanh %59 : vector<2x16xf32>
    %61 = vector.extract_strided_slice %29 {offsets = [0, 0], sizes = [2, 16], strides = [1, 1]} : vector<16x16xf32> to vector<2x16xf32>
    %62 = arith.addf %61, %43 : vector<2x16xf32>
    %63 = arith.negf %62 : vector<2x16xf32>
    %64 = math.exp %63 : vector<2x16xf32>
    %cst_47 = arith.constant 1.000000e+00 : f32
    %65 = vector.broadcast %cst_47 : f32 to vector<2x16xf32>
    %66 = arith.addf %65, %64 : vector<2x16xf32>
    %67 = arith.divf %65, %66 : vector<2x16xf32>
    %68 = arith.mulf %57, %39 : vector<2x16xf32>
    %69 = arith.mulf %50, %60 : vector<2x16xf32>
    %70 = arith.addf %68, %69 : vector<2x16xf32>
    %71 = math.tanh %70 : vector<2x16xf32>
    %72 = arith.mulf %67, %71 : vector<2x16xf32>
    %c0_i32 = arith.constant 0 : i32
    %73 = vector.broadcast %c0_i32 : i32 to vector<2x1xi32>
    %74 = arith.cmpi sgt, %0, %73 : vector<2x1xi32>
    %75 = vector.shape_cast %74 : vector<2x1xi1> to vector<2x1xi1>
    %76 = vector.broadcast %75 : vector<2x1xi1> to vector<2x16xi1>
    %77 = arith.select %76, %72, %38 : vector<2x16xi1>, vector<2x16xf32>
    %cst_48 = arith.constant dense<0.000000e+00> : vector<2x16xf32>
    %78 = tpu.matmul %77, %31, %cst_48 {dimension_numbers = #tpu.dot_dimension_numbers<[1], [0], [0], [1], [0, 0, 1, 1], [], []>} : vector<2x16xf32>, vector<16x16xf32>, vector<2x16xf32> -> vector<2x16xf32>
    %cst_49 = arith.constant dense<0.000000e+00> : vector<2x16xf32>
    %79 = tpu.matmul %77, %33, %cst_49 {dimension_numbers = #tpu.dot_dimension_numbers<[1], [0], [0], [1], [0, 0, 1, 1], [], []>} : vector<2x16xf32>, vector<16x16xf32>, vector<2x16xf32> -> vector<2x16xf32>
    %cst_50 = arith.constant dense<0.000000e+00> : vector<2x16xf32>
    %80 = tpu.matmul %77, %35, %cst_50 {dimension_numbers = #tpu.dot_dimension_numbers<[1], [0], [0], [1], [0, 0, 1, 1], [], []>} : vector<2x16xf32>, vector<16x16xf32>, vector<2x16xf32> -> vector<2x16xf32>
    %cst_51 = arith.constant dense<0.000000e+00> : vector<2x16xf32>
    %81 = tpu.matmul %77, %37, %cst_51 {dimension_numbers = #tpu.dot_dimension_numbers<[1], [0], [0], [1], [0, 0, 1, 1], [], []>} : vector<2x16xf32>, vector<16x16xf32>, vector<2x16xf32> -> vector<2x16xf32>
    %82 = vector.extract_strided_slice %8 {offsets = [2, 0], sizes = [2, 16], strides = [1, 1]} : vector<16x16xf32> to vector<2x16xf32>
    %83 = arith.addf %82, %78 : vector<2x16xf32>
    %84 = arith.negf %83 : vector<2x16xf32>
    %85 = math.exp %84 : vector<2x16xf32>
    %cst_52 = arith.constant 1.000000e+00 : f32
    %86 = vector.broadcast %cst_52 : f32 to vector<2x16xf32>
    %87 = arith.addf %86, %85 : vector<2x16xf32>
    %88 = arith.divf %86, %87 : vector<2x16xf32>
    %89 = vector.extract_strided_slice %15 {offsets = [2, 0], sizes = [2, 16], strides = [1, 1]} : vector<16x16xf32> to vector<2x16xf32>
    %90 = arith.addf %89, %79 : vector<2x16xf32>
    %91 = arith.negf %90 : vector<2x16xf32>
    %92 = math.exp %91 : vector<2x16xf32>
    %cst_53 = arith.constant 1.000000e+00 : f32
    %93 = vector.broadcast %cst_53 : f32 to vector<2x16xf32>
    %94 = arith.addf %93, %92 : vector<2x16xf32>
    %95 = arith.divf %93, %94 : vector<2x16xf32>
    %96 = vector.extract_strided_slice %22 {offsets = [2, 0], sizes = [2, 16], strides = [1, 1]} : vector<16x16xf32> to vector<2x16xf32>
    %97 = arith.addf %96, %80 : vector<2x16xf32>
    %98 = math.tanh %97 : vector<2x16xf32>
    %99 = vector.extract_strided_slice %29 {offsets = [2, 0], sizes = [2, 16], strides = [1, 1]} : vector<16x16xf32> to vector<2x16xf32>
    %100 = arith.addf %99, %81 : vector<2x16xf32>
    %101 = arith.negf %100 : vector<2x16xf32>
    %102 = math.exp %101 : vector<2x16xf32>
    %cst_54 = arith.constant 1.000000e+00 : f32
    %103 = vector.broadcast %cst_54 : f32 to vector<2x16xf32>
    %104 = arith.addf %103, %102 : vector<2x16xf32>
    %105 = arith.divf %103, %104 : vector<2x16xf32>
    %106 = arith.mulf %95, %70 : vector<2x16xf32>
    %107 = arith.mulf %88, %98 : vector<2x16xf32>
    %108 = arith.addf %106, %107 : vector<2x16xf32>
    %109 = math.tanh %108 : vector<2x16xf32>
    %110 = arith.mulf %105, %109 : vector<2x16xf32>
    %c1_i32 = arith.constant 1 : i32
    %111 = vector.broadcast %c1_i32 : i32 to vector<2x1xi32>
    %112 = arith.cmpi sgt, %0, %111 : vector<2x1xi32>
    %113 = vector.shape_cast %112 : vector<2x1xi1> to vector<2x1xi1>
    %114 = vector.broadcast %113 : vector<2x1xi1> to vector<2x16xi1>
    %115 = arith.select %114, %110, %77 : vector<2x16xi1>, vector<2x16xf32>
    %cst_55 = arith.constant dense<0.000000e+00> : vector<2x16xf32>
    %116 = tpu.matmul %115, %31, %cst_55 {dimension_numbers = #tpu.dot_dimension_numbers<[1], [0], [0], [1], [0, 0, 1, 1], [], []>} : vector<2x16xf32>, vector<16x16xf32>, vector<2x16xf32> -> vector<2x16xf32>
    %cst_56 = arith.constant dense<0.000000e+00> : vector<2x16xf32>
    %117 = tpu.matmul %115, %33, %cst_56 {dimension_numbers = #tpu.dot_dimension_numbers<[1], [0], [0], [1], [0, 0, 1, 1], [], []>} : vector<2x16xf32>, vector<16x16xf32>, vector<2x16xf32> -> vector<2x16xf32>
    %cst_57 = arith.constant dense<0.000000e+00> : vector<2x16xf32>
    %118 = tpu.matmul %115, %35, %cst_57 {dimension_numbers = #tpu.dot_dimension_numbers<[1], [0], [0], [1], [0, 0, 1, 1], [], []>} : vector<2x16xf32>, vector<16x16xf32>, vector<2x16xf32> -> vector<2x16xf32>
    %cst_58 = arith.constant dense<0.000000e+00> : vector<2x16xf32>
    %119 = tpu.matmul %115, %37, %cst_58 {dimension_numbers = #tpu.dot_dimension_numbers<[1], [0], [0], [1], [0, 0, 1, 1], [], []>} : vector<2x16xf32>, vector<16x16xf32>, vector<2x16xf32> -> vector<2x16xf32>
    %120 = vector.extract_strided_slice %8 {offsets = [4, 0], sizes = [2, 16], strides = [1, 1]} : vector<16x16xf32> to vector<2x16xf32>
    %121 = arith.addf %120, %116 : vector<2x16xf32>
    %122 = arith.negf %121 : vector<2x16xf32>
    %123 = math.exp %122 : vector<2x16xf32>
    %cst_59 = arith.constant 1.000000e+00 : f32
    %124 = vector.broadcast %cst_59 : f32 to vector<2x16xf32>
    %125 = arith.addf %124, %123 : vector<2x16xf32>
    %126 = arith.divf %124, %125 : vector<2x16xf32>
    %127 = vector.extract_strided_slice %15 {offsets = [4, 0], sizes = [2, 16], strides = [1, 1]} : vector<16x16xf32> to vector<2x16xf32>
    %128 = arith.addf %127, %117 : vector<2x16xf32>
    %129 = arith.negf %128 : vector<2x16xf32>
    %130 = math.exp %129 : vector<2x16xf32>
    %cst_60 = arith.constant 1.000000e+00 : f32
    %131 = vector.broadcast %cst_60 : f32 to vector<2x16xf32>
    %132 = arith.addf %131, %130 : vector<2x16xf32>
    %133 = arith.divf %131, %132 : vector<2x16xf32>
    %134 = vector.extract_strided_slice %22 {offsets = [4, 0], sizes = [2, 16], strides = [1, 1]} : vector<16x16xf32> to vector<2x16xf32>
    %135 = arith.addf %134, %118 : vector<2x16xf32>
    %136 = math.tanh %135 : vector<2x16xf32>
    %137 = vector.extract_strided_slice %29 {offsets = [4, 0], sizes = [2, 16], strides = [1, 1]} : vector<16x16xf32> to vector<2x16xf32>
    %138 = arith.addf %137, %119 : vector<2x16xf32>
    %139 = arith.negf %138 : vector<2x16xf32>
    %140 = math.exp %139 : vector<2x16xf32>
    %cst_61 = arith.constant 1.000000e+00 : f32
    %141 = vector.broadcast %cst_61 : f32 to vector<2x16xf32>
    %142 = arith.addf %141, %140 : vector<2x16xf32>
    %143 = arith.divf %141, %142 : vector<2x16xf32>
    %144 = arith.mulf %133, %108 : vector<2x16xf32>
    %145 = arith.mulf %126, %136 : vector<2x16xf32>
    %146 = arith.addf %144, %145 : vector<2x16xf32>
    %147 = math.tanh %146 : vector<2x16xf32>
    %148 = arith.mulf %143, %147 : vector<2x16xf32>
    %c2_i32 = arith.constant 2 : i32
    %149 = vector.broadcast %c2_i32 : i32 to vector<2x1xi32>
    %150 = arith.cmpi sgt, %0, %149 : vector<2x1xi32>
    %151 = vector.shape_cast %150 : vector<2x1xi1> to vector<2x1xi1>
    %152 = vector.broadcast %151 : vector<2x1xi1> to vector<2x16xi1>
    %153 = arith.select %152, %148, %115 : vector<2x16xi1>, vector<2x16xf32>
    %cst_62 = arith.constant dense<0.000000e+00> : vector<2x16xf32>
    %154 = tpu.matmul %153, %31, %cst_62 {dimension_numbers = #tpu.dot_dimension_numbers<[1], [0], [0], [1], [0, 0, 1, 1], [], []>} : vector<2x16xf32>, vector<16x16xf32>, vector<2x16xf32> -> vector<2x16xf32>
    %cst_63 = arith.constant dense<0.000000e+00> : vector<2x16xf32>
    %155 = tpu.matmul %153, %33, %cst_63 {dimension_numbers = #tpu.dot_dimension_numbers<[1], [0], [0], [1], [0, 0, 1, 1], [], []>} : vector<2x16xf32>, vector<16x16xf32>, vector<2x16xf32> -> vector<2x16xf32>
    %cst_64 = arith.constant dense<0.000000e+00> : vector<2x16xf32>
    %156 = tpu.matmul %153, %35, %cst_64 {dimension_numbers = #tpu.dot_dimension_numbers<[1], [0], [0], [1], [0, 0, 1, 1], [], []>} : vector<2x16xf32>, vector<16x16xf32>, vector<2x16xf32> -> vector<2x16xf32>
    %cst_65 = arith.constant dense<0.000000e+00> : vector<2x16xf32>
    %157 = tpu.matmul %153, %37, %cst_65 {dimension_numbers = #tpu.dot_dimension_numbers<[1], [0], [0], [1], [0, 0, 1, 1], [], []>} : vector<2x16xf32>, vector<16x16xf32>, vector<2x16xf32> -> vector<2x16xf32>
    %158 = vector.extract_strided_slice %8 {offsets = [6, 0], sizes = [2, 16], strides = [1, 1]} : vector<16x16xf32> to vector<2x16xf32>
    %159 = arith.addf %158, %154 : vector<2x16xf32>
    %160 = arith.negf %159 : vector<2x16xf32>
    %161 = math.exp %160 : vector<2x16xf32>
    %cst_66 = arith.constant 1.000000e+00 : f32
    %162 = vector.broadcast %cst_66 : f32 to vector<2x16xf32>
    %163 = arith.addf %162, %161 : vector<2x16xf32>
    %164 = arith.divf %162, %163 : vector<2x16xf32>
    %165 = vector.extract_strided_slice %15 {offsets = [6, 0], sizes = [2, 16], strides = [1, 1]} : vector<16x16xf32> to vector<2x16xf32>
    %166 = arith.addf %165, %155 : vector<2x16xf32>
    %167 = arith.negf %166 : vector<2x16xf32>
    %168 = math.exp %167 : vector<2x16xf32>
    %cst_67 = arith.constant 1.000000e+00 : f32
    %169 = vector.broadcast %cst_67 : f32 to vector<2x16xf32>
    %170 = arith.addf %169, %168 : vector<2x16xf32>
    %171 = arith.divf %169, %170 : vector<2x16xf32>
    %172 = vector.extract_strided_slice %22 {offsets = [6, 0], sizes = [2, 16], strides = [1, 1]} : vector<16x16xf32> to vector<2x16xf32>
    %173 = arith.addf %172, %156 : vector<2x16xf32>
    %174 = math.tanh %173 : vector<2x16xf32>
    %175 = vector.extract_strided_slice %29 {offsets = [6, 0], sizes = [2, 16], strides = [1, 1]} : vector<16x16xf32> to vector<2x16xf32>
    %176 = arith.addf %175, %157 : vector<2x16xf32>
    %177 = arith.negf %176 : vector<2x16xf32>
    %178 = math.exp %177 : vector<2x16xf32>
    %cst_68 = arith.constant 1.000000e+00 : f32
    %179 = vector.broadcast %cst_68 : f32 to vector<2x16xf32>
    %180 = arith.addf %179, %178 : vector<2x16xf32>
    %181 = arith.divf %179, %180 : vector<2x16xf32>
    %182 = arith.mulf %171, %146 : vector<2x16xf32>
    %183 = arith.mulf %164, %174 : vector<2x16xf32>
    %184 = arith.addf %182, %183 : vector<2x16xf32>
    %185 = math.tanh %184 : vector<2x16xf32>
    %186 = arith.mulf %181, %185 : vector<2x16xf32>
    %c3_i32 = arith.constant 3 : i32
    %187 = vector.broadcast %c3_i32 : i32 to vector<2x1xi32>
    %188 = arith.cmpi sgt, %0, %187 : vector<2x1xi32>
    %189 = vector.shape_cast %188 : vector<2x1xi1> to vector<2x1xi1>
    %190 = vector.broadcast %189 : vector<2x1xi1> to vector<2x16xi1>
    %191 = arith.select %190, %186, %153 : vector<2x16xi1>, vector<2x16xf32>
    %cst_69 = arith.constant dense<0.000000e+00> : vector<2x16xf32>
    %192 = tpu.matmul %191, %31, %cst_69 {dimension_numbers = #tpu.dot_dimension_numbers<[1], [0], [0], [1], [0, 0, 1, 1], [], []>} : vector<2x16xf32>, vector<16x16xf32>, vector<2x16xf32> -> vector<2x16xf32>
    %cst_70 = arith.constant dense<0.000000e+00> : vector<2x16xf32>
    %193 = tpu.matmul %191, %33, %cst_70 {dimension_numbers = #tpu.dot_dimension_numbers<[1], [0], [0], [1], [0, 0, 1, 1], [], []>} : vector<2x16xf32>, vector<16x16xf32>, vector<2x16xf32> -> vector<2x16xf32>
    %cst_71 = arith.constant dense<0.000000e+00> : vector<2x16xf32>
    %194 = tpu.matmul %191, %35, %cst_71 {dimension_numbers = #tpu.dot_dimension_numbers<[1], [0], [0], [1], [0, 0, 1, 1], [], []>} : vector<2x16xf32>, vector<16x16xf32>, vector<2x16xf32> -> vector<2x16xf32>
    %cst_72 = arith.constant dense<0.000000e+00> : vector<2x16xf32>
    %195 = tpu.matmul %191, %37, %cst_72 {dimension_numbers = #tpu.dot_dimension_numbers<[1], [0], [0], [1], [0, 0, 1, 1], [], []>} : vector<2x16xf32>, vector<16x16xf32>, vector<2x16xf32> -> vector<2x16xf32>
    %196 = vector.extract_strided_slice %8 {offsets = [8, 0], sizes = [2, 16], strides = [1, 1]} : vector<16x16xf32> to vector<2x16xf32>
    %197 = arith.addf %196, %192 : vector<2x16xf32>
    %198 = arith.negf %197 : vector<2x16xf32>
    %199 = math.exp %198 : vector<2x16xf32>
    %cst_73 = arith.constant 1.000000e+00 : f32
    %200 = vector.broadcast %cst_73 : f32 to vector<2x16xf32>
    %201 = arith.addf %200, %199 : vector<2x16xf32>
    %202 = arith.divf %200, %201 : vector<2x16xf32>
    %203 = vector.extract_strided_slice %15 {offsets = [8, 0], sizes = [2, 16], strides = [1, 1]} : vector<16x16xf32> to vector<2x16xf32>
    %204 = arith.addf %203, %193 : vector<2x16xf32>
    %205 = arith.negf %204 : vector<2x16xf32>
    %206 = math.exp %205 : vector<2x16xf32>
    %cst_74 = arith.constant 1.000000e+00 : f32
    %207 = vector.broadcast %cst_74 : f32 to vector<2x16xf32>
    %208 = arith.addf %207, %206 : vector<2x16xf32>
    %209 = arith.divf %207, %208 : vector<2x16xf32>
    %210 = vector.extract_strided_slice %22 {offsets = [8, 0], sizes = [2, 16], strides = [1, 1]} : vector<16x16xf32> to vector<2x16xf32>
    %211 = arith.addf %210, %194 : vector<2x16xf32>
    %212 = math.tanh %211 : vector<2x16xf32>
    %213 = vector.extract_strided_slice %29 {offsets = [8, 0], sizes = [2, 16], strides = [1, 1]} : vector<16x16xf32> to vector<2x16xf32>
    %214 = arith.addf %213, %195 : vector<2x16xf32>
    %215 = arith.negf %214 : vector<2x16xf32>
    %216 = math.exp %215 : vector<2x16xf32>
    %cst_75 = arith.constant 1.000000e+00 : f32
    %217 = vector.broadcast %cst_75 : f32 to vector<2x16xf32>
    %218 = arith.addf %217, %216 : vector<2x16xf32>
    %219 = arith.divf %217, %218 : vector<2x16xf32>
    %220 = arith.mulf %209, %184 : vector<2x16xf32>
    %221 = arith.mulf %202, %212 : vector<2x16xf32>
    %222 = arith.addf %220, %221 : vector<2x16xf32>
    %223 = math.tanh %222 : vector<2x16xf32>
    %224 = arith.mulf %219, %223 : vector<2x16xf32>
    %c4_i32 = arith.constant 4 : i32
    %225 = vector.broadcast %c4_i32 : i32 to vector<2x1xi32>
    %226 = arith.cmpi sgt, %0, %225 : vector<2x1xi32>
    %227 = vector.shape_cast %226 : vector<2x1xi1> to vector<2x1xi1>
    %228 = vector.broadcast %227 : vector<2x1xi1> to vector<2x16xi1>
    %229 = arith.select %228, %224, %191 : vector<2x16xi1>, vector<2x16xf32>
    %cst_76 = arith.constant dense<0.000000e+00> : vector<2x16xf32>
    %230 = tpu.matmul %229, %31, %cst_76 {dimension_numbers = #tpu.dot_dimension_numbers<[1], [0], [0], [1], [0, 0, 1, 1], [], []>} : vector<2x16xf32>, vector<16x16xf32>, vector<2x16xf32> -> vector<2x16xf32>
    %cst_77 = arith.constant dense<0.000000e+00> : vector<2x16xf32>
    %231 = tpu.matmul %229, %33, %cst_77 {dimension_numbers = #tpu.dot_dimension_numbers<[1], [0], [0], [1], [0, 0, 1, 1], [], []>} : vector<2x16xf32>, vector<16x16xf32>, vector<2x16xf32> -> vector<2x16xf32>
    %cst_78 = arith.constant dense<0.000000e+00> : vector<2x16xf32>
    %232 = tpu.matmul %229, %35, %cst_78 {dimension_numbers = #tpu.dot_dimension_numbers<[1], [0], [0], [1], [0, 0, 1, 1], [], []>} : vector<2x16xf32>, vector<16x16xf32>, vector<2x16xf32> -> vector<2x16xf32>
    %cst_79 = arith.constant dense<0.000000e+00> : vector<2x16xf32>
    %233 = tpu.matmul %229, %37, %cst_79 {dimension_numbers = #tpu.dot_dimension_numbers<[1], [0], [0], [1], [0, 0, 1, 1], [], []>} : vector<2x16xf32>, vector<16x16xf32>, vector<2x16xf32> -> vector<2x16xf32>
    %234 = vector.extract_strided_slice %8 {offsets = [10, 0], sizes = [2, 16], strides = [1, 1]} : vector<16x16xf32> to vector<2x16xf32>
    %235 = arith.addf %234, %230 : vector<2x16xf32>
    %236 = arith.negf %235 : vector<2x16xf32>
    %237 = math.exp %236 : vector<2x16xf32>
    %cst_80 = arith.constant 1.000000e+00 : f32
    %238 = vector.broadcast %cst_80 : f32 to vector<2x16xf32>
    %239 = arith.addf %238, %237 : vector<2x16xf32>
    %240 = arith.divf %238, %239 : vector<2x16xf32>
    %241 = vector.extract_strided_slice %15 {offsets = [10, 0], sizes = [2, 16], strides = [1, 1]} : vector<16x16xf32> to vector<2x16xf32>
    %242 = arith.addf %241, %231 : vector<2x16xf32>
    %243 = arith.negf %242 : vector<2x16xf32>
    %244 = math.exp %243 : vector<2x16xf32>
    %cst_81 = arith.constant 1.000000e+00 : f32
    %245 = vector.broadcast %cst_81 : f32 to vector<2x16xf32>
    %246 = arith.addf %245, %244 : vector<2x16xf32>
    %247 = arith.divf %245, %246 : vector<2x16xf32>
    %248 = vector.extract_strided_slice %22 {offsets = [10, 0], sizes = [2, 16], strides = [1, 1]} : vector<16x16xf32> to vector<2x16xf32>
    %249 = arith.addf %248, %232 : vector<2x16xf32>
    %250 = math.tanh %249 : vector<2x16xf32>
    %251 = vector.extract_strided_slice %29 {offsets = [10, 0], sizes = [2, 16], strides = [1, 1]} : vector<16x16xf32> to vector<2x16xf32>
    %252 = arith.addf %251, %233 : vector<2x16xf32>
    %253 = arith.negf %252 : vector<2x16xf32>
    %254 = math.exp %253 : vector<2x16xf32>
    %cst_82 = arith.constant 1.000000e+00 : f32
    %255 = vector.broadcast %cst_82 : f32 to vector<2x16xf32>
    %256 = arith.addf %255, %254 : vector<2x16xf32>
    %257 = arith.divf %255, %256 : vector<2x16xf32>
    %258 = arith.mulf %247, %222 : vector<2x16xf32>
    %259 = arith.mulf %240, %250 : vector<2x16xf32>
    %260 = arith.addf %258, %259 : vector<2x16xf32>
    %261 = math.tanh %260 : vector<2x16xf32>
    %262 = arith.mulf %257, %261 : vector<2x16xf32>
    %c5_i32 = arith.constant 5 : i32
    %263 = vector.broadcast %c5_i32 : i32 to vector<2x1xi32>
    %264 = arith.cmpi sgt, %0, %263 : vector<2x1xi32>
    %265 = vector.shape_cast %264 : vector<2x1xi1> to vector<2x1xi1>
    %266 = vector.broadcast %265 : vector<2x1xi1> to vector<2x16xi1>
    %267 = arith.select %266, %262, %229 : vector<2x16xi1>, vector<2x16xf32>
    %cst_83 = arith.constant dense<0.000000e+00> : vector<2x16xf32>
    %268 = tpu.matmul %267, %31, %cst_83 {dimension_numbers = #tpu.dot_dimension_numbers<[1], [0], [0], [1], [0, 0, 1, 1], [], []>} : vector<2x16xf32>, vector<16x16xf32>, vector<2x16xf32> -> vector<2x16xf32>
    %cst_84 = arith.constant dense<0.000000e+00> : vector<2x16xf32>
    %269 = tpu.matmul %267, %33, %cst_84 {dimension_numbers = #tpu.dot_dimension_numbers<[1], [0], [0], [1], [0, 0, 1, 1], [], []>} : vector<2x16xf32>, vector<16x16xf32>, vector<2x16xf32> -> vector<2x16xf32>
    %cst_85 = arith.constant dense<0.000000e+00> : vector<2x16xf32>
    %270 = tpu.matmul %267, %35, %cst_85 {dimension_numbers = #tpu.dot_dimension_numbers<[1], [0], [0], [1], [0, 0, 1, 1], [], []>} : vector<2x16xf32>, vector<16x16xf32>, vector<2x16xf32> -> vector<2x16xf32>
    %cst_86 = arith.constant dense<0.000000e+00> : vector<2x16xf32>
    %271 = tpu.matmul %267, %37, %cst_86 {dimension_numbers = #tpu.dot_dimension_numbers<[1], [0], [0], [1], [0, 0, 1, 1], [], []>} : vector<2x16xf32>, vector<16x16xf32>, vector<2x16xf32> -> vector<2x16xf32>
    %272 = vector.extract_strided_slice %8 {offsets = [12, 0], sizes = [2, 16], strides = [1, 1]} : vector<16x16xf32> to vector<2x16xf32>
    %273 = arith.addf %272, %268 : vector<2x16xf32>
    %274 = arith.negf %273 : vector<2x16xf32>
    %275 = math.exp %274 : vector<2x16xf32>
    %cst_87 = arith.constant 1.000000e+00 : f32
    %276 = vector.broadcast %cst_87 : f32 to vector<2x16xf32>
    %277 = arith.addf %276, %275 : vector<2x16xf32>
    %278 = arith.divf %276, %277 : vector<2x16xf32>
    %279 = vector.extract_strided_slice %15 {offsets = [12, 0], sizes = [2, 16], strides = [1, 1]} : vector<16x16xf32> to vector<2x16xf32>
    %280 = arith.addf %279, %269 : vector<2x16xf32>
    %281 = arith.negf %280 : vector<2x16xf32>
    %282 = math.exp %281 : vector<2x16xf32>
    %cst_88 = arith.constant 1.000000e+00 : f32
    %283 = vector.broadcast %cst_88 : f32 to vector<2x16xf32>
    %284 = arith.addf %283, %282 : vector<2x16xf32>
    %285 = arith.divf %283, %284 : vector<2x16xf32>
    %286 = vector.extract_strided_slice %22 {offsets = [12, 0], sizes = [2, 16], strides = [1, 1]} : vector<16x16xf32> to vector<2x16xf32>
    %287 = arith.addf %286, %270 : vector<2x16xf32>
    %288 = math.tanh %287 : vector<2x16xf32>
    %289 = vector.extract_strided_slice %29 {offsets = [12, 0], sizes = [2, 16], strides = [1, 1]} : vector<16x16xf32> to vector<2x16xf32>
    %290 = arith.addf %289, %271 : vector<2x16xf32>
    %291 = arith.negf %290 : vector<2x16xf32>
    %292 = math.exp %291 : vector<2x16xf32>
    %cst_89 = arith.constant 1.000000e+00 : f32
    %293 = vector.broadcast %cst_89 : f32 to vector<2x16xf32>
    %294 = arith.addf %293, %292 : vector<2x16xf32>
    %295 = arith.divf %293, %294 : vector<2x16xf32>
    %296 = arith.mulf %285, %260 : vector<2x16xf32>
    %297 = arith.mulf %278, %288 : vector<2x16xf32>
    %298 = arith.addf %296, %297 : vector<2x16xf32>
    %299 = math.tanh %298 : vector<2x16xf32>
    %300 = arith.mulf %295, %299 : vector<2x16xf32>
    %c6_i32 = arith.constant 6 : i32
    %301 = vector.broadcast %c6_i32 : i32 to vector<2x1xi32>
    %302 = arith.cmpi sgt, %0, %301 : vector<2x1xi32>
    %303 = vector.shape_cast %302 : vector<2x1xi1> to vector<2x1xi1>
    %304 = vector.broadcast %303 : vector<2x1xi1> to vector<2x16xi1>
    %305 = arith.select %304, %300, %267 : vector<2x16xi1>, vector<2x16xf32>
    %cst_90 = arith.constant dense<0.000000e+00> : vector<2x16xf32>
    %306 = tpu.matmul %305, %31, %cst_90 {dimension_numbers = #tpu.dot_dimension_numbers<[1], [0], [0], [1], [0, 0, 1, 1], [], []>} : vector<2x16xf32>, vector<16x16xf32>, vector<2x16xf32> -> vector<2x16xf32>
    %cst_91 = arith.constant dense<0.000000e+00> : vector<2x16xf32>
    %307 = tpu.matmul %305, %33, %cst_91 {dimension_numbers = #tpu.dot_dimension_numbers<[1], [0], [0], [1], [0, 0, 1, 1], [], []>} : vector<2x16xf32>, vector<16x16xf32>, vector<2x16xf32> -> vector<2x16xf32>
    %cst_92 = arith.constant dense<0.000000e+00> : vector<2x16xf32>
    %308 = tpu.matmul %305, %35, %cst_92 {dimension_numbers = #tpu.dot_dimension_numbers<[1], [0], [0], [1], [0, 0, 1, 1], [], []>} : vector<2x16xf32>, vector<16x16xf32>, vector<2x16xf32> -> vector<2x16xf32>
    %cst_93 = arith.constant dense<0.000000e+00> : vector<2x16xf32>
    %309 = tpu.matmul %305, %37, %cst_93 {dimension_numbers = #tpu.dot_dimension_numbers<[1], [0], [0], [1], [0, 0, 1, 1], [], []>} : vector<2x16xf32>, vector<16x16xf32>, vector<2x16xf32> -> vector<2x16xf32>
    %310 = vector.extract_strided_slice %8 {offsets = [14, 0], sizes = [2, 16], strides = [1, 1]} : vector<16x16xf32> to vector<2x16xf32>
    %311 = arith.addf %310, %306 : vector<2x16xf32>
    %312 = arith.negf %311 : vector<2x16xf32>
    %313 = math.exp %312 : vector<2x16xf32>
    %cst_94 = arith.constant 1.000000e+00 : f32
    %314 = vector.broadcast %cst_94 : f32 to vector<2x16xf32>
    %315 = arith.addf %314, %313 : vector<2x16xf32>
    %316 = arith.divf %314, %315 : vector<2x16xf32>
    %317 = vector.extract_strided_slice %15 {offsets = [14, 0], sizes = [2, 16], strides = [1, 1]} : vector<16x16xf32> to vector<2x16xf32>
    %318 = arith.addf %317, %307 : vector<2x16xf32>
    %319 = arith.negf %318 : vector<2x16xf32>
    %320 = math.exp %319 : vector<2x16xf32>
    %cst_95 = arith.constant 1.000000e+00 : f32
    %321 = vector.broadcast %cst_95 : f32 to vector<2x16xf32>
    %322 = arith.addf %321, %320 : vector<2x16xf32>
    %323 = arith.divf %321, %322 : vector<2x16xf32>
    %324 = vector.extract_strided_slice %22 {offsets = [14, 0], sizes = [2, 16], strides = [1, 1]} : vector<16x16xf32> to vector<2x16xf32>
    %325 = arith.addf %324, %308 : vector<2x16xf32>
    %326 = math.tanh %325 : vector<2x16xf32>
    %327 = vector.extract_strided_slice %29 {offsets = [14, 0], sizes = [2, 16], strides = [1, 1]} : vector<16x16xf32> to vector<2x16xf32>
    %328 = arith.addf %327, %309 : vector<2x16xf32>
    %329 = arith.negf %328 : vector<2x16xf32>
    %330 = math.exp %329 : vector<2x16xf32>
    %cst_96 = arith.constant 1.000000e+00 : f32
    %331 = vector.broadcast %cst_96 : f32 to vector<2x16xf32>
    %332 = arith.addf %331, %330 : vector<2x16xf32>
    %333 = arith.divf %331, %332 : vector<2x16xf32>
    %334 = arith.mulf %323, %298 : vector<2x16xf32>
    %335 = arith.mulf %316, %326 : vector<2x16xf32>
    %336 = arith.addf %334, %335 : vector<2x16xf32>
    %337 = math.tanh %336 : vector<2x16xf32>
    %338 = arith.mulf %333, %337 : vector<2x16xf32>
    %c7_i32 = arith.constant 7 : i32
    %339 = vector.broadcast %c7_i32 : i32 to vector<2x1xi32>
    %340 = arith.cmpi sgt, %0, %339 : vector<2x1xi32>
    %341 = vector.shape_cast %340 : vector<2x1xi1> to vector<2x1xi1>
    %342 = vector.broadcast %341 : vector<2x1xi1> to vector<2x16xi1>
    %343 = arith.select %342, %338, %305 : vector<2x16xi1>, vector<2x16xf32>
    %c0_97 = arith.constant 0 : index
    %c0_98 = arith.constant 0 : index
    %344 = vector.load %arg5[%c0_97, %c0_98] : memref<16x16xf32, #tpu.memory_space<vmem>>, vector<16x16xf32>
    %cst_99 = arith.constant dense<0.000000e+00> : vector<2x16xf32>
    %345 = tpu.matmul %343, %344, %cst_99 {dimension_numbers = #tpu.dot_dimension_numbers<[1], [0], [0], [1], [0, 0, 1, 1], [], []>} : vector<2x16xf32>, vector<16x16xf32>, vector<2x16xf32> -> vector<2x16xf32>
    %c0_100 = arith.constant 0 : index
    %c0_101 = arith.constant 0 : index
    %346 = vector.load %arg6[%c0_100, %c0_101] : memref<1x16xf32, #tpu.memory_space<vmem>>, vector<1x16xf32>
    %347 = vector.broadcast %346 : vector<1x16xf32> to vector<2x16xf32>
    %348 = arith.addf %345, %347 : vector<2x16xf32>
    %c0_102 = arith.constant 0 : index
    %c0_103 = arith.constant 0 : index
    %349 = vector.load %arg7[%c0_102, %c0_103] : memref<2x16xf32, #tpu.memory_space<vmem>>, vector<2x16xf32>
    tpu.vector_store %arg7[%c0_102, %c0_103], %348 {strides = array<i32>} : memref<2x16xf32, #tpu.memory_space<vmem>>, vector<2x16xf32>,
    return
  }
}

</mosaic_0001>

<llo_original>
// kernel: auvi_subnet_forward.1
$region0: #{auvi_subnet_forward.1}
  #allocation0 [shape = 'u32[]', space=smem, size = 0x4, offset = 0x4, fixed_abs, tag = 'smem constant byte address 0x4 - core index']
  #allocation1 [shape = 'u32[144,128]{1,0:T(1,128)}', space=vmem, size = 0x12000, scoped, tag = 'internal scratch']
  %s0 = inlined_call_operand.vmem [shape: f32[16,8], index: 0, kind: input, shape index: {}]
  %s1 = inlined_call_operand.vmem [shape: s32[2,1], index: 1, kind: input, shape index: {}]
  %s2 = inlined_call_operand.vmem [shape: f32[4,8,16], index: 2, kind: input, shape index: {}]
  %s3 = inlined_call_operand.hbm [shape: f32[4,16,16], index: 3, kind: input, shape index: {}]
  %s4 = inlined_call_operand.vmem [shape: f32[4,1,16], index: 4, kind: input, shape index: {}]
  %s5 = inlined_call_operand.hbm [shape: f32[16,16], index: 5, kind: input, shape index: {}]
  %s6 = inlined_call_operand.vmem [shape: f32[1,16], index: 6, kind: input, shape index: {}]
  %s7 = inlined_call_operand.hbm [shape: f32[2,16], index: 7, kind: output, shape index: {}]
  %s8 = sld [smem:[#allocation0]]
  $region46: #{auvi_subnet_forward.1} parent=0
    _
  %s10 = ssub.s32 1, %s8
  %s11 = scalar_select 0, %s10, %s8
  $region1: #{auvi_subnet_forward.1} parent=0
    #allocation2 [shape = 'u8[32768]{0}', space=vmem, size = 0x8000, scoped, tag = 'input window, operand 3, single buffered']
    #allocation3 [shape = 's32[1]{0}', space=sflag, size = 0x4, scoped, tag = 'scoped memory for auvi_subnet_forward.1']
    #allocation4 [shape = 's32[1]{0}', space=sflag, size = 0x4, scoped, tag = 'scoped memory for auvi_subnet_forward.1']
    #allocation5 [shape = 'u8[8192]{0}', space=vmem, size = 0x2000, scoped, tag = 'input window, operand 5, single buffered']
    #allocation6 [shape = 's32[1]{0}', space=sflag, size = 0x4, scoped, tag = 'scoped memory for auvi_subnet_forward.1']
    #allocation7 [shape = 'u8[1024]{0}', space=vmem, size = 0x400, scoped, tag = 'output window, operand 0, single buffered']
    %12 = vsyncpa [#allocation3], 0
    %13 = vsyncpa [#allocation6], 0
    %14 = vsyncpa [#allocation4], 0
    // Predicated region
    $region2: #{auvi_subnet_forward.1} parent=1 // pred_check
      _
    $region3: #{auvi_subnet_forward.1} parent=1 // pred_check_branch
      %16 = sbr.rel (0) target = $region5
    $region4: #{auvi_subnet_forward.1} parent=1 // pred_region
      _
    $region5: #{auvi_subnet_forward.1} parent=1 // pred_fallthru
      _
    // Predicated region
    $region6: #{auvi_subnet_forward.1} parent=1 // pred_check
      _
    $region7: #{auvi_subnet_forward.1} parent=1 // pred_check_branch
      %18 = sbr.rel (0) target = $region9
    $region8: #{auvi_subnet_forward.1} parent=1 // pred_region
      _
    $region9: #{auvi_subnet_forward.1} parent=1 // pred_fallthru
      _
    // Predicated region
    $region10: #{auvi_subnet_forward.1} parent=1 // pred_check
      _
    $region11: #{auvi_subnet_forward.1} parent=1 // pred_check_branch
      %20 = sbr.rel (0) target = $region13
    $region12: #{auvi_subnet_forward.1} parent=1 // pred_region
      _
    $region13: #{auvi_subnet_forward.1} parent=1 // pred_fallthru
      _
    // Predicated region
    $region14: #{auvi_subnet_forward.1} parent=1 // pred_check
      _
    $region15: #{auvi_subnet_forward.1} parent=1 // pred_check_branch
      %22 = sbr.rel (0) target = $region17
    $region16: #{auvi_subnet_forward.1} parent=1 // pred_region
      %s24 = ssub.s32 1024, 1024
      %25 = vsyncadd [#allocation3], %s24
      %s26 = sshll.u32 [#allocation2], 4
      %s27 = int_to_ptr.vmem [resolvable:$true] %s26
      %32 = dma.hbm_to_vmem [thread:$0]  %s3, 1024, %s27, [#allocation3], 128, 128, 8
    $region17: #{auvi_subnet_forward.1} parent=1 // pred_fallthru
      _
    // Predicated region
    $region18: #{auvi_subnet_forward.1} parent=1 // pred_check
      _
    $region19: #{auvi_subnet_forward.1} parent=1 // pred_check_branch
      %34 = sbr.rel (0) target = $region21
    $region20: #{auvi_subnet_forward.1} parent=1 // pred_region
      _
    $region21: #{auvi_subnet_forward.1} parent=1 // pred_fallthru
      _
    // Predicated region
    $region22: #{auvi_subnet_forward.1} parent=1 // pred_check
      _
    $region23: #{auvi_subnet_forward.1} parent=1 // pred_check_branch
      %36 = sbr.rel (0) target = $region25
    $region24: #{auvi_subnet_forward.1} parent=1 // pred_region
      %s38 = ssub.s32 256, 256
      %39 = vsyncadd [#allocation6], %s38
      %s40 = sshll.u32 [#allocation5], 4
      %s41 = int_to_ptr.vmem [resolvable:$true] %s40
      %46 = dma.hbm_to_vmem [thread:$0]  %s5, 256, %s41, [#allocation6], 128, 128, 8
    $region25: #{auvi_subnet_forward.1} parent=1 // pred_fallthru
      _
    // Predicated region
    $region26: #{auvi_subnet_forward.1} parent=1 // pred_check
      _
    $region27: #{auvi_subnet_forward.1} parent=1 // pred_check_branch
      %48 = sbr.rel (0) target = $region29
    $region28: #{auvi_subnet_forward.1} parent=1 // pred_region
      _
    $region29: #{auvi_subnet_forward.1} parent=1 // pred_fallthru
      _
    // Predicated region
    $region30: #{auvi_subnet_forward.1} parent=1 // pred_check
      _
    $region31: #{auvi_subnet_forward.1} parent=1 // pred_check_branch
      %50 = sbr.rel (0) target = $region33
    $region32: #{auvi_subnet_forward.1} parent=1 // pred_region
      %51 = dma.done [#allocation3], 1024
    $region33: #{auvi_subnet_forward.1} parent=1 // pred_fallthru
      _
    // Predicated region
    $region34: #{auvi_subnet_forward.1} parent=1 // pred_check
      _
    $region35: #{auvi_subnet_forward.1} parent=1 // pred_check_branch
      %53 = sbr.rel (0) target = $region37
    $region36: #{auvi_subnet_forward.1} parent=1 // pred_region
      %54 = dma.done [#allocation6], 256
    $region37: #{auvi_subnet_forward.1} parent=1 // pred_fallthru
      _
    %v55 = vld [vmem:[%s1] sm:$0x3]
    %v56 = vld [vmem:[%s0] sm:$0xff]
    %v57 = vld [vmem:[%s0 + $0x8] sm:$0xff]
    %v58 = vld [vmem:[%s2] sm:$0xff]
    %v59 = vld [vmem:[%s4] sm:$0x1]
    %v61 = vlaneseq
    %v62 = vshrl.u32 %v61, 7
    %v63 = vsub.s32 0, %v62
    %v64 = vrot.slane %v59, %v63
    %vm66 = vcmask 64512
    %v68 = vsel %vm66, %v56, 0
    %v71 = vsel %vm66, %v57, 0
    %73 = vmatprep.subr.mxu0 0.0
    %74 = vmatpush1.msra.mxu0 0.0
    %75 = vmatprep.subr.mxu0 0.0
    %76 = vmatpush1.msra.mxu0 0.0
    %77 = vmatprep.subr.mxu0 0.0
    %78 = vmatpush1.msra.mxu0 0.0
    %79 = vmatprep.subr.mxu0 0.0
    %80 = vmatpush1.msra.mxu0 0.0
    %81 = vmatprep.subr.mxu0 0.0
    %82 = vmatpush1.msra.mxu0 0.0
    %83 = vmatprep.subr.mxu0 0.0
    %84 = vmatpush1.msra.mxu0 0.0
    %85 = vmatprep.subr.mxu0 0.0
    %86 = vmatpush1.msra.mxu0 0.0
    %87 = vmatprep.subr.mxu0 0.0
    %88 = vmatpush1.msra.mxu0 0.0
    %89 = vmatprep.subr.mxu0 0.0
    %90 = vmatpush1.msra.mxu0 0.0
    %91 = vmatprep.subr.mxu0 0.0
    %92 = vmatpush1.msra.mxu0 0.0
    %93 = vmatprep.subr.mxu0 0.0
    %94 = vmatpush1.msra.mxu0 0.0
    %95 = vmatprep.subr.mxu0 0.0
    %96 = vmatpush1.msra.mxu0 0.0
    %97 = vmatprep.subr.mxu0 0.0
    %98 = vmatpush1.msra.mxu0 0.0
    %99 = vmatprep.subr.mxu0 0.0
    %100 = vmatpush1.msra.mxu0 0.0
    %101 = vmatprep.subr.mxu0 0.0
    %102 = vmatpush1.msra.mxu0 0.0
    %103 = vmatprep.subr.mxu0 0.0
    %104 = vmatpush1.msra.mxu0 %v58
    %105 = vmatprep.subr.mxu0 0.0
    %106 = vmatpush2.msra.mxu0 0.0
    %107 = vmatprep.subr.mxu0 0.0
    %108 = vmatpush2.msra.mxu0 0.0
    %109 = vmatprep.subr.mxu0 0.0
    %110 = vmatpush2.msra.mxu0 0.0
    %111 = vmatprep.subr.mxu0 0.0
    %112 = vmatpush2.msra.mxu0 0.0
    %113 = vmatprep.subr.mxu0 0.0
    %114 = vmatpush2.msra.mxu0 0.0
    %115 = vmatprep.subr.mxu0 0.0
    %116 = vmatpush2.msra.mxu0 0.0
    %117 = vmatprep.subr.mxu0 0.0
    %118 = vmatpush2.msra.mxu0 0.0
    %119 = vmatprep.subr.mxu0 0.0
    %120 = vmatpush2.msra.mxu0 0.0
    %121 = vmatprep.subr.mxu0 0.0
    %122 = vmatpush2.msra.mxu0 0.0
    %123 = vmatprep.subr.mxu0 0.0
    %124 = vmatpush2.msra.mxu0 0.0
    %125 = vmatprep.subr.mxu0 0.0
    %126 = vmatpush2.msra.mxu0 0.0
    %127 = vmatprep.subr.mxu0 0.0
    %128 = vmatpush2.msra.mxu0 0.0
    %129 = vmatprep.subr.mxu0 0.0
    %130 = vmatpush2.msra.mxu0 0.0
    %131 = vmatprep.subr.mxu0 0.0
    %132 = vmatpush2.msra.mxu0 0.0
    %133 = vmatprep.subr.mxu0 0.0
    %134 = vmatpush2.msra.mxu0 0.0
    %135 = vmatprep.subr.mxu0 0.0
    %136 = vmatpush2.msra.mxu0 0.0
    %137 = vmatprep.mubr.f32.mxu0 0.0
    %138 = vmatmul.mubr.f32.gmra.mxu0 %v68
    %v139 = vpop.f32.mrf.mxu0
    %v140 = vadd.f32 %v64, %v139
    %v141 = vpop.f32.mrf.mxu0
    %142 = vmatprep.mubr.f32.mxu0 0.0
    %143 = vmatmul.mubr.f32.gmra.mxu0 %v71
    %v144 = vpop.f32.mrf.mxu0
    %v145 = vadd.f32 %v64, %v144
    %v146 = vpop.f32.mrf.mxu0
    %147 = vdwg.mxu0
    %s148 = scalar_lea.vmem %s2, 8
    %v149 = vld [vmem:[%s148] sm:$0xff]
    %s150 = scalar_lea.vmem %s4, 1
    %v151 = vld [vmem:[%s150] sm:$0x1]
    %v153 = vlaneseq
    %v154 = vshrl.u32 %v153, 7
    %v155 = vsub.s32 0, %v154
    %v156 = vrot.slane %v151, %v155
    %158 = vmatprep.subr.mxu0 0.0
    %159 = vmatpush1.msra.mxu0 0.0
    %160 = vmatprep.subr.mxu0 0.0
    %161 = vmatpush1.msra.mxu0 0.0
    %162 = vmatprep.subr.mxu0 0.0
    %163 = vmatpush1.msra.mxu0 0.0
    %164 = vmatprep.subr.mxu0 0.0
    %165 = vmatpush1.msra.mxu0 0.0
    %166 = vmatprep.subr.mxu0 0.0
    %167 = vmatpush1.msra.mxu0 0.0
    %168 = vmatprep.subr.mxu0 0.0
    %169 = vmatpush1.msra.mxu0 0.0
    %170 = vmatprep.subr.mxu0 0.0
    %171 = vmatpush1.msra.mxu0 0.0
    %172 = vmatprep.subr.mxu0 0.0
    %173 = vmatpush1.msra.mxu0 0.0
    %174 = vmatprep.subr.mxu0 0.0
    %175 = vmatpush1.msra.mxu0 0.0
    %176 = vmatprep.subr.mxu0 0.0
    %177 = vmatpush1.msra.mxu0 0.0
    %178 = vmatprep.subr.mxu0 0.0
    %179 = vmatpush1.msra.mxu0 0.0
    %180 = vmatprep.subr.mxu0 0.0
    %181 = vmatpush1.msra.mxu0 0.0
    %182 = vmatprep.subr.mxu0 0.0
    %183 = vmatpush1.msra.mxu0 0.0
    %184 = vmatprep.subr.mxu0 0.0
    %185 = vmatpush1.msra.mxu0 0.0
    %186 = vmatprep.subr.mxu0 0.0
    %187 = vmatpush1.msra.mxu0 0.0
    %188 = vmatprep.subr.mxu0 0.0
    %189 = vmatpush1.msra.mxu0 %v149
    %190 = vmatprep.subr.mxu0 0.0
    %191 = vmatpush2.msra.mxu0 0.0
    %192 = vmatprep.subr.mxu0 0.0
    %193 = vmatpush2.msra.mxu0 0.0
    %194 = vmatprep.subr.mxu0 0.0
    %195 = vmatpush2.msra.mxu0 0.0
    %196 = vmatprep.subr.mxu0 0.0
    %197 = vmatpush2.msra.mxu0 0.0
    %198 = vmatprep.subr.mxu0 0.0
    %199 = vmatpush2.msra.mxu0 0.0
    %200 = vmatprep.subr.mxu0 0.0
    %201 = vmatpush2.msra.mxu0 0.0
    %202 = vmatprep.subr.mxu0 0.0
    %203 = vmatpush2.msra.mxu0 0.0
    %204 = vmatprep.subr.mxu0 0.0
    %205 = vmatpush2.msra.mxu0 0.0
    %206 = vmatprep.subr.mxu0 0.0
    %207 = vmatpush2.msra.mxu0 0.0
    %208 = vmatprep.subr.mxu0 0.0
    %209 = vmatpush2.msra.mxu0 0.0
    %210 = vmatprep.subr.mxu0 0.0
    %211 = vmatpush2.msra.mxu0 0.0
    %212 = vmatprep.subr.mxu0 0.0
    %213 = vmatpush2.msra.mxu0 0.0
    %214 = vmatprep.subr.mxu0 0.0
    %215 = vmatpush2.msra.mxu0 0.0
    %216 = vmatprep.subr.mxu0 0.0
    %217 = vmatpush2.msra.mxu0 0.0
    %218 = vmatprep.subr.mxu0 0.0
    %219 = vmatpush2.msra.mxu0 0.0
    %220 = vmatprep.subr.mxu0 0.0
    %221 = vmatpush2.msra.mxu0 0.0
    %222 = vmatprep.mubr.f32.mxu0 0.0
    %223 = vmatmul.mubr.f32.gmra.mxu0 %v68
    %v224 = vpop.f32.mrf.mxu0
    %v225 = vadd.f32 %v156, %v224
    %v226 = vpop.f32.mrf.mxu0
    %227 = vmatprep.mubr.f32.mxu0 0.0
    %228 = vmatmul.mubr.f32.gmra.mxu0 %v71
    %v229 = vpop.f32.mrf.mxu0
    %v230 = vadd.f32 %v156, %v229
    %v231 = vpop.f32.mrf.mxu0
    %232 = vdwg.mxu0
    %s233 = scalar_lea.vmem %s2, 16
    %v234 = vld [vmem:[%s233] sm:$0xff]
    %s235 = scalar_lea.vmem %s4, 2
    %v236 = vld [vmem:[%s235] sm:$0x1]
    %v238 = vlaneseq
    %v239 = vshrl.u32 %v238, 7
    %v240 = vsub.s32 0, %v239
    %v241 = vrot.slane %v236, %v240
    %243 = vmatprep.subr.mxu0 0.0
    %244 = vmatpush1.msra.mxu0 0.0
    %245 = vmatprep.subr.mxu0 0.0
    %246 = vmatpush1.msra.mxu0 0.0
    %247 = vmatprep.subr.mxu0 0.0
    %248 = vmatpush1.msra.mxu0 0.0
    %249 = vmatprep.subr.mxu0 0.0
    %250 = vmatpush1.msra.mxu0 0.0
    %251 = vmatprep.subr.mxu0 0.0
    %252 = vmatpush1.msra.mxu0 0.0
    %253 = vmatprep.subr.mxu0 0.0
    %254 = vmatpush1.msra.mxu0 0.0
    %255 = vmatprep.subr.mxu0 0.0
    %256 = vmatpush1.msra.mxu0 0.0
    %257 = vmatprep.subr.mxu0 0.0
    %258 = vmatpush1.msra.mxu0 0.0
    %259 = vmatprep.subr.mxu0 0.0
    %260 = vmatpush1.msra.mxu0 0.0
    %261 = vmatprep.subr.mxu0 0.0
    %262 = vmatpush1.msra.mxu0 0.0
    %263 = vmatprep.subr.mxu0 0.0
    %264 = vmatpush1.msra.mxu0 0.0
    %265 = vmatprep.subr.mxu0 0.0
    %266 = vmatpush1.msra.mxu0 0.0
    %267 = vmatprep.subr.mxu0 0.0
    %268 = vmatpush1.msra.mxu0 0.0
    %269 = vmatprep.subr.mxu0 0.0
    %270 = vmatpush1.msra.mxu0 0.0
    %271 = vmatprep.subr.mxu0 0.0
    %272 = vmatpush1.msra.mxu0 0.0
    %273 = vmatprep.subr.mxu0 0.0
    %274 = vmatpush1.msra.mxu0 %v234
    %275 = vmatprep.subr.mxu0 0.0
    %276 = vmatpush2.msra.mxu0 0.0
    %277 = vmatprep.subr.mxu0 0.0
    %278 = vmatpush2.msra.mxu0 0.0
    %279 = vmatprep.subr.mxu0 0.0
    %280 = vmatpush2.msra.mxu0 0.0
    %281 = vmatprep.subr.mxu0 0.0
    %282 = vmatpush2.msra.mxu0 0.0
    %283 = vmatprep.subr.mxu0 0.0
    %284 = vmatpush2.msra.mxu0 0.0
    %285 = vmatprep.subr.mxu0 0.0
    %286 = vmatpush2.msra.mxu0 0.0
    %287 = vmatprep.subr.mxu0 0.0
    %288 = vmatpush2.msra.mxu0 0.0
    %289 = vmatprep.subr.mxu0 0.0
    %290 = vmatpush2.msra.mxu0 0.0
    %291 = vmatprep.subr.mxu0 0.0
    %292 = vmatpush2.msra.mxu0 0.0
    %293 = vmatprep.subr.mxu0 0.0
    %294 = vmatpush2.msra.mxu0 0.0
    %295 = vmatprep.subr.mxu0 0.0
    %296 = vmatpush2.msra.mxu0 0.0
    %297 = vmatprep.subr.mxu0 0.0
    %298 = vmatpush2.msra.mxu0 0.0
    %299 = vmatprep.subr.mxu0 0.0
    %300 = vmatpush2.msra.mxu0 0.0
    %301 = vmatprep.subr.mxu0 0.0
    %302 = vmatpush2.msra.mxu0 0.0
    %303 = vmatprep.subr.mxu0 0.0
    %304 = vmatpush2.msra.mxu0 0.0
    %305 = vmatprep.subr.mxu0 0.0
    %306 = vmatpush2.msra.mxu0 0.0
    %307 = vmatprep.mubr.f32.mxu0 0.0
    %308 = vmatmul.mubr.f32.gmra.mxu0 %v68
    %v309 = vpop.f32.mrf.mxu0
    %v310 = vadd.f32 %v241, %v309
    %v311 = vpop.f32.mrf.mxu0
    %312 = vmatprep.mubr.f32.mxu0 0.0
    %313 = vmatmul.mubr.f32.gmra.mxu0 %v71
    %v314 = vpop.f32.mrf.mxu0
    %v315 = vadd.f32 %v241, %v314
    %v316 = vpop.f32.mrf.mxu0
    %317 = vdwg.mxu0
    %s318 = scalar_lea.vmem %s2, 24
    %v319 = vld [vmem:[%s318] sm:$0xff]
    %s320 = scalar_lea.vmem %s4, 3
    %v321 = vld [vmem:[%s320] sm:$0x1]
    %v323 = vlaneseq
    %v324 = vshrl.u32 %v323, 7
    %v325 = vsub.s32 0, %v324
    %v326 = vrot.slane %v321, %v325
    %328 = vmatprep.subr.mxu0 0.0
    %329 = vmatpush1.msra.mxu0 0.0
    %330 = vmatprep.subr.mxu0 0.0
    %331 = vmatpush1.msra.mxu0 0.0
    %332 = vmatprep.subr.mxu0 0.0
    %333 = vmatpush1.msra.mxu0 0.0
    %334 = vmatprep.subr.mxu0 0.0
    %335 = vmatpush1.msra.mxu0 0.0
    %336 = vmatprep.subr.mxu0 0.0
    %337 = vmatpush1.msra.mxu0 0.0
    %338 = vmatprep.subr.mxu0 0.0
    %339 = vmatpush1.msra.mxu0 0.0
    %340 = vmatprep.subr.mxu0 0.0
    %341 = vmatpush1.msra.mxu0 0.0
    %342 = vmatprep.subr.mxu0 0.0
    %343 = vmatpush1.msra.mxu0 0.0
    %344 = vmatprep.subr.mxu0 0.0
    %345 = vmatpush1.msra.mxu0 0.0
    %346 = vmatprep.subr.mxu0 0.0
    %347 = vmatpush1.msra.mxu0 0.0
    %348 = vmatprep.subr.mxu0 0.0
    %349 = vmatpush1.msra.mxu0 0.0
    %350 = vmatprep.subr.mxu0 0.0
    %351 = vmatpush1.msra.mxu0 0.0
    %352 = vmatprep.subr.mxu0 0.0
    %353 = vmatpush1.msra.mxu0 0.0
    %354 = vmatprep.subr.mxu0 0.0
    %355 = vmatpush1.msra.mxu0 0.0
    %356 = vmatprep.subr.mxu0 0.0
    %357 = vmatpush1.msra.mxu0 0.0
    %358 = vmatprep.subr.mxu0 0.0
    %359 = vmatpush1.msra.mxu0 %v319
    %360 = vmatprep.subr.mxu0 0.0
    %361 = vmatpush2.msra.mxu0 0.0
    %362 = vmatprep.subr.mxu0 0.0
    %363 = vmatpush2.msra.mxu0 0.0
    %364 = vmatprep.subr.mxu0 0.0
    %365 = vmatpush2.msra.mxu0 0.0
    %366 = vmatprep.subr.mxu0 0.0
    %367 = vmatpush2.msra.mxu0 0.0
    %368 = vmatprep.subr.mxu0 0.0
    %369 = vmatpush2.msra.mxu0 0.0
    %370 = vmatprep.subr.mxu0 0.0
    %371 = vmatpush2.msra.mxu0 0.0
    %372 = vmatprep.subr.mxu0 0.0
    %373 = vmatpush2.msra.mxu0 0.0
    %374 = vmatprep.subr.mxu0 0.0
    %375 = vmatpush2.msra.mxu0 0.0
    %376 = vmatprep.subr.mxu0 0.0
    %377 = vmatpush2.msra.mxu0 0.0
    %378 = vmatprep.subr.mxu0 0.0
    %379 = vmatpush2.msra.mxu0 0.0
    %380 = vmatprep.subr.mxu0 0.0
    %381 = vmatpush2.msra.mxu0 0.0
    %382 = vmatprep.subr.mxu0 0.0
    %383 = vmatpush2.msra.mxu0 0.0
    %384 = vmatprep.subr.mxu0 0.0
    %385 = vmatpush2.msra.mxu0 0.0
    %386 = vmatprep.subr.mxu0 0.0
    %387 = vmatpush2.msra.mxu0 0.0
    %388 = vmatprep.subr.mxu0 0.0
    %389 = vmatpush2.msra.mxu0 0.0
    %390 = vmatprep.subr.mxu0 0.0
    %391 = vmatpush2.msra.mxu0 0.0
    %392 = vmatprep.mubr.f32.mxu0 0.0
    %393 = vmatmul.mubr.f32.gmra.mxu0 %v68
    %v394 = vpop.f32.mrf.mxu0
    %v395 = vadd.f32 %v326, %v394
    %v396 = vpop.f32.mrf.mxu0
    %397 = vmatprep.mubr.f32.mxu0 0.0
    %398 = vmatmul.mubr.f32.gmra.mxu0 %v71
    %v399 = vpop.f32.mrf.mxu0
    %v400 = vadd.f32 %v326, %v399
    %v401 = vpop.f32.mrf.mxu0
    %402 = vdwg.mxu0
    %v403 = vld [vmem:[#allocation2] sm:$0xff]
    %v404 = vld [vmem:[#allocation2 + $0x8] sm:$0xff]
    %s405 = scalar_lea.vmem [#allocation2], 16
    %v406 = vld [vmem:[%s405] sm:$0xff]
    %v407 = vld [vmem:[%s405 + $0x8] sm:$0xff]
    %s408 = scalar_lea.vmem [#allocation2], 32
    %v409 = vld [vmem:[%s408] sm:$0xff]
    %v410 = vld [vmem:[%s408 + $0x8] sm:$0xff]
    %s411 = scalar_lea.vmem [#allocation2], 48
    %v412 = vld [vmem:[%s411] sm:$0xff]
    %v413 = vld [vmem:[%s411 + $0x8] sm:$0xff]
    %vm414 = vcmask 130048
    %v416 = vsel %vm414, 0.0, 0
    %418 = vmatprep.subr.mxu0 0.0
    %419 = vmatpush1.msra.mxu0 0.0
    %420 = vmatprep.subr.mxu0 0.0
    %421 = vmatpush1.msra.mxu0 0.0
    %422 = vmatprep.subr.mxu0 0.0
    %423 = vmatpush1.msra.mxu0 0.0
    %424 = vmatprep.subr.mxu0 0.0
    %425 = vmatpush1.msra.mxu0 0.0
    %426 = vmatprep.subr.mxu0 0.0
    %427 = vmatpush1.msra.mxu0 0.0
    %428 = vmatprep.subr.mxu0 0.0
    %429 = vmatpush1.msra.mxu0 0.0
    %430 = vmatprep.subr.mxu0 0.0
    %431 = vmatpush1.msra.mxu0 0.0
    %432 = vmatprep.subr.mxu0 0.0
    %433 = vmatpush1.msra.mxu0 0.0
    %434 = vmatprep.subr.mxu0 0.0
    %435 = vmatpush1.msra.mxu0 0.0
    %436 = vmatprep.subr.mxu0 0.0
    %437 = vmatpush1.msra.mxu0 0.0
    %438 = vmatprep.subr.mxu0 0.0
    %439 = vmatpush1.msra.mxu0 0.0
    %440 = vmatprep.subr.mxu0 0.0
    %441 = vmatpush1.msra.mxu0 0.0
    %442 = vmatprep.subr.mxu0 0.0
    %443 = vmatpush1.msra.mxu0 0.0
    %444 = vmatprep.subr.mxu0 0.0
    %445 = vmatpush1.msra.mxu0 0.0
    %446 = vmatprep.subr.mxu0 0.0
    %447 = vmatpush1.msra.mxu0 %v404
    %448 = vmatprep.subr.mxu0 0.0
    %449 = vmatpush1.msra.mxu0 %v403
    %450 = vmatprep.subr.mxu0 0.0
    %451 = vmatpush2.msra.mxu0 0.0
    %452 = vmatprep.subr.mxu0 0.0
    %453 = vmatpush2.msra.mxu0 0.0
    %454 = vmatprep.subr.mxu0 0.0
    %455 = vmatpush2.msra.mxu0 0.0
    %456 = vmatprep.subr.mxu0 0.0
    %457 = vmatpush2.msra.mxu0 0.0
    %458 = vmatprep.subr.mxu0 0.0
    %459 = vmatpush2.msra.mxu0 0.0
    %460 = vmatprep.subr.mxu0 0.0
    %461 = vmatpush2.msra.mxu0 0.0
    %462 = vmatprep.subr.mxu0 0.0
    %463 = vmatpush2.msra.mxu0 0.0
    %464 = vmatprep.subr.mxu0 0.0
    %465 = vmatpush2.msra.mxu0 0.0
    %466 = vmatprep.subr.mxu0 0.0
    %467 = vmatpush2.msra.mxu0 0.0
    %468 = vmatprep.subr.mxu0 0.0
    %469 = vmatpush2.msra.mxu0 0.0
    %470 = vmatprep.subr.mxu0 0.0
    %471 = vmatpush2.msra.mxu0 0.0
    %472 = vmatprep.subr.mxu0 0.0
    %473 = vmatpush2.msra.mxu0 0.0
    %474 = vmatprep.subr.mxu0 0.0
    %475 = vmatpush2.msra.mxu0 0.0
    %476 = vmatprep.subr.mxu0 0.0
    %477 = vmatpush2.msra.mxu0 0.0
    %478 = vmatprep.subr.mxu0 0.0
    %479 = vmatpush2.msra.mxu0 0.0
    %480 = vmatprep.subr.mxu0 0.0
    %481 = vmatpush2.msra.mxu0 0.0
    %482 = vmatprep.mubr.f32.mxu0 0.0
    %483 = vmatmul.mubr.f32.gmra.mxu0 %v416
    %v484 = vpop.f32.mrf.mxu0
    %v485 = vadd.f32 0.0, %v484
    %v486 = vpop.f32.mrf.mxu0
    %487 = vdwg.mxu0
    %488 = vmatprep.subr.mxu0 0.0
    %489 = vmatpush1.msra.mxu0 0.0
    %490 = vmatprep.subr.mxu0 0.0
    %491 = vmatpush1.msra.mxu0 0.0
    %492 = vmatprep.subr.mxu0 0.0
    %493 = vmatpush1.msra.mxu0 0.0
    %494 = vmatprep.subr.mxu0 0.0
    %495 = vmatpush1.msra.mxu0 0.0
    %496 = vmatprep.subr.mxu0 0.0
    %497 = vmatpush1.msra.mxu0 0.0
    %498 = vmatprep.subr.mxu0 0.0
    %499 = vmatpush1.msra.mxu0 0.0
    %500 = vmatprep.subr.mxu0 0.0
    %501 = vmatpush1.msra.mxu0 0.0
    %502 = vmatprep.subr.mxu0 0.0
    %503 = vmatpush1.msra.mxu0 0.0
    %504 = vmatprep.subr.mxu0 0.0
    %505 = vmatpush1.msra.mxu0 0.0
    %506 = vmatprep.subr.mxu0 0.0
    %507 = vmatpush1.msra.mxu0 0.0
    %508 = vmatprep.subr.mxu0 0.0
    %509 = vmatpush1.msra.mxu0 0.0
    %510 = vmatprep.subr.mxu0 0.0
    %511 = vmatpush1.msra.mxu0 0.0
    %512 = vmatprep.subr.mxu0 0.0
    %513 = vmatpush1.msra.mxu0 0.0
    %514 = vmatprep.subr.mxu0 0.0
    %515 = vmatpush1.msra.mxu0 0.0
    %516 = vmatprep.subr.mxu0 0.0
    %517 = vmatpush1.msra.mxu0 %v407
    %518 = vmatprep.subr.mxu0 0.0
    %519 = vmatpush1.msra.mxu0 %v406
    %520 = vmatprep.subr.mxu0 0.0
    %521 = vmatpush2.msra.mxu0 0.0
    %522 = vmatprep.subr.mxu0 0.0
    %523 = vmatpush2.msra.mxu0 0.0
    %524 = vmatprep.subr.mxu0 0.0
    %525 = vmatpush2.msra.mxu0 0.0
    %526 = vmatprep.subr.mxu0 0.0
    %527 = vmatpush2.msra.mxu0 0.0
    %528 = vmatprep.subr.mxu0 0.0
    %529 = vmatpush2.msra.mxu0 0.0
    %530 = vmatprep.subr.mxu0 0.0
    %531 = vmatpush2.msra.mxu0 0.0
    %532 = vmatprep.subr.mxu0 0.0
    %533 = vmatpush2.msra.mxu0 0.0
    %534 = vmatprep.subr.mxu0 0.0
    %535 = vmatpush2.msra.mxu0 0.0
    %536 = vmatprep.subr.mxu0 0.0
    %537 = vmatpush2.msra.mxu0 0.0
    %538 = vmatprep.subr.mxu0 0.0
    %539 = vmatpush2.msra.mxu0 0.0
    %540 = vmatprep.subr.mxu0 0.0
    %541 = vmatpush2.msra.mxu0 0.0
    %542 = vmatprep.subr.mxu0 0.0
    %543 = vmatpush2.msra.mxu0 0.0
    %544 = vmatprep.subr.mxu0 0.0
    %545 = vmatpush2.msra.mxu0 0.0
    %546 = vmatprep.subr.mxu0 0.0
    %547 = vmatpush2.msra.mxu0 0.0
    %548 = vmatprep.subr.mxu0 0.0
    %549 = vmatpush2.msra.mxu0 0.0
    %550 = vmatprep.subr.mxu0 0.0
    %551 = vmatpush2.msra.mxu0 0.0
    %552 = vmatprep.mubr.f32.mxu0 0.0
    %553 = vmatmul.mubr.f32.gmra.mxu0 %v416
    %v554 = vpop.f32.mrf.mxu0
    %v555 = vadd.f32 0.0, %v554
    %v556 = vpop.f32.mrf.mxu0
    %557 = vdwg.mxu0
    %558 = vmatprep.subr.mxu0 0.0
    %559 = vmatpush1.msra.mxu0 0.0
    %560 = vmatprep.subr.mxu0 0.0
    %561 = vmatpush1.msra.mxu0 0.0
    %562 = vmatprep.subr.mxu0 0.0
    %563 = vmatpush1.msra.mxu0 0.0
    %564 = vmatprep.subr.mxu0 0.0
    %565 = vmatpush1.msra.mxu0 0.0
    %566 = vmatprep.subr.mxu0 0.0
    %567 = vmatpush1.msra.mxu0 0.0
    %568 = vmatprep.subr.mxu0 0.0
    %569 = vmatpush1.msra.mxu0 0.0
    %570 = vmatprep.subr.mxu0 0.0
    %571 = vmatpush1.msra.mxu0 0.0
    %572 = vmatprep.subr.mxu0 0.0
    %573 = vmatpush1.msra.mxu0 0.0
    %574 = vmatprep.subr.mxu0 0.0
    %575 = vmatpush1.msra.mxu0 0.0
    %576 = vmatprep.subr.mxu0 0.0
    %577 = vmatpush1.msra.mxu0 0.0
    %578 = vmatprep.subr.mxu0 0.0
    %579 = vmatpush1.msra.mxu0 0.0
    %580 = vmatprep.subr.mxu0 0.0
    %581 = vmatpush1.msra.mxu0 0.0
    %582 = vmatprep.subr.mxu0 0.0
    %583 = vmatpush1.msra.mxu0 0.0
    %584 = vmatprep.subr.mxu0 0.0
    %585 = vmatpush1.msra.mxu0 0.0
    %586 = vmatprep.subr.mxu0 0.0
    %587 = vmatpush1.msra.mxu0 %v410
    %588 = vmatprep.subr.mxu0 0.0
    %589 = vmatpush1.msra.mxu0 %v409
    %590 = vmatprep.subr.mxu0 0.0
    %591 = vmatpush2.msra.mxu0 0.0
    %592 = vmatprep.subr.mxu0 0.0
    %593 = vmatpush2.msra.mxu0 0.0
    %594 = vmatprep.subr.mxu0 0.0
    %595 = vmatpush2.msra.mxu0 0.0
    %596 = vmatprep.subr.mxu0 0.0
    %597 = vmatpush2.msra.mxu0 0.0
    %598 = vmatprep.subr.mxu0 0.0
    %599 = vmatpush2.msra.mxu0 0.0
    %600 = vmatprep.subr.mxu0 0.0
    %601 = vmatpush2.msra.mxu0 0.0
    %602 = vmatprep.subr.mxu0 0.0
    %603 = vmatpush2.msra.mxu0 0.0
    %604 = vmatprep.subr.mxu0 0.0
    %605 = vmatpush2.msra.mxu0 0.0
    %606 = vmatprep.subr.mxu0 0.0
    %607 = vmatpush2.msra.mxu0 0.0
    %608 = vmatprep.subr.mxu0 0.0
    %609 = vmatpush2.msra.mxu0 0.0
    %610 = vmatprep.subr.mxu0 0.0
    %611 = vmatpush2.msra.mxu0 0.0
    %612 = vmatprep.subr.mxu0 0.0
    %613 = vmatpush2.msra.mxu0 0.0
    %614 = vmatprep.subr.mxu0 0.0
    %615 = vmatpush2.msra.mxu0 0.0
    %616 = vmatprep.subr.mxu0 0.0
    %617 = vmatpush2.msra.mxu0 0.0
    %618 = vmatprep.subr.mxu0 0.0
    %619 = vmatpush2.msra.mxu0 0.0
    %620 = vmatprep.subr.mxu0 0.0
    %621 = vmatpush2.msra.mxu0 0.0
    %622 = vmatprep.mubr.f32.mxu0 0.0
    %623 = vmatmul.mubr.f32.gmra.mxu0 %v416
    %v624 = vpop.f32.mrf.mxu0
    %v625 = vadd.f32 0.0, %v624
    %v626 = vpop.f32.mrf.mxu0
    %627 = vdwg.mxu0
    %628 = vmatprep.subr.mxu0 0.0
    %629 = vmatpush1.msra.mxu0 0.0
    %630 = vmatprep.subr.mxu0 0.0
    %631 = vmatpush1.msra.mxu0 0.0
    %632 = vmatprep.subr.mxu0 0.0
    %633 = vmatpush1.msra.mxu0 0.0
    %634 = vmatprep.subr.mxu0 0.0
    %635 = vmatpush1.msra.mxu0 0.0
    %636 = vmatprep.subr.mxu0 0.0
    %637 = vmatpush1.msra.mxu0 0.0
    %638 = vmatprep.subr.mxu0 0.0
    %639 = vmatpush1.msra.mxu0 0.0
    %640 = vmatprep.subr.mxu0 0.0
    %641 = vmatpush1.msra.mxu0 0.0
    %642 = vmatprep.subr.mxu0 0.0
    %643 = vmatpush1.msra.mxu0 0.0
    %644 = vmatprep.subr.mxu0 0.0
    %645 = vmatpush1.msra.mxu0 0.0
    %646 = vmatprep.subr.mxu0 0.0
    %647 = vmatpush1.msra.mxu0 0.0
    %648 = vmatprep.subr.mxu0 0.0
    %649 = vmatpush1.msra.mxu0 0.0
    %650 = vmatprep.subr.mxu0 0.0
    %651 = vmatpush1.msra.mxu0 0.0
    %652 = vmatprep.subr.mxu0 0.0
    %653 = vmatpush1.msra.mxu0 0.0
    %654 = vmatprep.subr.mxu0 0.0
    %655 = vmatpush1.msra.mxu0 0.0
    %656 = vmatprep.subr.mxu0 0.0
    %657 = vmatpush1.msra.mxu0 %v413
    %658 = vmatprep.subr.mxu0 0.0
    %659 = vmatpush1.msra.mxu0 %v412
    %660 = vmatprep.subr.mxu0 0.0
    %661 = vmatpush2.msra.mxu0 0.0
    %662 = vmatprep.subr.mxu0 0.0
    %663 = vmatpush2.msra.mxu0 0.0
    %664 = vmatprep.subr.mxu0 0.0
    %665 = vmatpush2.msra.mxu0 0.0
    %666 = vmatprep.subr.mxu0 0.0
    %667 = vmatpush2.msra.mxu0 0.0
    %668 = vmatprep.subr.mxu0 0.0
    %669 = vmatpush2.msra.mxu0 0.0
    %670 = vmatprep.subr.mxu0 0.0
    %671 = vmatpush2.msra.mxu0 0.0
    %672 = vmatprep.subr.mxu0 0.0
    %673 = vmatpush2.msra.mxu0 0.0
    %674 = vmatprep.subr.mxu0 0.0
    %675 = vmatpush2.msra.mxu0 0.0
    %676 = vmatprep.subr.mxu0 0.0
    %677 = vmatpush2.msra.mxu0 0.0
    %678 = vmatprep.subr.mxu0 0.0
    %679 = vmatpush2.msra.mxu0 0.0
    %680 = vmatprep.subr.mxu0 0.0
    %681 = vmatpush2.msra.mxu0 0.0
    %682 = vmatprep.subr.mxu0 0.0
    %683 = vmatpush2.msra.mxu0 0.0
    %684 = vmatprep.subr.mxu0 0.0
    %685 = vmatpush2.msra.mxu0 0.0
    %686 = vmatprep.subr.mxu0 0.0
    %687 = vmatpush2.msra.mxu0 0.0
    %688 = vmatprep.subr.mxu0 0.0
    %689 = vmatpush2.msra.mxu0 0.0
    %690 = vmatprep.subr.mxu0 0.0
    %691 = vmatpush2.msra.mxu0 0.0
    %692 = vmatprep.mubr.f32.mxu0 0.0
    %693 = vmatmul.mubr.f32.gmra.mxu0 %v416
    %v694 = vpop.f32.mrf.mxu0
    %v695 = vadd.f32 0.0, %v694
    %v696 = vpop.f32.mrf.mxu0
    %697 = vdwg.mxu0
    %v698 = vadd.f32 %v140, %v485
    %v699 = vxor.u32 %v698, 2147483648
    %v700 = vmul.f32 %v699, 1.442695
    %v701 = vpow.pop %v700
    %v702 = vadd.f32 %v701, 1.0
    %v703 = vrcp.pop %v702
    %v704 = vmul.f32 1.0, %v703
    %v705 = vadd.f32 %v225, %v555
    %v706 = vxor.u32 %v705, 2147483648
    %v707 = vmul.f32 %v706, 1.442695
    %v708 = vpow.pop %v707
    %v709 = vadd.f32 %v708, 1.0
    %v710 = vrcp.pop %v709
    %v711 = vmul.f32 1.0, %v710
    %v712 = vadd.f32 %v310, %v625
    %v713 = vtanh.pop %v712
    %v714 = vadd.f32 %v395, %v695
    %v715 = vxor.u32 %v714, 2147483648
    %v716 = vmul.f32 %v715, 1.442695
    %v717 = vpow.pop %v716
    %v718 = vadd.f32 %v717, 1.0
    %v719 = vrcp.pop %v718
    %v720 = vmul.f32 1.0, %v719
    %v721 = vmul.f32 %v711, 0.0
    %v722 = vmul.f32 %v704, %v713
    %v723 = vadd.f32 %v721, %v722
    %v724 = vtanh.pop %v723
    %v725 = vmul.f32 %v720, %v724
    %vm726 = vcmp.gt.s32.totalorder %v55, 0
    %v727 = vsel %vm726, 1, 0
    %728 = vset.pattern.permute.xlu0 0
    %729 = vperm.xlu0 %728, %v727
    %v730 = vpop.permute.xlu0 %729
    %vm731 = vcmp.eq.s32.totalorder %v730, 1
    %v732 = vsel %vm731, %v725, 0.0
    %v734 = vsel %vm414, %v732, 0
    %736 = vmatprep.subr.mxu0 0.0
    %737 = vmatpush1.msra.mxu0 0.0
    %738 = vmatprep.subr.mxu0 0.0
    %739 = vmatpush1.msra.mxu0 0.0
    %740 = vmatprep.subr.mxu0 0.0
    %741 = vmatpush1.msra.mxu0 0.0
    %742 = vmatprep.subr.mxu0 0.0
    %743 = vmatpush1.msra.mxu0 0.0
    %744 = vmatprep.subr.mxu0 0.0
    %745 = vmatpush1.msra.mxu0 0.0
    %746 = vmatprep.subr.mxu0 0.0
    %747 = vmatpush1.msra.mxu0 0.0
    %748 = vmatprep.subr.mxu0 0.0
    %749 = vmatpush1.msra.mxu0 0.0
    %750 = vmatprep.subr.mxu0 0.0
    %751 = vmatpush1.msra.mxu0 0.0
    %752 = vmatprep.subr.mxu0 0.0
    %753 = vmatpush1.msra.mxu0 0.0
    %754 = vmatprep.subr.mxu0 0.0
    %755 = vmatpush1.msra.mxu0 0.0
    %756 = vmatprep.subr.mxu0 0.0
    %757 = vmatpush1.msra.mxu0 0.0
    %758 = vmatprep.subr.mxu0 0.0
    %759 = vmatpush1.msra.mxu0 0.0
    %760 = vmatprep.subr.mxu0 0.0
    %761 = vmatpush1.msra.mxu0 0.0
    %762 = vmatprep.subr.mxu0 0.0
    %763 = vmatpush1.msra.mxu0 0.0
    %764 = vmatprep.subr.mxu0 0.0
    %765 = vmatpush1.msra.mxu0 %v404
    %766 = vmatprep.subr.mxu0 0.0
    %767 = vmatpush1.msra.mxu0 %v403
    %768 = vmatprep.subr.mxu0 0.0
    %769 = vmatpush2.msra.mxu0 0.0
    %770 = vmatprep.subr.mxu0 0.0
    %771 = vmatpush2.msra.mxu0 0.0
    %772 = vmatprep.subr.mxu0 0.0
    %773 = vmatpush2.msra.mxu0 0.0
    %774 = vmatprep.subr.mxu0 0.0
    %775 = vmatpush2.msra.mxu0 0.0
    %776 = vmatprep.subr.mxu0 0.0
    %777 = vmatpush2.msra.mxu0 0.0
    %778 = vmatprep.subr.mxu0 0.0
    %779 = vmatpush2.msra.mxu0 0.0
    %780 = vmatprep.subr.mxu0 0.0
    %781 = vmatpush2.msra.mxu0 0.0
    %782 = vmatprep.subr.mxu0 0.0
    %783 = vmatpush2.msra.mxu0 0.0
    %784 = vmatprep.subr.mxu0 0.0
    %785 = vmatpush2.msra.mxu0 0.0
    %786 = vmatprep.subr.mxu0 0.0
    %787 = vmatpush2.msra.mxu0 0.0
    %788 = vmatprep.subr.mxu0 0.0
    %789 = vmatpush2.msra.mxu0 0.0
    %790 = vmatprep.subr.mxu0 0.0
    %791 = vmatpush2.msra.mxu0 0.0
    %792 = vmatprep.subr.mxu0 0.0
    %793 = vmatpush2.msra.mxu0 0.0
    %794 = vmatprep.subr.mxu0 0.0
    %795 = vmatpush2.msra.mxu0 0.0
    %796 = vmatprep.subr.mxu0 0.0
    %797 = vmatpush2.msra.mxu0 0.0
    %798 = vmatprep.subr.mxu0 0.0
    %799 = vmatpush2.msra.mxu0 0.0
    %800 = vmatprep.mubr.f32.mxu0 0.0
    %801 = vmatmul.mubr.f32.gmra.mxu0 %v734
    %v802 = vpop.f32.mrf.mxu0
    %v803 = vadd.f32 0.0, %v802
    %v804 = vpop.f32.mrf.mxu0
    %805 = vdwg.mxu0
    %806 = vmatprep.subr.mxu0 0.0
    %807 = vmatpush1.msra.mxu0 0.0
    %808 = vmatprep.subr.mxu0 0.0
    %809 = vmatpush1.msra.mxu0 0.0
    %810 = vmatprep.subr.mxu0 0.0
    %811 = vmatpush1.msra.mxu0 0.0
    %812 = vmatprep.subr.mxu0 0.0
    %813 = vmatpush1.msra.mxu0 0.0
    %814 = vmatprep.subr.mxu0 0.0
    %815 = vmatpush1.msra.mxu0 0.0
    %816 = vmatprep.subr.mxu0 0.0
    %817 = vmatpush1.msra.mxu0 0.0
    %818 = vmatprep.subr.mxu0 0.0
    %819 = vmatpush1.msra.mxu0 0.0
    %820 = vmatprep.subr.mxu0 0.0
    %821 = vmatpush1.msra.mxu0 0.0
    %822 = vmatprep.subr.mxu0 0.0
    %823 = vmatpush1.msra.mxu0 0.0
    %824 = vmatprep.subr.mxu0 0.0
    %825 = vmatpush1.msra.mxu0 0.0
    %826 = vmatprep.subr.mxu0 0.0
    %827 = vmatpush1.msra.mxu0 0.0
    %828 = vmatprep.subr.mxu0 0.0
    %829 = vmatpush1.msra.mxu0 0.0
    %830 = vmatprep.subr.mxu0 0.0
    %831 = vmatpush1.msra.mxu0 0.0
    %832 = vmatprep.subr.mxu0 0.0
    %833 = vmatpush1.msra.mxu0 0.0
    %834 = vmatprep.subr.mxu0 0.0
    %835 = vmatpush1.msra.mxu0 %v407
    %836 = vmatprep.subr.mxu0 0.0
    %837 = vmatpush1.msra.mxu0 %v406
    %838 = vmatprep.subr.mxu0 0.0
    %839 = vmatpush2.msra.mxu0 0.0
    %840 = vmatprep.subr.mxu0 0.0
    %841 = vmatpush2.msra.mxu0 0.0
    %842 = vmatprep.subr.mxu0 0.0
    %843 = vmatpush2.msra.mxu0 0.0
    %844 = vmatprep.subr.mxu0 0.0
    %845 = vmatpush2.msra.mxu0 0.0
    %846 = vmatprep.subr.mxu0 0.0
    %847 = vmatpush2.msra.mxu0 0.0
    %848 = vmatprep.subr.mxu0 0.0
    %849 = vmatpush2.msra.mxu0 0.0
    %850 = vmatprep.subr.mxu0 0.0
    %851 = vmatpush2.msra.mxu0 0.0
    %852 = vmatprep.subr.mxu0 0.0
    %853 = vmatpush2.msra.mxu0 0.0
    %854 = vmatprep.subr.mxu0 0.0
    %855 = vmatpush2.msra.mxu0 0.0
    %856 = vmatprep.subr.mxu0 0.0
    %857 = vmatpush2.msra.mxu0 0.0
    %858 = vmatprep.subr.mxu0 0.0
    %859 = vmatpush2.msra.mxu0 0.0
    %860 = vmatprep.subr.mxu0 0.0
    %861 = vmatpush2.msra.mxu0 0.0
    %862 = vmatprep.subr.mxu0 0.0
    %863 = vmatpush2.msra.mxu0 0.0
    %864 = vmatprep.subr.mxu0 0.0
    %865 = vmatpush2.msra.mxu0 0.0
    %866 = vmatprep.subr.mxu0 0.0
    %867 = vmatpush2.msra.mxu0 0.0
    %868 = vmatprep.subr.mxu0 0.0
    %869 = vmatpush2.msra.mxu0 0.0
    %870 = vmatprep.mubr.f32.mxu0 0.0
    %871 = vmatmul.mubr.f32.gmra.mxu0 %v734
    %v872 = vpop.f32.mrf.mxu0
    %v873 = vadd.f32 0.0, %v872
    %v874 = vpop.f32.mrf.mxu0
    %875 = vdwg.mxu0
    %876 = vmatprep.subr.mxu0 0.0
    %877 = vmatpush1.msra.mxu0 0.0
    %878 = vmatprep.subr.mxu0 0.0
    %879 = vmatpush1.msra.mxu0 0.0
    %880 = vmatprep.subr.mxu0 0.0
    %881 = vmatpush1.msra.mxu0 0.0
    %882 = vmatprep.subr.mxu0 0.0
    %883 = vmatpush1.msra.mxu0 0.0
    %884 = vmatprep.subr.mxu0 0.0
    %885 = vmatpush1.msra.mxu0 0.0
    %886 = vmatprep.subr.mxu0 0.0
    %887 = vmatpush1.msra.mxu0 0.0
    %888 = vmatprep.subr.mxu0 0.0
    %889 = vmatpush1.msra.mxu0 0.0
    %890 = vmatprep.subr.mxu0 0.0
    %891 = vmatpush1.msra.mxu0 0.0
    %892 = vmatprep.subr.mxu0 0.0
    %893 = vmatpush1.msra.mxu0 0.0
    %894 = vmatprep.subr.mxu0 0.0
    %895 = vmatpush1.msra.mxu0 0.0
    %896 = vmatprep.subr.mxu0 0.0
    %897 = vmatpush1.msra.mxu0 0.0
    %898 = vmatprep.subr.mxu0 0.0
    %899 = vmatpush1.msra.mxu0 0.0
    %900 = vmatprep.subr.mxu0 0.0
    %901 = vmatpush1.msra.mxu0 0.0
    %902 = vmatprep.subr.mxu0 0.0
    %903 = vmatpush1.msra.mxu0 0.0
    %904 = vmatprep.subr.mxu0 0.0
    %905 = vmatpush1.msra.mxu0 %v410
    %906 = vmatprep.subr.mxu0 0.0
    %907 = vmatpush1.msra.mxu0 %v409
    %908 = vmatprep.subr.mxu0 0.0
    %909 = vmatpush2.msra.mxu0 0.0
    %910 = vmatprep.subr.mxu0 0.0
    %911 = vmatpush2.msra.mxu0 0.0
    %912 = vmatprep.subr.mxu0 0.0
    %913 = vmatpush2.msra.mxu0 0.0
    %914 = vmatprep.subr.mxu0 0.0
    %915 = vmatpush2.msra.mxu0 0.0
    %916 = vmatprep.subr.mxu0 0.0
    %917 = vmatpush2.msra.mxu0 0.0
    %918 = vmatprep.subr.mxu0 0.0
    %919 = vmatpush2.msra.mxu0 0.0
    %920 = vmatprep.subr.mxu0 0.0
    %921 = vmatpush2.msra.mxu0 0.0
    %922 = vmatprep.subr.mxu0 0.0
    %923 = vmatpush2.msra.mxu0 0.0
    %924 = vmatprep.subr.mxu0 0.0
    %925 = vmatpush2.msra.mxu0 0.0
    %926 = vmatprep.subr.mxu0 0.0
    %927 = vmatpush2.msra.mxu0 0.0
    %928 = vmatprep.subr.mxu0 0.0
    %929 = vmatpush2.msra.mxu0 0.0
    %930 = vmatprep.subr.mxu0 0.0
    %931 = vmatpush2.msra.mxu0 0.0
    %932 = vmatprep.subr.mxu0 0.0
    %933 = vmatpush2.msra.mxu0 0.0
    %934 = vmatprep.subr.mxu0 0.0
    %935 = vmatpush2.msra.mxu0 0.0
    %936 = vmatprep.subr.mxu0 0.0
    %937 = vmatpush2.msra.mxu0 0.0
    %938 = vmatprep.subr.mxu0 0.0
    %939 = vmatpush2.msra.mxu0 0.0
    %940 = vmatprep.mubr.f32.mxu0 0.0
    %941 = vmatmul.mubr.f32.gmra.mxu0 %v734
    %v942 = vpop.f32.mrf.mxu0
    %v943 = vadd.f32 0.0, %v942
    %v944 = vpop.f32.mrf.mxu0
    %945 = vdwg.mxu0
    %946 = vmatprep.subr.mxu0 0.0
    %947 = vmatpush1.msra.mxu0 0.0
    %948 = vmatprep.subr.mxu0 0.0
    %949 = vmatpush1.msra.mxu0 0.0
    %950 = vmatprep.subr.mxu0 0.0
    %951 = vmatpush1.msra.mxu0 0.0
    %952 = vmatprep.subr.mxu0 0.0
    %953 = vmatpush1.msra.mxu0 0.0
    %954 = vmatprep.subr.mxu0 0.0
    %955 = vmatpush1.msra.mxu0 0.0
    %956 = vmatprep.subr.mxu0 0.0
    %957 = vmatpush1.msra.mxu0 0.0
    %958 = vmatprep.subr.mxu0 0.0
    %959 = vmatpush1.msra.mxu0 0.0
    %960 = vmatprep.subr.mxu0 0.0
    %961 = vmatpush1.msra.mxu0 0.0
    %962 = vmatprep.subr.mxu0 0.0
    %963 = vmatpush1.msra.mxu0 0.0
    %964 = vmatprep.subr.mxu0 0.0
    %965 = vmatpush1.msra.mxu0 0.0
    %966 = vmatprep.subr.mxu0 0.0
    %967 = vmatpush1.msra.mxu0 0.0
    %968 = vmatprep.subr.mxu0 0.0
    %969 = vmatpush1.msra.mxu0 0.0
    %970 = vmatprep.subr.mxu0 0.0
    %971 = vmatpush1.msra.mxu0 0.0
    %972 = vmatprep.subr.mxu0 0.0
    %973 = vmatpush1.msra.mxu0 0.0
    %974 = vmatprep.subr.mxu0 0.0
    %975 = vmatpush1.msra.mxu0 %v413
    %976 = vmatprep.subr.mxu0 0.0
    %977 = vmatpush1.msra.mxu0 %v412
    %978 = vmatprep.subr.mxu0 0.0
    %979 = vmatpush2.msra.mxu0 0.0
    %980 = vmatprep.subr.mxu0 0.0
    %981 = vmatpush2.msra.mxu0 0.0
    %982 = vmatprep.subr.mxu0 0.0
    %983 = vmatpush2.msra.mxu0 0.0
    %984 = vmatprep.subr.mxu0 0.0
    %985 = vmatpush2.msra.mxu0 0.0
    %986 = vmatprep.subr.mxu0 0.0
    %987 = vmatpush2.msra.mxu0 0.0
    %988 = vmatprep.subr.mxu0 0.0
    %989 = vmatpush2.msra.mxu0 0.0
    %990 = vmatprep.subr.mxu0 0.0
    %991 = vmatpush2.msra.mxu0 0.0
    %992 = vmatprep.subr.mxu0 0.0
    %993 = vmatpush2.msra.mxu0 0.0
    %994 = vmatprep.subr.mxu0 0.0
    %995 = vmatpush2.msra.mxu0 0.0
    %996 = vmatprep.subr.mxu0 0.0
    %997 = vmatpush2.msra.mxu0 0.0
    %998 = vmatprep.subr.mxu0 0.0
    %999 = vmatpush2.msra.mxu0 0.0
    %1000 = vmatprep.subr.mxu0 0.0
    %1001 = vmatpush2.msra.mxu0 0.0
    %1002 = vmatprep.subr.mxu0 0.0
    %1003 = vmatpush2.msra.mxu0 0.0
    %1004 = vmatprep.subr.mxu0 0.0
    %1005 = vmatpush2.msra.mxu0 0.0
    %1006 = vmatprep.subr.mxu0 0.0
    %1007 = vmatpush2.msra.mxu0 0.0
    %1008 = vmatprep.subr.mxu0 0.0
    %1009 = vmatpush2.msra.mxu0 0.0
    %1010 = vmatprep.mubr.f32.mxu0 0.0
    %1011 = vmatmul.mubr.f32.gmra.mxu0 %v734
    %v1012 = vpop.f32.mrf.mxu0
    %v1013 = vadd.f32 0.0, %v1012
    %v1014 = vpop.f32.mrf.mxu0
    %1015 = vdwg.mxu0
    %v1017 = vrot.slane %v803, 6
    %v1019 = vadd.f32 %v140, %v1017
    %v1020 = vxor.u32 %v1019, 2147483648
    %v1021 = vmul.f32 %v1020, 1.442695
    %v1022 = vpow.pop %v1021
    %v1023 = vadd.f32 %v1022, 1.0
    %v1024 = vrcp.pop %v1023
    %v1025 = vmul.f32 1.0, %v1024
    %v1027 = vrot.slane %v873, 6
    %v1029 = vadd.f32 %v225, %v1027
    %v1030 = vxor.u32 %v1029, 2147483648
    %v1031 = vmul.f32 %v1030, 1.442695
    %v1032 = vpow.pop %v1031
    %v1033 = vadd.f32 %v1032, 1.0
    %v1034 = vrcp.pop %v1033
    %v1035 = vmul.f32 1.0, %v1034
    %v1037 = vrot.slane %v943, 6
    %v1039 = vadd.f32 %v310, %v1037
    %v1040 = vtanh.pop %v1039
    %v1042 = vrot.slane %v1013, 6
    %v1044 = vadd.f32 %v395, %v1042
    %v1045 = vxor.u32 %v1044, 2147483648
    %v1046 = vmul.f32 %v1045, 1.442695
    %v1047 = vpow.pop %v1046
    %v1048 = vadd.f32 %v1047, 1.0
    %v1049 = vrcp.pop %v1048
    %v1050 = vmul.f32 1.0, %v1049
    %v1052 = vrot.slane %v723, 6
    %v1054 = vmul.f32 %v1035, %v1052
    %v1055 = vmul.f32 %v1025, %v1040
    %v1056 = vadd.f32 %v1054, %v1055
    %v1057 = vtanh.pop %v1056
    %v1058 = vmul.f32 %v1050, %v1057
    %vm1059 = vcmp.gt.s32.totalorder %v55, 1
    %v1060 = vsel %vm1059, 1, 0
    %1061 = vset.pattern.permute.xlu0 0
    %1062 = vperm.xlu0 %1061, %v1060
    %v1063 = vpop.permute.xlu0 %1062
    %vm1064 = vcmp.eq.s32.totalorder %v1063, 1
    %v1066 = vrot.slane %v1058, 2
    %v1068 = vsel %vm1064, %v1066, %v732
    %v1070 = vsel %vm414, %v1068, 0
    %1072 = vmatprep.subr.mxu0 0.0
    %1073 = vmatpush1.msra.mxu0 0.0
    %1074 = vmatprep.subr.mxu0 0.0
    %1075 = vmatpush1.msra.mxu0 0.0
    %1076 = vmatprep.subr.mxu0 0.0
    %1077 = vmatpush1.msra.mxu0 0.0
    %1078 = vmatprep.subr.mxu0 0.0
    %1079 = vmatpush1.msra.mxu0 0.0
    %1080 = vmatprep.subr.mxu0 0.0
    %1081 = vmatpush1.msra.mxu0 0.0
    %1082 = vmatprep.subr.mxu0 0.0
    %1083 = vmatpush1.msra.mxu0 0.0
    %1084 = vmatprep.subr.mxu0 0.0
    %1085 = vmatpush1.msra.mxu0 0.0
    %1086 = vmatprep.subr.mxu0 0.0
    %1087 = vmatpush1.msra.mxu0 0.0
    %1088 = vmatprep.subr.mxu0 0.0
    %1089 = vmatpush1.msra.mxu0 0.0
    %1090 = vmatprep.subr.mxu0 0.0
    %1091 = vmatpush1.msra.mxu0 0.0
    %1092 = vmatprep.subr.mxu0 0.0
    %1093 = vmatpush1.msra.mxu0 0.0
    %1094 = vmatprep.subr.mxu0 0.0
    %1095 = vmatpush1.msra.mxu0 0.0
    %1096 = vmatprep.subr.mxu0 0.0
    %1097 = vmatpush1.msra.mxu0 0.0
    %1098 = vmatprep.subr.mxu0 0.0
    %1099 = vmatpush1.msra.mxu0 0.0
    %1100 = vmatprep.subr.mxu0 0.0
    %1101 = vmatpush1.msra.mxu0 %v404
    %1102 = vmatprep.subr.mxu0 0.0
    %1103 = vmatpush1.msra.mxu0 %v403
    %1104 = vmatprep.subr.mxu0 0.0
    %1105 = vmatpush2.msra.mxu0 0.0
    %1106 = vmatprep.subr.mxu0 0.0
    %1107 = vmatpush2.msra.mxu0 0.0
    %1108 = vmatprep.subr.mxu0 0.0
    %1109 = vmatpush2.msra.mxu0 0.0
    %1110 = vmatprep.subr.mxu0 0.0
    %1111 = vmatpush2.msra.mxu0 0.0
    %1112 = vmatprep.subr.mxu0 0.0
    %1113 = vmatpush2.msra.mxu0 0.0
    %1114 = vmatprep.subr.mxu0 0.0
    %1115 = vmatpush2.msra.mxu0 0.0
    %1116 = vmatprep.subr.mxu0 0.0
    %1117 = vmatpush2.msra.mxu0 0.0
    %1118 = vmatprep.subr.mxu0 0.0
    %1119 = vmatpush2.msra.mxu0 0.0
    %1120 = vmatprep.subr.mxu0 0.0
    %1121 = vmatpush2.msra.mxu0 0.0
    %1122 = vmatprep.subr.mxu0 0.0
    %1123 = vmatpush2.msra.mxu0 0.0
    %1124 = vmatprep.subr.mxu0 0.0
    %1125 = vmatpush2.msra.mxu0 0.0
    %1126 = vmatprep.subr.mxu0 0.0
    %1127 = vmatpush2.msra.mxu0 0.0
    %1128 = vmatprep.subr.mxu0 0.0
    %1129 = vmatpush2.msra.mxu0 0.0
    %1130 = vmatprep.subr.mxu0 0.0
    %1131 = vmatpush2.msra.mxu0 0.0
    %1132 = vmatprep.subr.mxu0 0.0
    %1133 = vmatpush2.msra.mxu0 0.0
    %1134 = vmatprep.subr.mxu0 0.0
    %1135 = vmatpush2.msra.mxu0 0.0
    %1136 = vmatprep.mubr.f32.mxu0 0.0
    %1137 = vmatmul.mubr.f32.gmra.mxu0 %v1070
    %v1138 = vpop.f32.mrf.mxu0
    %v1139 = vadd.f32 0.0, %v1138
    %v1140 = vpop.f32.mrf.mxu0
    %1141 = vdwg.mxu0
    %1142 = vmatprep.subr.mxu0 0.0
    %1143 = vmatpush1.msra.mxu0 0.0
    %1144 = vmatprep.subr.mxu0 0.0
    %1145 = vmatpush1.msra.mxu0 0.0
    %1146 = vmatprep.subr.mxu0 0.0
    %1147 = vmatpush1.msra.mxu0 0.0
    %1148 = vmatprep.subr.mxu0 0.0
    %1149 = vmatpush1.msra.mxu0 0.0
    %1150 = vmatprep.subr.mxu0 0.0
    %1151 = vmatpush1.msra.mxu0 0.0
    %1152 = vmatprep.subr.mxu0 0.0
    %1153 = vmatpush1.msra.mxu0 0.0
    %1154 = vmatprep.subr.mxu0 0.0
    %1155 = vmatpush1.msra.mxu0 0.0
    %1156 = vmatprep.subr.mxu0 0.0
    %1157 = vmatpush1.msra.mxu0 0.0
    %1158 = vmatprep.subr.mxu0 0.0
    %1159 = vmatpush1.msra.mxu0 0.0
    %1160 = vmatprep.subr.mxu0 0.0
    %1161 = vmatpush1.msra.mxu0 0.0
    %1162 = vmatprep.subr.mxu0 0.0
    %1163 = vmatpush1.msra.mxu0 0.0
    %1164 = vmatprep.subr.mxu0 0.0
    %1165 = vmatpush1.msra.mxu0 0.0
    %1166 = vmatprep.subr.mxu0 0.0
    %1167 = vmatpush1.msra.mxu0 0.0
    %1168 = vmatprep.subr.mxu0 0.0
    %1169 = vmatpush1.msra.mxu0 0.0
    %1170 = vmatprep.subr.mxu0 0.0
    %1171 = vmatpush1.msra.mxu0 %v407
    %1172 = vmatprep.subr.mxu0 0.0
    %1173 = vmatpush1.msra.mxu0 %v406
    %1174 = vmatprep.subr.mxu0 0.0
    %1175 = vmatpush2.msra.mxu0 0.0
    %1176 = vmatprep.subr.mxu0 0.0
    %1177 = vmatpush2.msra.mxu0 0.0
    %1178 = vmatprep.subr.mxu0 0.0
    %1179 = vmatpush2.msra.mxu0 0.0
    %1180 = vmatprep.subr.mxu0 0.0
    %1181 = vmatpush2.msra.mxu0 0.0
    %1182 = vmatprep.subr.mxu0 0.0
    %1183 = vmatpush2.msra.mxu0 0.0
    %1184 = vmatprep.subr.mxu0 0.0
    %1185 = vmatpush2.msra.mxu0 0.0
    %1186 = vmatprep.subr.mxu0 0.0
    %1187 = vmatpush2.msra.mxu0 0.0
    %1188 = vmatprep.subr.mxu0 0.0
    %1189 = vmatpush2.msra.mxu0 0.0
    %1190 = vmatprep.subr.mxu0 0.0
    %1191 = vmatpush2.msra.mxu0 0.0
    %1192 = vmatprep.subr.mxu0 0.0
    %1193 = vmatpush2.msra.mxu0 0.0
    %1194 = vmatprep.subr.mxu0 0.0
    %1195 = vmatpush2.msra.mxu0 0.0
    %1196 = vmatprep.subr.mxu0 0.0
    %1197 = vmatpush2.msra.mxu0 0.0
    %1198 = vmatprep.subr.mxu0 0.0
    %1199 = vmatpush2.msra.mxu0 0.0
    %1200 = vmatprep.subr.mxu0 0.0
    %1201 = vmatpush2.msra.mxu0 0.0
    %1202 = vmatprep.subr.mxu0 0.0
    %1203 = vmatpush2.msra.mxu0 0.0
    %1204 = vmatprep.subr.mxu0 0.0
    %1205 = vmatpush2.msra.mxu0 0.0
    %1206 = vmatprep.mubr.f32.mxu0 0.0
    %1207 = vmatmul.mubr.f32.gmra.mxu0 %v1070
    %v1208 = vpop.f32.mrf.mxu0
    %v1209 = vadd.f32 0.0, %v1208
    %v1210 = vpop.f32.mrf.mxu0
    %1211 = vdwg.mxu0
    %1212 = vmatprep.subr.mxu0 0.0
    %1213 = vmatpush1.msra.mxu0 0.0
    %1214 = vmatprep.subr.mxu0 0.0
    %1215 = vmatpush1.msra.mxu0 0.0
    %1216 = vmatprep.subr.mxu0 0.0
    %1217 = vmatpush1.msra.mxu0 0.0
    %1218 = vmatprep.subr.mxu0 0.0
    %1219 = vmatpush1.msra.mxu0 0.0
    %1220 = vmatprep.subr.mxu0 0.0
    %1221 = vmatpush1.msra.mxu0 0.0
    %1222 = vmatprep.subr.mxu0 0.0
    %1223 = vmatpush1.msra.mxu0 0.0
    %1224 = vmatprep.subr.mxu0 0.0
    %1225 = vmatpush1.msra.mxu0 0.0
    %1226 = vmatprep.subr.mxu0 0.0
    %1227 = vmatpush1.msra.mxu0 0.0
    %1228 = vmatprep.subr.mxu0 0.0
    %1229 = vmatpush1.msra.mxu0 0.0
    %1230 = vmatprep.subr.mxu0 0.0
    %1231 = vmatpush1.msra.mxu0 0.0
    %1232 = vmatprep.subr.mxu0 0.0
    %1233 = vmatpush1.msra.mxu0 0.0
    %1234 = vmatprep.subr.mxu0 0.0
    %1235 = vmatpush1.msra.mxu0 0.0
    %1236 = vmatprep.subr.mxu0 0.0
    %1237 = vmatpush1.msra.mxu0 0.0
    %1238 = vmatprep.subr.mxu0 0.0
    %1239 = vmatpush1.msra.mxu0 0.0
    %1240 = vmatprep.subr.mxu0 0.0
    %1241 = vmatpush1.msra.mxu0 %v410
    %1242 = vmatprep.subr.mxu0 0.0
    %1243 = vmatpush1.msra.mxu0 %v409
    %1244 = vmatprep.subr.mxu0 0.0
    %1245 = vmatpush2.msra.mxu0 0.0
    %1246 = vmatprep.subr.mxu0 0.0
    %1247 = vmatpush2.msra.mxu0 0.0
    %1248 = vmatprep.subr.mxu0 0.0
    %1249 = vmatpush2.msra.mxu0 0.0
    %1250 = vmatprep.subr.mxu0 0.0
    %1251 = vmatpush2.msra.mxu0 0.0
    %1252 = vmatprep.subr.mxu0 0.0
    %1253 = vmatpush2.msra.mxu0 0.0
    %1254 = vmatprep.subr.mxu0 0.0
    %1255 = vmatpush2.msra.mxu0 0.0
    %1256 = vmatprep.subr.mxu0 0.0
    %1257 = vmatpush2.msra.mxu0 0.0
    %1258 = vmatprep.subr.mxu0 0.0
    %1259 = vmatpush2.msra.mxu0 0.0
    %1260 = vmatprep.subr.mxu0 0.0
    %1261 = vmatpush2.msra.mxu0 0.0
    %1262 = vmatprep.subr.mxu0 0.0
    %1263 = vmatpush2.msra.mxu0 0.0
    %1264 = vmatprep.subr.mxu0 0.0
    %1265 = vmatpush2.msra.mxu0 0.0
    %1266 = vmatprep.subr.mxu0 0.0
    %1267 = vmatpush2.msra.mxu0 0.0
    %1268 = vmatprep.subr.mxu0 0.0
    %1269 = vmatpush2.msra.mxu0 0.0
    %1270 = vmatprep.subr.mxu0 0.0
    %1271 = vmatpush2.msra.mxu0 0.0
    %1272 = vmatprep.subr.mxu0 0.0
    %1273 = vmatpush2.msra.mxu0 0.0
    %1274 = vmatprep.subr.mxu0 0.0
    %1275 = vmatpush2.msra.mxu0 0.0
    %1276 = vmatprep.mubr.f32.mxu0 0.0
    %1277 = vmatmul.mubr.f32.gmra.mxu0 %v1070
    %v1278 = vpop.f32.mrf.mxu0
    %v1279 = vadd.f32 0.0, %v1278
    %v1280 = vpop.f32.mrf.mxu0
    %1281 = vdwg.mxu0
    %1282 = vmatprep.subr.mxu0 0.0
    %1283 = vmatpush1.msra.mxu0 0.0
    %1284 = vmatprep.subr.mxu0 0.0
    %1285 = vmatpush1.msra.mxu0 0.0
    %1286 = vmatprep.subr.mxu0 0.0
    %1287 = vmatpush1.msra.mxu0 0.0
    %1288 = vmatprep.subr.mxu0 0.0
    %1289 = vmatpush1.msra.mxu0 0.0
    %1290 = vmatprep.subr.mxu0 0.0
    %1291 = vmatpush1.msra.mxu0 0.0
    %1292 = vmatprep.subr.mxu0 0.0
    %1293 = vmatpush1.msra.mxu0 0.0
    %1294 = vmatprep.subr.mxu0 0.0
    %1295 = vmatpush1.msra.mxu0 0.0
    %1296 = vmatprep.subr.mxu0 0.0
    %1297 = vmatpush1.msra.mxu0 0.0
    %1298 = vmatprep.subr.mxu0 0.0
    %1299 = vmatpush1.msra.mxu0 0.0
    %1300 = vmatprep.subr.mxu0 0.0
    %1301 = vmatpush1.msra.mxu0 0.0
    %1302 = vmatprep.subr.mxu0 0.0
    %1303 = vmatpush1.msra.mxu0 0.0
    %1304 = vmatprep.subr.mxu0 0.0
    %1305 = vmatpush1.msra.mxu0 0.0
    %1306 = vmatprep.subr.mxu0 0.0
    %1307 = vmatpush1.msra.mxu0 0.0
    %1308 = vmatprep.subr.mxu0 0.0
    %1309 = vmatpush1.msra.mxu0 0.0
    %1310 = vmatprep.subr.mxu0 0.0
    %1311 = vmatpush1.msra.mxu0 %v413
    %1312 = vmatprep.subr.mxu0 0.0
    %1313 = vmatpush1.msra.mxu0 %v412
    %1314 = vmatprep.subr.mxu0 0.0
    %1315 = vmatpush2.msra.mxu0 0.0
    %1316 = vmatprep.subr.mxu0 0.0
    %1317 = vmatpush2.msra.mxu0 0.0
    %1318 = vmatprep.subr.mxu0 0.0
    %1319 = vmatpush2.msra.mxu0 0.0
    %1320 = vmatprep.subr.mxu0 0.0
    %1321 = vmatpush2.msra.mxu0 0.0
    %1322 = vmatprep.subr.mxu0 0.0
    %1323 = vmatpush2.msra.mxu0 0.0
    %1324 = vmatprep.subr.mxu0 0.0
    %1325 = vmatpush2.msra.mxu0 0.0
    %1326 = vmatprep.subr.mxu0 0.0
    %1327 = vmatpush2.msra.mxu0 0.0
    %1328 = vmatprep.subr.mxu0 0.0
    %1329 = vmatpush2.msra.mxu0 0.0
    %1330 = vmatprep.subr.mxu0 0.0
    %1331 = vmatpush2.msra.mxu0 0.0
    %1332 = vmatprep.subr.mxu0 0.0
    %1333 = vmatpush2.msra.mxu0 0.0
    %1334 = vmatprep.subr.mxu0 0.0
    %1335 = vmatpush2.msra.mxu0 0.0
    %1336 = vmatprep.subr.mxu0 0.0
    %1337 = vmatpush2.msra.mxu0 0.0
    %1338 = vmatprep.subr.mxu0 0.0
    %1339 = vmatpush2.msra.mxu0 0.0
    %1340 = vmatprep.subr.mxu0 0.0
    %1341 = vmatpush2.msra.mxu0 0.0
    %1342 = vmatprep.subr.mxu0 0.0
    %1343 = vmatpush2.msra.mxu0 0.0
    %1344 = vmatprep.subr.mxu0 0.0
    %1345 = vmatpush2.msra.mxu0 0.0
    %1346 = vmatprep.mubr.f32.mxu0 0.0
    %1347 = vmatmul.mubr.f32.gmra.mxu0 %v1070
    %v1348 = vpop.f32.mrf.mxu0
    %v1349 = vadd.f32 0.0, %v1348
    %v1350 = vpop.f32.mrf.mxu0
    %1351 = vdwg.mxu0
    %v1353 = vrot.slane %v1139, 4
    %v1355 = vadd.f32 %v140, %v1353
    %v1356 = vxor.u32 %v1355, 2147483648
    %v1357 = vmul.f32 %v1356, 1.442695
    %v1358 = vpow.pop %v1357
    %v1359 = vadd.f32 %v1358, 1.0
    %v1360 = vrcp.pop %v1359
    %v1361 = vmul.f32 1.0, %v1360
    %v1363 = vrot.slane %v1209, 4
    %v1365 = vadd.f32 %v225, %v1363
    %v1366 = vxor.u32 %v1365, 2147483648
    %v1367 = vmul.f32 %v1366, 1.442695
    %v1368 = vpow.pop %v1367
    %v1369 = vadd.f32 %v1368, 1.0
    %v1370 = vrcp.pop %v1369
    %v1371 = vmul.f32 1.0, %v1370
    %v1373 = vrot.slane %v1279, 4
    %v1375 = vadd.f32 %v310, %v1373
    %v1376 = vtanh.pop %v1375
    %v1378 = vrot.slane %v1349, 4
    %v1380 = vadd.f32 %v395, %v1378
    %v1381 = vxor.u32 %v1380, 2147483648
    %v1382 = vmul.f32 %v1381, 1.442695
    %v1383 = vpow.pop %v1382
    %v1384 = vadd.f32 %v1383, 1.0
    %v1385 = vrcp.pop %v1384
    %v1386 = vmul.f32 1.0, %v1385
    %v1388 = vrot.slane %v1056, 6
    %v1390 = vmul.f32 %v1371, %v1388
    %v1391 = vmul.f32 %v1361, %v1376
    %v1392 = vadd.f32 %v1390, %v1391
    %v1393 = vtanh.pop %v1392
    %v1394 = vmul.f32 %v1386, %v1393
    %vm1395 = vcmp.gt.s32.totalorder %v55, 2
    %v1396 = vsel %vm1395, 1, 0
    %1397 = vset.pattern.permute.xlu0 0
    %1398 = vperm.xlu0 %1397, %v1396
    %v1399 = vpop.permute.xlu0 %1398
    %vm1400 = vcmp.eq.s32.totalorder %v1399, 1
    %v1402 = vrot.slane %v1394, 4
    %v1404 = vsel %vm1400, %v1402, %v1068
    %v1406 = vsel %vm414, %v1404, 0
    %1408 = vmatprep.subr.mxu0 0.0
    %1409 = vmatpush1.msra.mxu0 0.0
    %1410 = vmatprep.subr.mxu0 0.0
    %1411 = vmatpush1.msra.mxu0 0.0
    %1412 = vmatprep.subr.mxu0 0.0
    %1413 = vmatpush1.msra.mxu0 0.0
    %1414 = vmatprep.subr.mxu0 0.0
    %1415 = vmatpush1.msra.mxu0 0.0
    %1416 = vmatprep.subr.mxu0 0.0
    %1417 = vmatpush1.msra.mxu0 0.0
    %1418 = vmatprep.subr.mxu0 0.0
    %1419 = vmatpush1.msra.mxu0 0.0
    %1420 = vmatprep.subr.mxu0 0.0
    %1421 = vmatpush1.msra.mxu0 0.0
    %1422 = vmatprep.subr.mxu0 0.0
    %1423 = vmatpush1.msra.mxu0 0.0
    %1424 = vmatprep.subr.mxu0 0.0
    %1425 = vmatpush1.msra.mxu0 0.0
    %1426 = vmatprep.subr.mxu0 0.0
    %1427 = vmatpush1.msra.mxu0 0.0
    %1428 = vmatprep.subr.mxu0 0.0
    %1429 = vmatpush1.msra.mxu0 0.0
    %1430 = vmatprep.subr.mxu0 0.0
    %1431 = vmatpush1.msra.mxu0 0.0
    %1432 = vmatprep.subr.mxu0 0.0
    %1433 = vmatpush1.msra.mxu0 0.0
    %1434 = vmatprep.subr.mxu0 0.0
    %1435 = vmatpush1.msra.mxu0 0.0
    %1436 = vmatprep.subr.mxu0 0.0
    %1437 = vmatpush1.msra.mxu0 %v404
    %1438 = vmatprep.subr.mxu0 0.0
    %1439 = vmatpush1.msra.mxu0 %v403
    %1440 = vmatprep.subr.mxu0 0.0
    %1441 = vmatpush2.msra.mxu0 0.0
    %1442 = vmatprep.subr.mxu0 0.0
    %1443 = vmatpush2.msra.mxu0 0.0
    %1444 = vmatprep.subr.mxu0 0.0
    %1445 = vmatpush2.msra.mxu0 0.0
    %1446 = vmatprep.subr.mxu0 0.0
    %1447 = vmatpush2.msra.mxu0 0.0
    %1448 = vmatprep.subr.mxu0 0.0
    %1449 = vmatpush2.msra.mxu0 0.0
    %1450 = vmatprep.subr.mxu0 0.0
    %1451 = vmatpush2.msra.mxu0 0.0
    %1452 = vmatprep.subr.mxu0 0.0
    %1453 = vmatpush2.msra.mxu0 0.0
    %1454 = vmatprep.subr.mxu0 0.0
    %1455 = vmatpush2.msra.mxu0 0.0
    %1456 = vmatprep.subr.mxu0 0.0
    %1457 = vmatpush2.msra.mxu0 0.0
    %1458 = vmatprep.subr.mxu0 0.0
    %1459 = vmatpush2.msra.mxu0 0.0
    %1460 = vmatprep.subr.mxu0 0.0
    %1461 = vmatpush2.msra.mxu0 0.0
    %1462 = vmatprep.subr.mxu0 0.0
    %1463 = vmatpush2.msra.mxu0 0.0
    %1464 = vmatprep.subr.mxu0 0.0
    %1465 = vmatpush2.msra.mxu0 0.0
    %1466 = vmatprep.subr.mxu0 0.0
    %1467 = vmatpush2.msra.mxu0 0.0
    %1468 = vmatprep.subr.mxu0 0.0
    %1469 = vmatpush2.msra.mxu0 0.0
    %1470 = vmatprep.subr.mxu0 0.0
    %1471 = vmatpush2.msra.mxu0 0.0
    %1472 = vmatprep.mubr.f32.mxu0 0.0
    %1473 = vmatmul.mubr.f32.gmra.mxu0 %v1406
    %v1474 = vpop.f32.mrf.mxu0
    %v1475 = vadd.f32 0.0, %v1474
    %v1476 = vpop.f32.mrf.mxu0
    %1477 = vdwg.mxu0
    %1478 = vmatprep.subr.mxu0 0.0
    %1479 = vmatpush1.msra.mxu0 0.0
    %1480 = vmatprep.subr.mxu0 0.0
    %1481 = vmatpush1.msra.mxu0 0.0
    %1482 = vmatprep.subr.mxu0 0.0
    %1483 = vmatpush1.msra.mxu0 0.0
    %1484 = vmatprep.subr.mxu0 0.0
    %1485 = vmatpush1.msra.mxu0 0.0
    %1486 = vmatprep.subr.mxu0 0.0
    %1487 = vmatpush1.msra.mxu0 0.0
    %1488 = vmatprep.subr.mxu0 0.0
    %1489 = vmatpush1.msra.mxu0 0.0
    %1490 = vmatprep.subr.mxu0 0.0
    %1491 = vmatpush1.msra.mxu0 0.0
    %1492 = vmatprep.subr.mxu0 0.0
    %1493 = vmatpush1.msra.mxu0 0.0
    %1494 = vmatprep.subr.mxu0 0.0
    %1495 = vmatpush1.msra.mxu0 0.0
    %1496 = vmatprep.subr.mxu0 0.0
    %1497 = vmatpush1.msra.mxu0 0.0
    %1498 = vmatprep.subr.mxu0 0.0
    %1499 = vmatpush1.msra.mxu0 0.0
    %1500 = vmatprep.subr.mxu0 0.0
    %1501 = vmatpush1.msra.mxu0 0.0
    %1502 = vmatprep.subr.mxu0 0.0
    %1503 = vmatpush1.msra.mxu0 0.0
    %1504 = vmatprep.subr.mxu0 0.0
    %1505 = vmatpush1.msra.mxu0 0.0
    %1506 = vmatprep.subr.mxu0 0.0
    %1507 = vmatpush1.msra.mxu0 %v407
    %1508 = vmatprep.subr.mxu0 0.0
    %1509 = vmatpush1.msra.mxu0 %v406
    %1510 = vmatprep.subr.mxu0 0.0
    %1511 = vmatpush2.msra.mxu0 0.0
    %1512 = vmatprep.subr.mxu0 0.0
    %1513 = vmatpush2.msra.mxu0 0.0
    %1514 = vmatprep.subr.mxu0 0.0
    %1515 = vmatpush2.msra.mxu0 0.0
    %1516 = vmatprep.subr.mxu0 0.0
    %1517 = vmatpush2.msra.mxu0 0.0
    %1518 = vmatprep.subr.mxu0 0.0
    %1519 = vmatpush2.msra.mxu0 0.0
    %1520 = vmatprep.subr.mxu0 0.0
    %1521 = vmatpush2.msra.mxu0 0.0
    %1522 = vmatprep.subr.mxu0 0.0
    %1523 = vmatpush2.msra.mxu0 0.0
    %1524 = vmatprep.subr.mxu0 0.0
    %1525 = vmatpush2.msra.mxu0 0.0
    %1526 = vmatprep.subr.mxu0 0.0
    %1527 = vmatpush2.msra.mxu0 0.0
    %1528 = vmatprep.subr.mxu0 0.0
    %1529 = vmatpush2.msra.mxu0 0.0
    %1530 = vmatprep.subr.mxu0 0.0
    %1531 = vmatpush2.msra.mxu0 0.0
    %1532 = vmatprep.subr.mxu0 0.0
    %1533 = vmatpush2.msra.mxu0 0.0
    %1534 = vmatprep.subr.mxu0 0.0
    %1535 = vmatpush2.msra.mxu0 0.0
    %1536 = vmatprep.subr.mxu0 0.0
    %1537 = vmatpush2.msra.mxu0 0.0
    %1538 = vmatprep.subr.mxu0 0.0
    %1539 = vmatpush2.msra.mxu0 0.0
    %1540 = vmatprep.subr.mxu0 0.0
    %1541 = vmatpush2.msra.mxu0 0.0
    %1542 = vmatprep.mubr.f32.mxu0 0.0
    %1543 = vmatmul.mubr.f32.gmra.mxu0 %v1406
    %v1544 = vpop.f32.mrf.mxu0
    %v1545 = vadd.f32 0.0, %v1544
    %v1546 = vpop.f32.mrf.mxu0
    %1547 = vdwg.mxu0
    %1548 = vmatprep.subr.mxu0 0.0
    %1549 = vmatpush1.msra.mxu0 0.0
    %1550 = vmatprep.subr.mxu0 0.0
    %1551 = vmatpush1.msra.mxu0 0.0
    %1552 = vmatprep.subr.mxu0 0.0
    %1553 = vmatpush1.msra.mxu0 0.0
    %1554 = vmatprep.subr.mxu0 0.0
    %1555 = vmatpush1.msra.mxu0 0.0
    %1556 = vmatprep.subr.mxu0 0.0
    %1557 = vmatpush1.msra.mxu0 0.0
    %1558 = vmatprep.subr.mxu0 0.0
    %1559 = vmatpush1.msra.mxu0 0.0
    %1560 = vmatprep.subr.mxu0 0.0
    %1561 = vmatpush1.msra.mxu0 0.0
    %1562 = vmatprep.subr.mxu0 0.0
    %1563 = vmatpush1.msra.mxu0 0.0
    %1564 = vmatprep.subr.mxu0 0.0
    %1565 = vmatpush1.msra.mxu0 0.0
    %1566 = vmatprep.subr.mxu0 0.0
    %1567 = vmatpush1.msra.mxu0 0.0
    %1568 = vmatprep.subr.mxu0 0.0
    %1569 = vmatpush1.msra.mxu0 0.0
    %1570 = vmatprep.subr.mxu0 0.0
    %1571 = vmatpush1.msra.mxu0 0.0
    %1572 = vmatprep.subr.mxu0 0.0
    %1573 = vmatpush1.msra.mxu0 0.0
    %1574 = vmatprep.subr.mxu0 0.0
    %1575 = vmatpush1.msra.mxu0 0.0
    %1576 = vmatprep.subr.mxu0 0.0
    %1577 = vmatpush1.msra.mxu0 %v410
    %1578 = vmatprep.subr.mxu0 0.0
    %1579 = vmatpush1.msra.mxu0 %v409
    %1580 = vmatprep.subr.mxu0 0.0
    %1581 = vmatpush2.msra.mxu0 0.0
    %1582 = vmatprep.subr.mxu0 0.0
    %1583 = vmatpush2.msra.mxu0 0.0
    %1584 = vmatprep.subr.mxu0 0.0
    %1585 = vmatpush2.msra.mxu0 0.0
    %1586 = vmatprep.subr.mxu0 0.0
    %1587 = vmatpush2.msra.mxu0 0.0
    %1588 = vmatprep.subr.mxu0 0.0
    %1589 = vmatpush2.msra.mxu0 0.0
    %1590 = vmatprep.subr.mxu0 0.0
    %1591 = vmatpush2.msra.mxu0 0.0
    %1592 = vmatprep.subr.mxu0 0.0
    %1593 = vmatpush2.msra.mxu0 0.0
    %1594 = vmatprep.subr.mxu0 0.0
    %1595 = vmatpush2.msra.mxu0 0.0
    %1596 = vmatprep.subr.mxu0 0.0
    %1597 = vmatpush2.msra.mxu0 0.0
    %1598 = vmatprep.subr.mxu0 0.0
    %1599 = vmatpush2.msra.mxu0 0.0
    %1600 = vmatprep.subr.mxu0 0.0
    %1601 = vmatpush2.msra.mxu0 0.0
    %1602 = vmatprep.subr.mxu0 0.0
    %1603 = vmatpush2.msra.mxu0 0.0
    %1604 = vmatprep.subr.mxu0 0.0
    %1605 = vmatpush2.msra.mxu0 0.0
    %1606 = vmatprep.subr.mxu0 0.0
    %1607 = vmatpush2.msra.mxu0 0.0
    %1608 = vmatprep.subr.mxu0 0.0
    %1609 = vmatpush2.msra.mxu0 0.0
    %1610 = vmatprep.subr.mxu0 0.0
    %1611 = vmatpush2.msra.mxu0 0.0
    %1612 = vmatprep.mubr.f32.mxu0 0.0
    %1613 = vmatmul.mubr.f32.gmra.mxu0 %v1406
    %v1614 = vpop.f32.mrf.mxu0
    %v1615 = vadd.f32 0.0, %v1614
    %v1616 = vpop.f32.mrf.mxu0
    %1617 = vdwg.mxu0
    %1618 = vmatprep.subr.mxu0 0.0
    %1619 = vmatpush1.msra.mxu0 0.0
    %1620 = vmatprep.subr.mxu0 0.0
    %1621 = vmatpush1.msra.mxu0 0.0
    %1622 = vmatprep.subr.mxu0 0.0
    %1623 = vmatpush1.msra.mxu0 0.0
    %1624 = vmatprep.subr.mxu0 0.0
    %1625 = vmatpush1.msra.mxu0 0.0
    %1626 = vmatprep.subr.mxu0 0.0
    %1627 = vmatpush1.msra.mxu0 0.0
    %1628 = vmatprep.subr.mxu0 0.0
    %1629 = vmatpush1.msra.mxu0 0.0
    %1630 = vmatprep.subr.mxu0 0.0
    %1631 = vmatpush1.msra.mxu0 0.0
    %1632 = vmatprep.subr.mxu0 0.0
    %1633 = vmatpush1.msra.mxu0 0.0
    %1634 = vmatprep.subr.mxu0 0.0
    %1635 = vmatpush1.msra.mxu0 0.0
    %1636 = vmatprep.subr.mxu0 0.0
    %1637 = vmatpush1.msra.mxu0 0.0
    %1638 = vmatprep.subr.mxu0 0.0
    %1639 = vmatpush1.msra.mxu0 0.0
    %1640 = vmatprep.subr.mxu0 0.0
    %1641 = vmatpush1.msra.mxu0 0.0
    %1642 = vmatprep.subr.mxu0 0.0
    %1643 = vmatpush1.msra.mxu0 0.0
    %1644 = vmatprep.subr.mxu0 0.0
    %1645 = vmatpush1.msra.mxu0 0.0
    %1646 = vmatprep.subr.mxu0 0.0
    %1647 = vmatpush1.msra.mxu0 %v413
    %1648 = vmatprep.subr.mxu0 0.0
    %1649 = vmatpush1.msra.mxu0 %v412
    %1650 = vmatprep.subr.mxu0 0.0
    %1651 = vmatpush2.msra.mxu0 0.0
    %1652 = vmatprep.subr.mxu0 0.0
    %1653 = vmatpush2.msra.mxu0 0.0
    %1654 = vmatprep.subr.mxu0 0.0
    %1655 = vmatpush2.msra.mxu0 0.0
    %1656 = vmatprep.subr.mxu0 0.0
    %1657 = vmatpush2.msra.mxu0 0.0
    %1658 = vmatprep.subr.mxu0 0.0
    %1659 = vmatpush2.msra.mxu0 0.0
    %1660 = vmatprep.subr.mxu0 0.0
    %1661 = vmatpush2.msra.mxu0 0.0
    %1662 = vmatprep.subr.mxu0 0.0
    %1663 = vmatpush2.msra.mxu0 0.0
    %1664 = vmatprep.subr.mxu0 0.0
    %1665 = vmatpush2.msra.mxu0 0.0
    %1666 = vmatprep.subr.mxu0 0.0
    %1667 = vmatpush2.msra.mxu0 0.0
    %1668 = vmatprep.subr.mxu0 0.0
    %1669 = vmatpush2.msra.mxu0 0.0
    %1670 = vmatprep.subr.mxu0 0.0
    %1671 = vmatpush2.msra.mxu0 0.0
    %1672 = vmatprep.subr.mxu0 0.0
    %1673 = vmatpush2.msra.mxu0 0.0
    %1674 = vmatprep.subr.mxu0 0.0
    %1675 = vmatpush2.msra.mxu0 0.0
    %1676 = vmatprep.subr.mxu0 0.0
    %1677 = vmatpush2.msra.mxu0 0.0
    %1678 = vmatprep.subr.mxu0 0.0
    %1679 = vmatpush2.msra.mxu0 0.0
    %1680 = vmatprep.subr.mxu0 0.0
    %1681 = vmatpush2.msra.mxu0 0.0
    %1682 = vmatprep.mubr.f32.mxu0 0.0
    %1683 = vmatmul.mubr.f32.gmra.mxu0 %v1406
    %v1684 = vpop.f32.mrf.mxu0
    %v1685 = vadd.f32 0.0, %v1684
    %v1686 = vpop.f32.mrf.mxu0
    %1687 = vdwg.mxu0
    %v1689 = vrot.slane %v1475, 2
    %v1691 = vadd.f32 %v140, %v1689
    %v1692 = vxor.u32 %v1691, 2147483648
    %v1693 = vmul.f32 %v1692, 1.442695
    %v1694 = vpow.pop %v1693
    %v1695 = vadd.f32 %v1694, 1.0
    %v1696 = vrcp.pop %v1695
    %v1697 = vmul.f32 1.0, %v1696
    %v1699 = vrot.slane %v1545, 2
    %v1701 = vadd.f32 %v225, %v1699
    %v1702 = vxor.u32 %v1701, 2147483648
    %v1703 = vmul.f32 %v1702, 1.442695
    %v1704 = vpow.pop %v1703
    %v1705 = vadd.f32 %v1704, 1.0
    %v1706 = vrcp.pop %v1705
    %v1707 = vmul.f32 1.0, %v1706
    %v1709 = vrot.slane %v1615, 2
    %v1711 = vadd.f32 %v310, %v1709
    %v1712 = vtanh.pop %v1711
    %v1714 = vrot.slane %v1685, 2
    %v1716 = vadd.f32 %v395, %v1714
    %v1717 = vxor.u32 %v1716, 2147483648
    %v1718 = vmul.f32 %v1717, 1.442695
    %v1719 = vpow.pop %v1718
    %v1720 = vadd.f32 %v1719, 1.0
    %v1721 = vrcp.pop %v1720
    %v1722 = vmul.f32 1.0, %v1721
    %v1724 = vrot.slane %v1392, 6
    %v1726 = vmul.f32 %v1707, %v1724
    %v1727 = vmul.f32 %v1697, %v1712
    %v1728 = vadd.f32 %v1726, %v1727
    %v1729 = vtanh.pop %v1728
    %v1730 = vmul.f32 %v1722, %v1729
    %vm1731 = vcmp.gt.s32.totalorder %v55, 3
    %v1732 = vsel %vm1731, 1, 0
    %1733 = vset.pattern.permute.xlu0 0
    %1734 = vperm.xlu0 %1733, %v1732
    %v1735 = vpop.permute.xlu0 %1734
    %vm1736 = vcmp.eq.s32.totalorder %v1735, 1
    %v1738 = vrot.slane %v1730, 6
    %v1740 = vsel %vm1736, %v1738, %v1404
    %v1742 = vsel %vm414, %v1740, 0
    %1744 = vmatprep.subr.mxu0 0.0
    %1745 = vmatpush1.msra.mxu0 0.0
    %1746 = vmatprep.subr.mxu0 0.0
    %1747 = vmatpush1.msra.mxu0 0.0
    %1748 = vmatprep.subr.mxu0 0.0
    %1749 = vmatpush1.msra.mxu0 0.0
    %1750 = vmatprep.subr.mxu0 0.0
    %1751 = vmatpush1.msra.mxu0 0.0
    %1752 = vmatprep.subr.mxu0 0.0
    %1753 = vmatpush1.msra.mxu0 0.0
    %1754 = vmatprep.subr.mxu0 0.0
    %1755 = vmatpush1.msra.mxu0 0.0
    %1756 = vmatprep.subr.mxu0 0.0
    %1757 = vmatpush1.msra.mxu0 0.0
    %1758 = vmatprep.subr.mxu0 0.0
    %1759 = vmatpush1.msra.mxu0 0.0
    %1760 = vmatprep.subr.mxu0 0.0
    %1761 = vmatpush1.msra.mxu0 0.0
    %1762 = vmatprep.subr.mxu0 0.0
    %1763 = vmatpush1.msra.mxu0 0.0
    %1764 = vmatprep.subr.mxu0 0.0
    %1765 = vmatpush1.msra.mxu0 0.0
    %1766 = vmatprep.subr.mxu0 0.0
    %1767 = vmatpush1.msra.mxu0 0.0
    %1768 = vmatprep.subr.mxu0 0.0
    %1769 = vmatpush1.msra.mxu0 0.0
    %1770 = vmatprep.subr.mxu0 0.0
    %1771 = vmatpush1.msra.mxu0 0.0
    %1772 = vmatprep.subr.mxu0 0.0
    %1773 = vmatpush1.msra.mxu0 %v404
    %1774 = vmatprep.subr.mxu0 0.0
    %1775 = vmatpush1.msra.mxu0 %v403
    %1776 = vmatprep.subr.mxu0 0.0
    %1777 = vmatpush2.msra.mxu0 0.0
    %1778 = vmatprep.subr.mxu0 0.0
    %1779 = vmatpush2.msra.mxu0 0.0
    %1780 = vmatprep.subr.mxu0 0.0
    %1781 = vmatpush2.msra.mxu0 0.0
    %1782 = vmatprep.subr.mxu0 0.0
    %1783 = vmatpush2.msra.mxu0 0.0
    %1784 = vmatprep.subr.mxu0 0.0
    %1785 = vmatpush2.msra.mxu0 0.0
    %1786 = vmatprep.subr.mxu0 0.0
    %1787 = vmatpush2.msra.mxu0 0.0
    %1788 = vmatprep.subr.mxu0 0.0
    %1789 = vmatpush2.msra.mxu0 0.0
    %1790 = vmatprep.subr.mxu0 0.0
    %1791 = vmatpush2.msra.mxu0 0.0
    %1792 = vmatprep.subr.mxu0 0.0
    %1793 = vmatpush2.msra.mxu0 0.0
    %1794 = vmatprep.subr.mxu0 0.0
    %1795 = vmatpush2.msra.mxu0 0.0
    %1796 = vmatprep.subr.mxu0 0.0
    %1797 = vmatpush2.msra.mxu0 0.0
    %1798 = vmatprep.subr.mxu0 0.0
    %1799 = vmatpush2.msra.mxu0 0.0
    %1800 = vmatprep.subr.mxu0 0.0
    %1801 = vmatpush2.msra.mxu0 0.0
    %1802 = vmatprep.subr.mxu0 0.0
    %1803 = vmatpush2.msra.mxu0 0.0
    %1804 = vmatprep.subr.mxu0 0.0
    %1805 = vmatpush2.msra.mxu0 0.0
    %1806 = vmatprep.subr.mxu0 0.0
    %1807 = vmatpush2.msra.mxu0 0.0
    %1808 = vmatprep.mubr.f32.mxu0 0.0
    %1809 = vmatmul.mubr.f32.gmra.mxu0 %v1742
    %v1810 = vpop.f32.mrf.mxu0
    %v1811 = vadd.f32 0.0, %v1810
    %v1812 = vpop.f32.mrf.mxu0
    %1813 = vdwg.mxu0
    %1814 = vmatprep.subr.mxu0 0.0
    %1815 = vmatpush1.msra.mxu0 0.0
    %1816 = vmatprep.subr.mxu0 0.0
    %1817 = vmatpush1.msra.mxu0 0.0
    %1818 = vmatprep.subr.mxu0 0.0
    %1819 = vmatpush1.msra.mxu0 0.0
    %1820 = vmatprep.subr.mxu0 0.0
    %1821 = vmatpush1.msra.mxu0 0.0
    %1822 = vmatprep.subr.mxu0 0.0
    %1823 = vmatpush1.msra.mxu0 0.0
    %1824 = vmatprep.subr.mxu0 0.0
    %1825 = vmatpush1.msra.mxu0 0.0
    %1826 = vmatprep.subr.mxu0 0.0
    %1827 = vmatpush1.msra.mxu0 0.0
    %1828 = vmatprep.subr.mxu0 0.0
    %1829 = vmatpush1.msra.mxu0 0.0
    %1830 = vmatprep.subr.mxu0 0.0
    %1831 = vmatpush1.msra.mxu0 0.0
    %1832 = vmatprep.subr.mxu0 0.0
    %1833 = vmatpush1.msra.mxu0 0.0
    %1834 = vmatprep.subr.mxu0 0.0
    %1835 = vmatpush1.msra.mxu0 0.0
    %1836 = vmatprep.subr.mxu0 0.0
    %1837 = vmatpush1.msra.mxu0 0.0
    %1838 = vmatprep.subr.mxu0 0.0
    %1839 = vmatpush1.msra.mxu0 0.0
    %1840 = vmatprep.subr.mxu0 0.0
    %1841 = vmatpush1.msra.mxu0 0.0
    %1842 = vmatprep.subr.mxu0 0.0
    %1843 = vmatpush1.msra.mxu0 %v407
    %1844 = vmatprep.subr.mxu0 0.0
    %1845 = vmatpush1.msra.mxu0 %v406
    %1846 = vmatprep.subr.mxu0 0.0
    %1847 = vmatpush2.msra.mxu0 0.0
    %1848 = vmatprep.subr.mxu0 0.0
    %1849 = vmatpush2.msra.mxu0 0.0
    %1850 = vmatprep.subr.mxu0 0.0
    %1851 = vmatpush2.msra.mxu0 0.0
    %1852 = vmatprep.subr.mxu0 0.0
    %1853 = vmatpush2.msra.mxu0 0.0
    %1854 = vmatprep.subr.mxu0 0.0
    %1855 = vmatpush2.msra.mxu0 0.0
    %1856 = vmatprep.subr.mxu0 0.0
    %1857 = vmatpush2.msra.mxu0 0.0
    %1858 = vmatprep.subr.mxu0 0.0
    %1859 = vmatpush2.msra.mxu0 0.0
    %1860 = vmatprep.subr.mxu0 0.0
    %1861 = vmatpush2.msra.mxu0 0.0
    %1862 = vmatprep.subr.mxu0 0.0
    %1863 = vmatpush2.msra.mxu0 0.0
    %1864 = vmatprep.subr.mxu0 0.0
    %1865 = vmatpush2.msra.mxu0 0.0
    %1866 = vmatprep.subr.mxu0 0.0
    %1867 = vmatpush2.msra.mxu0 0.0
    %1868 = vmatprep.subr.mxu0 0.0
    %1869 = vmatpush2.msra.mxu0 0.0
    %1870 = vmatprep.subr.mxu0 0.0
    %1871 = vmatpush2.msra.mxu0 0.0
    %1872 = vmatprep.subr.mxu0 0.0
    %1873 = vmatpush2.msra.mxu0 0.0
    %1874 = vmatprep.subr.mxu0 0.0
    %1875 = vmatpush2.msra.mxu0 0.0
    %1876 = vmatprep.subr.mxu0 0.0
    %1877 = vmatpush2.msra.mxu0 0.0
    %1878 = vmatprep.mubr.f32.mxu0 0.0
    %1879 = vmatmul.mubr.f32.gmra.mxu0 %v1742
    %v1880 = vpop.f32.mrf.mxu0
    %v1881 = vadd.f32 0.0, %v1880
    %v1882 = vpop.f32.mrf.mxu0
    %1883 = vdwg.mxu0
    %1884 = vmatprep.subr.mxu0 0.0
    %1885 = vmatpush1.msra.mxu0 0.0
    %1886 = vmatprep.subr.mxu0 0.0
    %1887 = vmatpush1.msra.mxu0 0.0
    %1888 = vmatprep.subr.mxu0 0.0
    %1889 = vmatpush1.msra.mxu0 0.0
    %1890 = vmatprep.subr.mxu0 0.0
    %1891 = vmatpush1.msra.mxu0 0.0
    %1892 = vmatprep.subr.mxu0 0.0
    %1893 = vmatpush1.msra.mxu0 0.0
    %1894 = vmatprep.subr.mxu0 0.0
    %1895 = vmatpush1.msra.mxu0 0.0
    %1896 = vmatprep.subr.mxu0 0.0
    %1897 = vmatpush1.msra.mxu0 0.0
    %1898 = vmatprep.subr.mxu0 0.0
    %1899 = vmatpush1.msra.mxu0 0.0
    %1900 = vmatprep.subr.mxu0 0.0
    %1901 = vmatpush1.msra.mxu0 0.0
    %1902 = vmatprep.subr.mxu0 0.0
    %1903 = vmatpush1.msra.mxu0 0.0
    %1904 = vmatprep.subr.mxu0 0.0
    %1905 = vmatpush1.msra.mxu0 0.0
    %1906 = vmatprep.subr.mxu0 0.0
    %1907 = vmatpush1.msra.mxu0 0.0
    %1908 = vmatprep.subr.mxu0 0.0
    %1909 = vmatpush1.msra.mxu0 0.0
    %1910 = vmatprep.subr.mxu0 0.0
    %1911 = vmatpush1.msra.mxu0 0.0
    %1912 = vmatprep.subr.mxu0 0.0
    %1913 = vmatpush1.msra.mxu0 %v410
    %1914 = vmatprep.subr.mxu0 0.0
    %1915 = vmatpush1.msra.mxu0 %v409
    %1916 = vmatprep.subr.mxu0 0.0
    %1917 = vmatpush2.msra.mxu0 0.0
    %1918 = vmatprep.subr.mxu0 0.0
    %1919 = vmatpush2.msra.mxu0 0.0
    %1920 = vmatprep.subr.mxu0 0.0
    %1921 = vmatpush2.msra.mxu0 0.0
    %1922 = vmatprep.subr.mxu0 0.0
    %1923 = vmatpush2.msra.mxu0 0.0
    %1924 = vmatprep.subr.mxu0 0.0
    %1925 = vmatpush2.msra.mxu0 0.0
    %1926 = vmatprep.subr.mxu0 0.0
    %1927 = vmatpush2.msra.mxu0 0.0
    %1928 = vmatprep.subr.mxu0 0.0
    %1929 = vmatpush2.msra.mxu0 0.0
    %1930 = vmatprep.subr.mxu0 0.0
    %1931 = vmatpush2.msra.mxu0 0.0
    %1932 = vmatprep.subr.mxu0 0.0
    %1933 = vmatpush2.msra.mxu0 0.0
    %1934 = vmatprep.subr.mxu0 0.0
    %1935 = vmatpush2.msra.mxu0 0.0
    %1936 = vmatprep.subr.mxu0 0.0
    %1937 = vmatpush2.msra.mxu0 0.0
    %1938 = vmatprep.subr.mxu0 0.0
    %1939 = vmatpush2.msra.mxu0 0.0
    %1940 = vmatprep.subr.mxu0 0.0
    %1941 = vmatpush2.msra.mxu0 0.0
    %1942 = vmatprep.subr.mxu0 0.0
    %1943 = vmatpush2.msra.mxu0 0.0
    %1944 = vmatprep.subr.mxu0 0.0
    %1945 = vmatpush2.msra.mxu0 0.0
    %1946 = vmatprep.subr.mxu0 0.0
    %1947 = vmatpush2.msra.mxu0 0.0
    %1948 = vmatprep.mubr.f32.mxu0 0.0
    %1949 = vmatmul.mubr.f32.gmra.mxu0 %v1742
    %v1950 = vpop.f32.mrf.mxu0
    %v1951 = vadd.f32 0.0, %v1950
    %v1952 = vpop.f32.mrf.mxu0
    %1953 = vdwg.mxu0
    %1954 = vmatprep.subr.mxu0 0.0
    %1955 = vmatpush1.msra.mxu0 0.0
    %1956 = vmatprep.subr.mxu0 0.0
    %1957 = vmatpush1.msra.mxu0 0.0
    %1958 = vmatprep.subr.mxu0 0.0
    %1959 = vmatpush1.msra.mxu0 0.0
    %1960 = vmatprep.subr.mxu0 0.0
    %1961 = vmatpush1.msra.mxu0 0.0
    %1962 = vmatprep.subr.mxu0 0.0
    %1963 = vmatpush1.msra.mxu0 0.0
    %1964 = vmatprep.subr.mxu0 0.0
    %1965 = vmatpush1.msra.mxu0 0.0
    %1966 = vmatprep.subr.mxu0 0.0
    %1967 = vmatpush1.msra.mxu0 0.0
    %1968 = vmatprep.subr.mxu0 0.0
    %1969 = vmatpush1.msra.mxu0 0.0
    %1970 = vmatprep.subr.mxu0 0.0
    %1971 = vmatpush1.msra.mxu0 0.0
    %1972 = vmatprep.subr.mxu0 0.0
    %1973 = vmatpush1.msra.mxu0 0.0
    %1974 = vmatprep.subr.mxu0 0.0
    %1975 = vmatpush1.msra.mxu0 0.0
    %1976 = vmatprep.subr.mxu0 0.0
    %1977 = vmatpush1.msra.mxu0 0.0
    %1978 = vmatprep.subr.mxu0 0.0
    %1979 = vmatpush1.msra.mxu0 0.0
    %1980 = vmatprep.subr.mxu0 0.0
    %1981 = vmatpush1.msra.mxu0 0.0
    %1982 = vmatprep.subr.mxu0 0.0
    %1983 = vmatpush1.msra.mxu0 %v413
    %1984 = vmatprep.subr.mxu0 0.0
    %1985 = vmatpush1.msra.mxu0 %v412
    %1986 = vmatprep.subr.mxu0 0.0
    %1987 = vmatpush2.msra.mxu0 0.0
    %1988 = vmatprep.subr.mxu0 0.0
    %1989 = vmatpush2.msra.mxu0 0.0
    %1990 = vmatprep.subr.mxu0 0.0
    %1991 = vmatpush2.msra.mxu0 0.0
    %1992 = vmatprep.subr.mxu0 0.0
    %1993 = vmatpush2.msra.mxu0 0.0
    %1994 = vmatprep.subr.mxu0 0.0
    %1995 = vmatpush2.msra.mxu0 0.0
    %1996 = vmatprep.subr.mxu0 0.0
    %1997 = vmatpush2.msra.mxu0 0.0
    %1998 = vmatprep.subr.mxu0 0.0
    %1999 = vmatpush2.msra.mxu0 0.0
    %2000 = vmatprep.subr.mxu0 0.0
    %2001 = vmatpush2.msra.mxu0 0.0
    %2002 = vmatprep.subr.mxu0 0.0
    %2003 = vmatpush2.msra.mxu0 0.0
    %2004 = vmatprep.subr.mxu0 0.0
    %2005 = vmatpush2.msra.mxu0 0.0
    %2006 = vmatprep.subr.mxu0 0.0
    %2007 = vmatpush2.msra.mxu0 0.0
    %2008 = vmatprep.subr.mxu0 0.0
    %2009 = vmatpush2.msra.mxu0 0.0
    %2010 = vmatprep.subr.mxu0 0.0
    %2011 = vmatpush2.msra.mxu0 0.0
    %2012 = vmatprep.subr.mxu0 0.0
    %2013 = vmatpush2.msra.mxu0 0.0
    %2014 = vmatprep.subr.mxu0 0.0
    %2015 = vmatpush2.msra.mxu0 0.0
    %2016 = vmatprep.subr.mxu0 0.0
    %2017 = vmatpush2.msra.mxu0 0.0
    %2018 = vmatprep.mubr.f32.mxu0 0.0
    %2019 = vmatmul.mubr.f32.gmra.mxu0 %v1742
    %v2020 = vpop.f32.mrf.mxu0
    %v2021 = vadd.f32 0.0, %v2020
    %v2022 = vpop.f32.mrf.mxu0
    %2023 = vdwg.mxu0
    %v2024 = vadd.f32 %v145, %v1811
    %v2025 = vxor.u32 %v2024, 2147483648
    %v2026 = vmul.f32 %v2025, 1.442695
    %v2027 = vpow.pop %v2026
    %v2028 = vadd.f32 %v2027, 1.0
    %v2029 = vrcp.pop %v2028
    %v2030 = vmul.f32 1.0, %v2029
    %v2031 = vadd.f32 %v230, %v1881
    %v2032 = vxor.u32 %v2031, 2147483648
    %v2033 = vmul.f32 %v2032, 1.442695
    %v2034 = vpow.pop %v2033
    %v2035 = vadd.f32 %v2034, 1.0
    %v2036 = vrcp.pop %v2035
    %v2037 = vmul.f32 1.0, %v2036
    %v2038 = vadd.f32 %v315, %v1951
    %v2039 = vtanh.pop %v2038
    %v2040 = vadd.f32 %v400, %v2021
    %v2041 = vxor.u32 %v2040, 2147483648
    %v2042 = vmul.f32 %v2041, 1.442695
    %v2043 = vpow.pop %v2042
    %v2044 = vadd.f32 %v2043, 1.0
    %v2045 = vrcp.pop %v2044
    %v2046 = vmul.f32 1.0, %v2045
    %v2048 = vrot.slane %v1728, 6
    %v2050 = vmul.f32 %v2037, %v2048
    %v2051 = vmul.f32 %v2030, %v2039
    %v2052 = vadd.f32 %v2050, %v2051
    %v2053 = vtanh.pop %v2052
    %v2054 = vmul.f32 %v2046, %v2053
    %vm2055 = vcmp.gt.s32.totalorder %v55, 4
    %v2056 = vsel %vm2055, 1, 0
    %2057 = vset.pattern.permute.xlu0 0
    %2058 = vperm.xlu0 %2057, %v2056
    %v2059 = vpop.permute.xlu0 %2058
    %vm2060 = vcmp.eq.s32.totalorder %v2059, 1
    %v2061 = vsel %vm2060, %v2054, %v1740
    %v2063 = vsel %vm414, %v2061, 0
    %2065 = vmatprep.subr.mxu0 0.0
    %2066 = vmatpush1.msra.mxu0 0.0
    %2067 = vmatprep.subr.mxu0 0.0
    %2068 = vmatpush1.msra.mxu0 0.0
    %2069 = vmatprep.subr.mxu0 0.0
    %2070 = vmatpush1.msra.mxu0 0.0
    %2071 = vmatprep.subr.mxu0 0.0
    %2072 = vmatpush1.msra.mxu0 0.0
    %2073 = vmatprep.subr.mxu0 0.0
    %2074 = vmatpush1.msra.mxu0 0.0
    %2075 = vmatprep.subr.mxu0 0.0
    %2076 = vmatpush1.msra.mxu0 0.0
    %2077 = vmatprep.subr.mxu0 0.0
    %2078 = vmatpush1.msra.mxu0 0.0
    %2079 = vmatprep.subr.mxu0 0.0
    %2080 = vmatpush1.msra.mxu0 0.0
    %2081 = vmatprep.subr.mxu0 0.0
    %2082 = vmatpush1.msra.mxu0 0.0
    %2083 = vmatprep.subr.mxu0 0.0
    %2084 = vmatpush1.msra.mxu0 0.0
    %2085 = vmatprep.subr.mxu0 0.0
    %2086 = vmatpush1.msra.mxu0 0.0
    %2087 = vmatprep.subr.mxu0 0.0
    %2088 = vmatpush1.msra.mxu0 0.0
    %2089 = vmatprep.subr.mxu0 0.0
    %2090 = vmatpush1.msra.mxu0 0.0
    %2091 = vmatprep.subr.mxu0 0.0
    %2092 = vmatpush1.msra.mxu0 0.0
    %2093 = vmatprep.subr.mxu0 0.0
    %2094 = vmatpush1.msra.mxu0 %v404
    %2095 = vmatprep.subr.mxu0 0.0
    %2096 = vmatpush1.msra.mxu0 %v403
    %2097 = vmatprep.subr.mxu0 0.0
    %2098 = vmatpush2.msra.mxu0 0.0
    %2099 = vmatprep.subr.mxu0 0.0
    %2100 = vmatpush2.msra.mxu0 0.0
    %2101 = vmatprep.subr.mxu0 0.0
    %2102 = vmatpush2.msra.mxu0 0.0
    %2103 = vmatprep.subr.mxu0 0.0
    %2104 = vmatpush2.msra.mxu0 0.0
    %2105 = vmatprep.subr.mxu0 0.0
    %2106 = vmatpush2.msra.mxu0 0.0
    %2107 = vmatprep.subr.mxu0 0.0
    %2108 = vmatpush2.msra.mxu0 0.0
    %2109 = vmatprep.subr.mxu0 0.0
    %2110 = vmatpush2.msra.mxu0 0.0
    %2111 = vmatprep.subr.mxu0 0.0
    %2112 = vmatpush2.msra.mxu0 0.0
    %2113 = vmatprep.subr.mxu0 0.0
    %2114 = vmatpush2.msra.mxu0 0.0
    %2115 = vmatprep.subr.mxu0 0.0
    %2116 = vmatpush2.msra.mxu0 0.0
    %2117 = vmatprep.subr.mxu0 0.0
    %2118 = vmatpush2.msra.mxu0 0.0
    %2119 = vmatprep.subr.mxu0 0.0
    %2120 = vmatpush2.msra.mxu0 0.0
    %2121 = vmatprep.subr.mxu0 0.0
    %2122 = vmatpush2.msra.mxu0 0.0
    %2123 = vmatprep.subr.mxu0 0.0
    %2124 = vmatpush2.msra.mxu0 0.0
    %2125 = vmatprep.subr.mxu0 0.0
    %2126 = vmatpush2.msra.mxu0 0.0
    %2127 = vmatprep.subr.mxu0 0.0
    %2128 = vmatpush2.msra.mxu0 0.0
    %2129 = vmatprep.mubr.f32.mxu0 0.0
    %2130 = vmatmul.mubr.f32.gmra.mxu0 %v2063
    %v2131 = vpop.f32.mrf.mxu0
    %v2132 = vadd.f32 0.0, %v2131
    %v2133 = vpop.f32.mrf.mxu0
    %2134 = vdwg.mxu0
    %2135 = vmatprep.subr.mxu0 0.0
    %2136 = vmatpush1.msra.mxu0 0.0
    %2137 = vmatprep.subr.mxu0 0.0
    %2138 = vmatpush1.msra.mxu0 0.0
    %2139 = vmatprep.subr.mxu0 0.0
    %2140 = vmatpush1.msra.mxu0 0.0
    %2141 = vmatprep.subr.mxu0 0.0
    %2142 = vmatpush1.msra.mxu0 0.0
    %2143 = vmatprep.subr.mxu0 0.0
    %2144 = vmatpush1.msra.mxu0 0.0
    %2145 = vmatprep.subr.mxu0 0.0
    %2146 = vmatpush1.msra.mxu0 0.0
    %2147 = vmatprep.subr.mxu0 0.0
    %2148 = vmatpush1.msra.mxu0 0.0
    %2149 = vmatprep.subr.mxu0 0.0
    %2150 = vmatpush1.msra.mxu0 0.0
    %2151 = vmatprep.subr.mxu0 0.0
    %2152 = vmatpush1.msra.mxu0 0.0
    %2153 = vmatprep.subr.mxu0 0.0
    %2154 = vmatpush1.msra.mxu0 0.0
    %2155 = vmatprep.subr.mxu0 0.0
    %2156 = vmatpush1.msra.mxu0 0.0
    %2157 = vmatprep.subr.mxu0 0.0
    %2158 = vmatpush1.msra.mxu0 0.0
    %2159 = vmatprep.subr.mxu0 0.0
    %2160 = vmatpush1.msra.mxu0 0.0
    %2161 = vmatprep.subr.mxu0 0.0
    %2162 = vmatpush1.msra.mxu0 0.0
    %2163 = vmatprep.subr.mxu0 0.0
    %2164 = vmatpush1.msra.mxu0 %v407
    %2165 = vmatprep.subr.mxu0 0.0
    %2166 = vmatpush1.msra.mxu0 %v406
    %2167 = vmatprep.subr.mxu0 0.0
    %2168 = vmatpush2.msra.mxu0 0.0
    %2169 = vmatprep.subr.mxu0 0.0
    %2170 = vmatpush2.msra.mxu0 0.0
    %2171 = vmatprep.subr.mxu0 0.0
    %2172 = vmatpush2.msra.mxu0 0.0
    %2173 = vmatprep.subr.mxu0 0.0
    %2174 = vmatpush2.msra.mxu0 0.0
    %2175 = vmatprep.subr.mxu0 0.0
    %2176 = vmatpush2.msra.mxu0 0.0
    %2177 = vmatprep.subr.mxu0 0.0
    %2178 = vmatpush2.msra.mxu0 0.0
    %2179 = vmatprep.subr.mxu0 0.0
    %2180 = vmatpush2.msra.mxu0 0.0
    %2181 = vmatprep.subr.mxu0 0.0
    %2182 = vmatpush2.msra.mxu0 0.0
    %2183 = vmatprep.subr.mxu0 0.0
    %2184 = vmatpush2.msra.mxu0 0.0
    %2185 = vmatprep.subr.mxu0 0.0
    %2186 = vmatpush2.msra.mxu0 0.0
    %2187 = vmatprep.subr.mxu0 0.0
    %2188 = vmatpush2.msra.mxu0 0.0
    %2189 = vmatprep.subr.mxu0 0.0
    %2190 = vmatpush2.msra.mxu0 0.0
    %2191 = vmatprep.subr.mxu0 0.0
    %2192 = vmatpush2.msra.mxu0 0.0
    %2193 = vmatprep.subr.mxu0 0.0
    %2194 = vmatpush2.msra.mxu0 0.0
    %2195 = vmatprep.subr.mxu0 0.0
    %2196 = vmatpush2.msra.mxu0 0.0
    %2197 = vmatprep.subr.mxu0 0.0
    %2198 = vmatpush2.msra.mxu0 0.0
    %2199 = vmatprep.mubr.f32.mxu0 0.0
    %2200 = vmatmul.mubr.f32.gmra.mxu0 %v2063
    %v2201 = vpop.f32.mrf.mxu0
    %v2202 = vadd.f32 0.0, %v2201
    %v2203 = vpop.f32.mrf.mxu0
    %2204 = vdwg.mxu0
    %2205 = vmatprep.subr.mxu0 0.0
    %2206 = vmatpush1.msra.mxu0 0.0
    %2207 = vmatprep.subr.mxu0 0.0
    %2208 = vmatpush1.msra.mxu0 0.0
    %2209 = vmatprep.subr.mxu0 0.0
    %2210 = vmatpush1.msra.mxu0 0.0
    %2211 = vmatprep.subr.mxu0 0.0
    %2212 = vmatpush1.msra.mxu0 0.0
    %2213 = vmatprep.subr.mxu0 0.0
    %2214 = vmatpush1.msra.mxu0 0.0
    %2215 = vmatprep.subr.mxu0 0.0
    %2216 = vmatpush1.msra.mxu0 0.0
    %2217 = vmatprep.subr.mxu0 0.0
    %2218 = vmatpush1.msra.mxu0 0.0
    %2219 = vmatprep.subr.mxu0 0.0
    %2220 = vmatpush1.msra.mxu0 0.0
    %2221 = vmatprep.subr.mxu0 0.0
    %2222 = vmatpush1.msra.mxu0 0.0
    %2223 = vmatprep.subr.mxu0 0.0
    %2224 = vmatpush1.msra.mxu0 0.0
    %2225 = vmatprep.subr.mxu0 0.0
    %2226 = vmatpush1.msra.mxu0 0.0
    %2227 = vmatprep.subr.mxu0 0.0
    %2228 = vmatpush1.msra.mxu0 0.0
    %2229 = vmatprep.subr.mxu0 0.0
    %2230 = vmatpush1.msra.mxu0 0.0
    %2231 = vmatprep.subr.mxu0 0.0
    %2232 = vmatpush1.msra.mxu0 0.0
    %2233 = vmatprep.subr.mxu0 0.0
    %2234 = vmatpush1.msra.mxu0 %v410
    %2235 = vmatprep.subr.mxu0 0.0
    %2236 = vmatpush1.msra.mxu0 %v409
    %2237 = vmatprep.subr.mxu0 0.0
    %2238 = vmatpush2.msra.mxu0 0.0
    %2239 = vmatprep.subr.mxu0 0.0
    %2240 = vmatpush2.msra.mxu0 0.0
    %2241 = vmatprep.subr.mxu0 0.0
    %2242 = vmatpush2.msra.mxu0 0.0
    %2243 = vmatprep.subr.mxu0 0.0
    %2244 = vmatpush2.msra.mxu0 0.0
    %2245 = vmatprep.subr.mxu0 0.0
    %2246 = vmatpush2.msra.mxu0 0.0
    %2247 = vmatprep.subr.mxu0 0.0
    %2248 = vmatpush2.msra.mxu0 0.0
    %2249 = vmatprep.subr.mxu0 0.0
    %2250 = vmatpush2.msra.mxu0 0.0
    %2251 = vmatprep.subr.mxu0 0.0
    %2252 = vmatpush2.msra.mxu0 0.0
    %2253 = vmatprep.subr.mxu0 0.0
    %2254 = vmatpush2.msra.mxu0 0.0
    %2255 = vmatprep.subr.mxu0 0.0
    %2256 = vmatpush2.msra.mxu0 0.0
    %2257 = vmatprep.subr.mxu0 0.0
    %2258 = vmatpush2.msra.mxu0 0.0
    %2259 = vmatprep.subr.mxu0 0.0
    %2260 = vmatpush2.msra.mxu0 0.0
    %2261 = vmatprep.subr.mxu0 0.0
    %2262 = vmatpush2.msra.mxu0 0.0
    %2263 = vmatprep.subr.mxu0 0.0
    %2264 = vmatpush2.msra.mxu0 0.0
    %2265 = vmatprep.subr.mxu0 0.0
    %2266 = vmatpush2.msra.mxu0 0.0
    %2267 = vmatprep.subr.mxu0 0.0
    %2268 = vmatpush2.msra.mxu0 0.0
    %2269 = vmatprep.mubr.f32.mxu0 0.0
    %2270 = vmatmul.mubr.f32.gmra.mxu0 %v2063
    %v2271 = vpop.f32.mrf.mxu0
    %v2272 = vadd.f32 0.0, %v2271
    %v2273 = vpop.f32.mrf.mxu0
    %2274 = vdwg.mxu0
    %2275 = vmatprep.subr.mxu0 0.0
    %2276 = vmatpush1.msra.mxu0 0.0
    %2277 = vmatprep.subr.mxu0 0.0
    %2278 = vmatpush1.msra.mxu0 0.0
    %2279 = vmatprep.subr.mxu0 0.0
    %2280 = vmatpush1.msra.mxu0 0.0
    %2281 = vmatprep.subr.mxu0 0.0
    %2282 = vmatpush1.msra.mxu0 0.0
    %2283 = vmatprep.subr.mxu0 0.0
    %2284 = vmatpush1.msra.mxu0 0.0
    %2285 = vmatprep.subr.mxu0 0.0
    %2286 = vmatpush1.msra.mxu0 0.0
    %2287 = vmatprep.subr.mxu0 0.0
    %2288 = vmatpush1.msra.mxu0 0.0
    %2289 = vmatprep.subr.mxu0 0.0
    %2290 = vmatpush1.msra.mxu0 0.0
    %2291 = vmatprep.subr.mxu0 0.0
    %2292 = vmatpush1.msra.mxu0 0.0
    %2293 = vmatprep.subr.mxu0 0.0
    %2294 = vmatpush1.msra.mxu0 0.0
    %2295 = vmatprep.subr.mxu0 0.0
    %2296 = vmatpush1.msra.mxu0 0.0
    %2297 = vmatprep.subr.mxu0 0.0
    %2298 = vmatpush1.msra.mxu0 0.0
    %2299 = vmatprep.subr.mxu0 0.0
    %2300 = vmatpush1.msra.mxu0 0.0
    %2301 = vmatprep.subr.mxu0 0.0
    %2302 = vmatpush1.msra.mxu0 0.0
    %2303 = vmatprep.subr.mxu0 0.0
    %2304 = vmatpush1.msra.mxu0 %v413
    %2305 = vmatprep.subr.mxu0 0.0
    %2306 = vmatpush1.msra.mxu0 %v412
    %2307 = vmatprep.subr.mxu0 0.0
    %2308 = vmatpush2.msra.mxu0 0.0
    %2309 = vmatprep.subr.mxu0 0.0
    %2310 = vmatpush2.msra.mxu0 0.0
    %2311 = vmatprep.subr.mxu0 0.0
    %2312 = vmatpush2.msra.mxu0 0.0
    %2313 = vmatprep.subr.mxu0 0.0
    %2314 = vmatpush2.msra.mxu0 0.0
    %2315 = vmatprep.subr.mxu0 0.0
    %2316 = vmatpush2.msra.mxu0 0.0
    %2317 = vmatprep.subr.mxu0 0.0
    %2318 = vmatpush2.msra.mxu0 0.0
    %2319 = vmatprep.subr.mxu0 0.0
    %2320 = vmatpush2.msra.mxu0 0.0
    %2321 = vmatprep.subr.mxu0 0.0
    %2322 = vmatpush2.msra.mxu0 0.0
    %2323 = vmatprep.subr.mxu0 0.0
    %2324 = vmatpush2.msra.mxu0 0.0
    %2325 = vmatprep.subr.mxu0 0.0
    %2326 = vmatpush2.msra.mxu0 0.0
    %2327 = vmatprep.subr.mxu0 0.0
    %2328 = vmatpush2.msra.mxu0 0.0
    %2329 = vmatprep.subr.mxu0 0.0
    %2330 = vmatpush2.msra.mxu0 0.0
    %2331 = vmatprep.subr.mxu0 0.0
    %2332 = vmatpush2.msra.mxu0 0.0
    %2333 = vmatprep.subr.mxu0 0.0
    %2334 = vmatpush2.msra.mxu0 0.0
    %2335 = vmatprep.subr.mxu0 0.0
    %2336 = vmatpush2.msra.mxu0 0.0
    %2337 = vmatprep.subr.mxu0 0.0
    %2338 = vmatpush2.msra.mxu0 0.0
    %2339 = vmatprep.mubr.f32.mxu0 0.0
    %2340 = vmatmul.mubr.f32.gmra.mxu0 %v2063
    %v2341 = vpop.f32.mrf.mxu0
    %v2342 = vadd.f32 0.0, %v2341
    %v2343 = vpop.f32.mrf.mxu0
    %2344 = vdwg.mxu0
    %v2346 = vrot.slane %v2132, 6
    %v2348 = vadd.f32 %v145, %v2346
    %v2349 = vxor.u32 %v2348, 2147483648
    %v2350 = vmul.f32 %v2349, 1.442695
    %v2351 = vpow.pop %v2350
    %v2352 = vadd.f32 %v2351, 1.0
    %v2353 = vrcp.pop %v2352
    %v2354 = vmul.f32 1.0, %v2353
    %v2356 = vrot.slane %v2202, 6
    %v2358 = vadd.f32 %v230, %v2356
    %v2359 = vxor.u32 %v2358, 2147483648
    %v2360 = vmul.f32 %v2359, 1.442695
    %v2361 = vpow.pop %v2360
    %v2362 = vadd.f32 %v2361, 1.0
    %v2363 = vrcp.pop %v2362
    %v2364 = vmul.f32 1.0, %v2363
    %v2366 = vrot.slane %v2272, 6
    %v2368 = vadd.f32 %v315, %v2366
    %v2369 = vtanh.pop %v2368
    %v2371 = vrot.slane %v2342, 6
    %v2373 = vadd.f32 %v400, %v2371
    %v2374 = vxor.u32 %v2373, 2147483648
    %v2375 = vmul.f32 %v2374, 1.442695
    %v2376 = vpow.pop %v2375
    %v2377 = vadd.f32 %v2376, 1.0
    %v2378 = vrcp.pop %v2377
    %v2379 = vmul.f32 1.0, %v2378
    %v2381 = vrot.slane %v2052, 6
    %v2383 = vmul.f32 %v2364, %v2381
    %v2384 = vmul.f32 %v2354, %v2369
    %v2385 = vadd.f32 %v2383, %v2384
    %v2386 = vtanh.pop %v2385
    %v2387 = vmul.f32 %v2379, %v2386
    %vm2388 = vcmp.gt.s32.totalorder %v55, 5
    %v2389 = vsel %vm2388, 1, 0
    %2390 = vset.pattern.permute.xlu0 0
    %2391 = vperm.xlu0 %2390, %v2389
    %v2392 = vpop.permute.xlu0 %2391
    %vm2393 = vcmp.eq.s32.totalorder %v2392, 1
    %v2395 = vrot.slane %v2387, 2
    %v2397 = vsel %vm2393, %v2395, %v2061
    %v2399 = vsel %vm414, %v2397, 0
    %2401 = vmatprep.subr.mxu0 0.0
    %2402 = vmatpush1.msra.mxu0 0.0
    %2403 = vmatprep.subr.mxu0 0.0
    %2404 = vmatpush1.msra.mxu0 0.0
    %2405 = vmatprep.subr.mxu0 0.0
    %2406 = vmatpush1.msra.mxu0 0.0
    %2407 = vmatprep.subr.mxu0 0.0
    %2408 = vmatpush1.msra.mxu0 0.0
    %2409 = vmatprep.subr.mxu0 0.0
    %2410 = vmatpush1.msra.mxu0 0.0
    %2411 = vmatprep.subr.mxu0 0.0
    %2412 = vmatpush1.msra.mxu0 0.0
    %2413 = vmatprep.subr.mxu0 0.0
    %2414 = vmatpush1.msra.mxu0 0.0
    %2415 = vmatprep.subr.mxu0 0.0
    %2416 = vmatpush1.msra.mxu0 0.0
    %2417 = vmatprep.subr.mxu0 0.0
    %2418 = vmatpush1.msra.mxu0 0.0
    %2419 = vmatprep.subr.mxu0 0.0
    %2420 = vmatpush1.msra.mxu0 0.0
    %2421 = vmatprep.subr.mxu0 0.0
    %2422 = vmatpush1.msra.mxu0 0.0
    %2423 = vmatprep.subr.mxu0 0.0
    %2424 = vmatpush1.msra.mxu0 0.0
    %2425 = vmatprep.subr.mxu0 0.0
    %2426 = vmatpush1.msra.mxu0 0.0
    %2427 = vmatprep.subr.mxu0 0.0
    %2428 = vmatpush1.msra.mxu0 0.0
    %2429 = vmatprep.subr.mxu0 0.0
    %2430 = vmatpush1.msra.mxu0 %v404
    %2431 = vmatprep.subr.mxu0 0.0
    %2432 = vmatpush1.msra.mxu0 %v403
    %2433 = vmatprep.subr.mxu0 0.0
    %2434 = vmatpush2.msra.mxu0 0.0
    %2435 = vmatprep.subr.mxu0 0.0
    %2436 = vmatpush2.msra.mxu0 0.0
    %2437 = vmatprep.subr.mxu0 0.0
    %2438 = vmatpush2.msra.mxu0 0.0
    %2439 = vmatprep.subr.mxu0 0.0
    %2440 = vmatpush2.msra.mxu0 0.0
    %2441 = vmatprep.subr.mxu0 0.0
    %2442 = vmatpush2.msra.mxu0 0.0
    %2443 = vmatprep.subr.mxu0 0.0
    %2444 = vmatpush2.msra.mxu0 0.0
    %2445 = vmatprep.subr.mxu0 0.0
    %2446 = vmatpush2.msra.mxu0 0.0
    %2447 = vmatprep.subr.mxu0 0.0
    %2448 = vmatpush2.msra.mxu0 0.0
    %2449 = vmatprep.subr.mxu0 0.0
    %2450 = vmatpush2.msra.mxu0 0.0
    %2451 = vmatprep.subr.mxu0 0.0
    %2452 = vmatpush2.msra.mxu0 0.0
    %2453 = vmatprep.subr.mxu0 0.0
    %2454 = vmatpush2.msra.mxu0 0.0
    %2455 = vmatprep.subr.mxu0 0.0
    %2456 = vmatpush2.msra.mxu0 0.0
    %2457 = vmatprep.subr.mxu0 0.0
    %2458 = vmatpush2.msra.mxu0 0.0
    %2459 = vmatprep.subr.mxu0 0.0
    %2460 = vmatpush2.msra.mxu0 0.0
    %2461 = vmatprep.subr.mxu0 0.0
    %2462 = vmatpush2.msra.mxu0 0.0
    %2463 = vmatprep.subr.mxu0 0.0
    %2464 = vmatpush2.msra.mxu0 0.0
    %2465 = vmatprep.mubr.f32.mxu0 0.0
    %2466 = vmatmul.mubr.f32.gmra.mxu0 %v2399
    %v2467 = vpop.f32.mrf.mxu0
    %v2468 = vadd.f32 0.0, %v2467
    %v2469 = vpop.f32.mrf.mxu0
    %2470 = vdwg.mxu0
    %2471 = vmatprep.subr.mxu0 0.0
    %2472 = vmatpush1.msra.mxu0 0.0
    %2473 = vmatprep.subr.mxu0 0.0
    %2474 = vmatpush1.msra.mxu0 0.0
    %2475 = vmatprep.subr.mxu0 0.0
    %2476 = vmatpush1.msra.mxu0 0.0
    %2477 = vmatprep.subr.mxu0 0.0
    %2478 = vmatpush1.msra.mxu0 0.0
    %2479 = vmatprep.subr.mxu0 0.0
    %2480 = vmatpush1.msra.mxu0 0.0
    %2481 = vmatprep.subr.mxu0 0.0
    %2482 = vmatpush1.msra.mxu0 0.0
    %2483 = vmatprep.subr.mxu0 0.0
    %2484 = vmatpush1.msra.mxu0 0.0
    %2485 = vmatprep.subr.mxu0 0.0
    %2486 = vmatpush1.msra.mxu0 0.0
    %2487 = vmatprep.subr.mxu0 0.0
    %2488 = vmatpush1.msra.mxu0 0.0
    %2489 = vmatprep.subr.mxu0 0.0
    %2490 = vmatpush1.msra.mxu0 0.0
    %2491 = vmatprep.subr.mxu0 0.0
    %2492 = vmatpush1.msra.mxu0 0.0
    %2493 = vmatprep.subr.mxu0 0.0
    %2494 = vmatpush1.msra.mxu0 0.0
    %2495 = vmatprep.subr.mxu0 0.0
    %2496 = vmatpush1.msra.mxu0 0.0
    %2497 = vmatprep.subr.mxu0 0.0
    %2498 = vmatpush1.msra.mxu0 0.0
    %2499 = vmatprep.subr.mxu0 0.0
    %2500 = vmatpush1.msra.mxu0 %v407
    %2501 = vmatprep.subr.mxu0 0.0
    %2502 = vmatpush1.msra.mxu0 %v406
    %2503 = vmatprep.subr.mxu0 0.0
    %2504 = vmatpush2.msra.mxu0 0.0
    %2505 = vmatprep.subr.mxu0 0.0
    %2506 = vmatpush2.msra.mxu0 0.0
    %2507 = vmatprep.subr.mxu0 0.0
    %2508 = vmatpush2.msra.mxu0 0.0
    %2509 = vmatprep.subr.mxu0 0.0
    %2510 = vmatpush2.msra.mxu0 0.0
    %2511 = vmatprep.subr.mxu0 0.0
    %2512 = vmatpush2.msra.mxu0 0.0
    %2513 = vmatprep.subr.mxu0 0.0
    %2514 = vmatpush2.msra.mxu0 0.0
    %2515 = vmatprep.subr.mxu0 0.0
    %2516 = vmatpush2.msra.mxu0 0.0
    %2517 = vmatprep.subr.mxu0 0.0
    %2518 = vmatpush2.msra.mxu0 0.0
    %2519 = vmatprep.subr.mxu0 0.0
    %2520 = vmatpush2.msra.mxu0 0.0
    %2521 = vmatprep.subr.mxu0 0.0
    %2522 = vmatpush2.msra.mxu0 0.0
    %2523 = vmatprep.subr.mxu0 0.0
    %2524 = vmatpush2.msra.mxu0 0.0
    %2525 = vmatprep.subr.mxu0 0.0
    %2526 = vmatpush2.msra.mxu0 0.0
    %2527 = vmatprep.subr.mxu0 0.0
    %2528 = vmatpush2.msra.mxu0 0.0
    %2529 = vmatprep.subr.mxu0 0.0
    %2530 = vmatpush2.msra.mxu0 0.0
    %2531 = vmatprep.subr.mxu0 0.0
    %2532 = vmatpush2.msra.mxu0 0.0
    %2533 = vmatprep.subr.mxu0 0.0
    %2534 = vmatpush2.msra.mxu0 0.0
    %2535 = vmatprep.mubr.f32.mxu0 0.0
    %2536 = vmatmul.mubr.f32.gmra.mxu0 %v2399
    %v2537 = vpop.f32.mrf.mxu0
    %v2538 = vadd.f32 0.0, %v2537
    %v2539 = vpop.f32.mrf.mxu0
    %2540 = vdwg.mxu0
    %2541 = vmatprep.subr.mxu0 0.0
    %2542 = vmatpush1.msra.mxu0 0.0
    %2543 = vmatprep.subr.mxu0 0.0
    %2544 = vmatpush1.msra.mxu0 0.0
    %2545 = vmatprep.subr.mxu0 0.0
    %2546 = vmatpush1.msra.mxu0 0.0
    %2547 = vmatprep.subr.mxu0 0.0
    %2548 = vmatpush1.msra.mxu0 0.0
    %2549 = vmatprep.subr.mxu0 0.0
    %2550 = vmatpush1.msra.mxu0 0.0
    %2551 = vmatprep.subr.mxu0 0.0
    %2552 = vmatpush1.msra.mxu0 0.0
    %2553 = vmatprep.subr.mxu0 0.0
    %2554 = vmatpush1.msra.mxu0 0.0
    %2555 = vmatprep.subr.mxu0 0.0
    %2556 = vmatpush1.msra.mxu0 0.0
    %2557 = vmatprep.subr.mxu0 0.0
    %2558 = vmatpush1.msra.mxu0 0.0
    %2559 = vmatprep.subr.mxu0 0.0
    %2560 = vmatpush1.msra.mxu0 0.0
    %2561 = vmatprep.subr.mxu0 0.0
    %2562 = vmatpush1.msra.mxu0 0.0
    %2563 = vmatprep.subr.mxu0 0.0
    %2564 = vmatpush1.msra.mxu0 0.0
    %2565 = vmatprep.subr.mxu0 0.0
    %2566 = vmatpush1.msra.mxu0 0.0
    %2567 = vmatprep.subr.mxu0 0.0
    %2568 = vmatpush1.msra.mxu0 0.0
    %2569 = vmatprep.subr.mxu0 0.0
    %2570 = vmatpush1.msra.mxu0 %v410
    %2571 = vmatprep.subr.mxu0 0.0
    %2572 = vmatpush1.msra.mxu0 %v409
    %2573 = vmatprep.subr.mxu0 0.0
    %2574 = vmatpush2.msra.mxu0 0.0
    %2575 = vmatprep.subr.mxu0 0.0
    %2576 = vmatpush2.msra.mxu0 0.0
    %2577 = vmatprep.subr.mxu0 0.0
    %2578 = vmatpush2.msra.mxu0 0.0
    %2579 = vmatprep.subr.mxu0 0.0
    %2580 = vmatpush2.msra.mxu0 0.0
    %2581 = vmatprep.subr.mxu0 0.0
    %2582 = vmatpush2.msra.mxu0 0.0
    %2583 = vmatprep.subr.mxu0 0.0
    %2584 = vmatpush2.msra.mxu0 0.0
    %2585 = vmatprep.subr.mxu0 0.0
    %2586 = vmatpush2.msra.mxu0 0.0
    %2587 = vmatprep.subr.mxu0 0.0
    %2588 = vmatpush2.msra.mxu0 0.0
    %2589 = vmatprep.subr.mxu0 0.0
    %2590 = vmatpush2.msra.mxu0 0.0
    %2591 = vmatprep.subr.mxu0 0.0
    %2592 = vmatpush2.msra.mxu0 0.0
    %2593 = vmatprep.subr.mxu0 0.0
    %2594 = vmatpush2.msra.mxu0 0.0
    %2595 = vmatprep.subr.mxu0 0.0
    %2596 = vmatpush2.msra.mxu0 0.0
    %2597 = vmatprep.subr.mxu0 0.0
    %2598 = vmatpush2.msra.mxu0 0.0
    %2599 = vmatprep.subr.mxu0 0.0
    %2600 = vmatpush2.msra.mxu0 0.0
    %2601 = vmatprep.subr.mxu0 0.0
    %2602 = vmatpush2.msra.mxu0 0.0
    %2603 = vmatprep.subr.mxu0 0.0
    %2604 = vmatpush2.msra.mxu0 0.0
    %2605 = vmatprep.mubr.f32.mxu0 0.0
    %2606 = vmatmul.mubr.f32.gmra.mxu0 %v2399
    %v2607 = vpop.f32.mrf.mxu0
    %v2608 = vadd.f32 0.0, %v2607
    %v2609 = vpop.f32.mrf.mxu0
    %2610 = vdwg.mxu0
    %2611 = vmatprep.subr.mxu0 0.0
    %2612 = vmatpush1.msra.mxu0 0.0
    %2613 = vmatprep.subr.mxu0 0.0
    %2614 = vmatpush1.msra.mxu0 0.0
    %2615 = vmatprep.subr.mxu0 0.0
    %2616 = vmatpush1.msra.mxu0 0.0
    %2617 = vmatprep.subr.mxu0 0.0
    %2618 = vmatpush1.msra.mxu0 0.0
    %2619 = vmatprep.subr.mxu0 0.0
    %2620 = vmatpush1.msra.mxu0 0.0
    %2621 = vmatprep.subr.mxu0 0.0
    %2622 = vmatpush1.msra.mxu0 0.0
    %2623 = vmatprep.subr.mxu0 0.0
    %2624 = vmatpush1.msra.mxu0 0.0
    %2625 = vmatprep.subr.mxu0 0.0
    %2626 = vmatpush1.msra.mxu0 0.0
    %2627 = vmatprep.subr.mxu0 0.0
    %2628 = vmatpush1.msra.mxu0 0.0
    %2629 = vmatprep.subr.mxu0 0.0
    %2630 = vmatpush1.msra.mxu0 0.0
    %2631 = vmatprep.subr.mxu0 0.0
    %2632 = vmatpush1.msra.mxu0 0.0
    %2633 = vmatprep.subr.mxu0 0.0
    %2634 = vmatpush1.msra.mxu0 0.0
    %2635 = vmatprep.subr.mxu0 0.0
    %2636 = vmatpush1.msra.mxu0 0.0
    %2637 = vmatprep.subr.mxu0 0.0
    %2638 = vmatpush1.msra.mxu0 0.0
    %2639 = vmatprep.subr.mxu0 0.0
    %2640 = vmatpush1.msra.mxu0 %v413
    %2641 = vmatprep.subr.mxu0 0.0
    %2642 = vmatpush1.msra.mxu0 %v412
    %2643 = vmatprep.subr.mxu0 0.0
    %2644 = vmatpush2.msra.mxu0 0.0
    %2645 = vmatprep.subr.mxu0 0.0
    %2646 = vmatpush2.msra.mxu0 0.0
    %2647 = vmatprep.subr.mxu0 0.0
    %2648 = vmatpush2.msra.mxu0 0.0
    %2649 = vmatprep.subr.mxu0 0.0
    %2650 = vmatpush2.msra.mxu0 0.0
    %2651 = vmatprep.subr.mxu0 0.0
    %2652 = vmatpush2.msra.mxu0 0.0
    %2653 = vmatprep.subr.mxu0 0.0
    %2654 = vmatpush2.msra.mxu0 0.0
    %2655 = vmatprep.subr.mxu0 0.0
    %2656 = vmatpush2.msra.mxu0 0.0
    %2657 = vmatprep.subr.mxu0 0.0
    %2658 = vmatpush2.msra.mxu0 0.0
    %2659 = vmatprep.subr.mxu0 0.0
    %2660 = vmatpush2.msra.mxu0 0.0
    %2661 = vmatprep.subr.mxu0 0.0
    %2662 = vmatpush2.msra.mxu0 0.0
    %2663 = vmatprep.subr.mxu0 0.0
    %2664 = vmatpush2.msra.mxu0 0.0
    %2665 = vmatprep.subr.mxu0 0.0
    %2666 = vmatpush2.msra.mxu0 0.0
    %2667 = vmatprep.subr.mxu0 0.0
    %2668 = vmatpush2.msra.mxu0 0.0
    %2669 = vmatprep.subr.mxu0 0.0
    %2670 = vmatpush2.msra.mxu0 0.0
    %2671 = vmatprep.subr.mxu0 0.0
    %2672 = vmatpush2.msra.mxu0 0.0
    %2673 = vmatprep.subr.mxu0 0.0
    %2674 = vmatpush2.msra.mxu0 0.0
    %2675 = vmatprep.mubr.f32.mxu0 0.0
    %2676 = vmatmul.mubr.f32.gmra.mxu0 %v2399
    %v2677 = vpop.f32.mrf.mxu0
    %v2678 = vadd.f32 0.0, %v2677
    %v2679 = vpop.f32.mrf.mxu0
    %2680 = vdwg.mxu0
    %v2682 = vrot.slane %v2468, 4
    %v2684 = vadd.f32 %v145, %v2682
    %v2685 = vxor.u32 %v2684, 2147483648
    %v2686 = vmul.f32 %v2685, 1.442695
    %v2687 = vpow.pop %v2686
    %v2688 = vadd.f32 %v2687, 1.0
    %v2689 = vrcp.pop %v2688
    %v2690 = vmul.f32 1.0, %v2689
    %v2692 = vrot.slane %v2538, 4
    %v2694 = vadd.f32 %v230, %v2692
    %v2695 = vxor.u32 %v2694, 2147483648
    %v2696 = vmul.f32 %v2695, 1.442695
    %v2697 = vpow.pop %v2696
    %v2698 = vadd.f32 %v2697, 1.0
    %v2699 = vrcp.pop %v2698
    %v2700 = vmul.f32 1.0, %v2699
    %v2702 = vrot.slane %v2608, 4
    %v2704 = vadd.f32 %v315, %v2702
    %v2705 = vtanh.pop %v2704
    %v2707 = vrot.slane %v2678, 4
    %v2709 = vadd.f32 %v400, %v2707
    %v2710 = vxor.u32 %v2709, 2147483648
    %v2711 = vmul.f32 %v2710, 1.442695
    %v2712 = vpow.pop %v2711
    %v2713 = vadd.f32 %v2712, 1.0
    %v2714 = vrcp.pop %v2713
    %v2715 = vmul.f32 1.0, %v2714
    %v2717 = vrot.slane %v2385, 6
    %v2719 = vmul.f32 %v2700, %v2717
    %v2720 = vmul.f32 %v2690, %v2705
    %v2721 = vadd.f32 %v2719, %v2720
    %v2722 = vtanh.pop %v2721
    %v2723 = vmul.f32 %v2715, %v2722
    %vm2724 = vcmp.gt.s32.totalorder %v55, 6
    %v2725 = vsel %vm2724, 1, 0
    %2726 = vset.pattern.permute.xlu0 0
    %2727 = vperm.xlu0 %2726, %v2725
    %v2728 = vpop.permute.xlu0 %2727
    %vm2729 = vcmp.eq.s32.totalorder %v2728, 1
    %v2731 = vrot.slane %v2723, 4
    %v2733 = vsel %vm2729, %v2731, %v2397
    %v2735 = vsel %vm414, %v2733, 0
    %2737 = vmatprep.subr.mxu0 0.0
    %2738 = vmatpush1.msra.mxu0 0.0
    %2739 = vmatprep.subr.mxu0 0.0
    %2740 = vmatpush1.msra.mxu0 0.0
    %2741 = vmatprep.subr.mxu0 0.0
    %2742 = vmatpush1.msra.mxu0 0.0
    %2743 = vmatprep.subr.mxu0 0.0
    %2744 = vmatpush1.msra.mxu0 0.0
    %2745 = vmatprep.subr.mxu0 0.0
    %2746 = vmatpush1.msra.mxu0 0.0
    %2747 = vmatprep.subr.mxu0 0.0
    %2748 = vmatpush1.msra.mxu0 0.0
    %2749 = vmatprep.subr.mxu0 0.0
    %2750 = vmatpush1.msra.mxu0 0.0
    %2751 = vmatprep.subr.mxu0 0.0
    %2752 = vmatpush1.msra.mxu0 0.0
    %2753 = vmatprep.subr.mxu0 0.0
    %2754 = vmatpush1.msra.mxu0 0.0
    %2755 = vmatprep.subr.mxu0 0.0
    %2756 = vmatpush1.msra.mxu0 0.0
    %2757 = vmatprep.subr.mxu0 0.0
    %2758 = vmatpush1.msra.mxu0 0.0
    %2759 = vmatprep.subr.mxu0 0.0
    %2760 = vmatpush1.msra.mxu0 0.0
    %2761 = vmatprep.subr.mxu0 0.0
    %2762 = vmatpush1.msra.mxu0 0.0
    %2763 = vmatprep.subr.mxu0 0.0
    %2764 = vmatpush1.msra.mxu0 0.0
    %2765 = vmatprep.subr.mxu0 0.0
    %2766 = vmatpush1.msra.mxu0 %v404
    %2767 = vmatprep.subr.mxu0 0.0
    %2768 = vmatpush1.msra.mxu0 %v403
    %2769 = vmatprep.subr.mxu0 0.0
    %2770 = vmatpush2.msra.mxu0 0.0
    %2771 = vmatprep.subr.mxu0 0.0
    %2772 = vmatpush2.msra.mxu0 0.0
    %2773 = vmatprep.subr.mxu0 0.0
    %2774 = vmatpush2.msra.mxu0 0.0
    %2775 = vmatprep.subr.mxu0 0.0
    %2776 = vmatpush2.msra.mxu0 0.0
    %2777 = vmatprep.subr.mxu0 0.0
    %2778 = vmatpush2.msra.mxu0 0.0
    %2779 = vmatprep.subr.mxu0 0.0
    %2780 = vmatpush2.msra.mxu0 0.0
    %2781 = vmatprep.subr.mxu0 0.0
    %2782 = vmatpush2.msra.mxu0 0.0
    %2783 = vmatprep.subr.mxu0 0.0
    %2784 = vmatpush2.msra.mxu0 0.0
    %2785 = vmatprep.subr.mxu0 0.0
    %2786 = vmatpush2.msra.mxu0 0.0
    %2787 = vmatprep.subr.mxu0 0.0
    %2788 = vmatpush2.msra.mxu0 0.0
    %2789 = vmatprep.subr.mxu0 0.0
    %2790 = vmatpush2.msra.mxu0 0.0
    %2791 = vmatprep.subr.mxu0 0.0
    %2792 = vmatpush2.msra.mxu0 0.0
    %2793 = vmatprep.subr.mxu0 0.0
    %2794 = vmatpush2.msra.mxu0 0.0
    %2795 = vmatprep.subr.mxu0 0.0
    %2796 = vmatpush2.msra.mxu0 0.0
    %2797 = vmatprep.subr.mxu0 0.0
    %2798 = vmatpush2.msra.mxu0 0.0
    %2799 = vmatprep.subr.mxu0 0.0
    %2800 = vmatpush2.msra.mxu0 0.0
    %2801 = vmatprep.mubr.f32.mxu0 0.0
    %2802 = vmatmul.mubr.f32.gmra.mxu0 %v2735
    %v2803 = vpop.f32.mrf.mxu0
    %v2804 = vadd.f32 0.0, %v2803
    %v2805 = vpop.f32.mrf.mxu0
    %2806 = vdwg.mxu0
    %2807 = vmatprep.subr.mxu0 0.0
    %2808 = vmatpush1.msra.mxu0 0.0
    %2809 = vmatprep.subr.mxu0 0.0
    %2810 = vmatpush1.msra.mxu0 0.0
    %2811 = vmatprep.subr.mxu0 0.0
    %2812 = vmatpush1.msra.mxu0 0.0
    %2813 = vmatprep.subr.mxu0 0.0
    %2814 = vmatpush1.msra.mxu0 0.0
    %2815 = vmatprep.subr.mxu0 0.0
    %2816 = vmatpush1.msra.mxu0 0.0
    %2817 = vmatprep.subr.mxu0 0.0
    %2818 = vmatpush1.msra.mxu0 0.0
    %2819 = vmatprep.subr.mxu0 0.0
    %2820 = vmatpush1.msra.mxu0 0.0
    %2821 = vmatprep.subr.mxu0 0.0
    %2822 = vmatpush1.msra.mxu0 0.0
    %2823 = vmatprep.subr.mxu0 0.0
    %2824 = vmatpush1.msra.mxu0 0.0
    %2825 = vmatprep.subr.mxu0 0.0
    %2826 = vmatpush1.msra.mxu0 0.0
    %2827 = vmatprep.subr.mxu0 0.0
    %2828 = vmatpush1.msra.mxu0 0.0
    %2829 = vmatprep.subr.mxu0 0.0
    %2830 = vmatpush1.msra.mxu0 0.0
    %2831 = vmatprep.subr.mxu0 0.0
    %2832 = vmatpush1.msra.mxu0 0.0
    %2833 = vmatprep.subr.mxu0 0.0
    %2834 = vmatpush1.msra.mxu0 0.0
    %2835 = vmatprep.subr.mxu0 0.0
    %2836 = vmatpush1.msra.mxu0 %v407
    %2837 = vmatprep.subr.mxu0 0.0
    %2838 = vmatpush1.msra.mxu0 %v406
    %2839 = vmatprep.subr.mxu0 0.0
    %2840 = vmatpush2.msra.mxu0 0.0
    %2841 = vmatprep.subr.mxu0 0.0
    %2842 = vmatpush2.msra.mxu0 0.0
    %2843 = vmatprep.subr.mxu0 0.0
    %2844 = vmatpush2.msra.mxu0 0.0
    %2845 = vmatprep.subr.mxu0 0.0
    %2846 = vmatpush2.msra.mxu0 0.0
    %2847 = vmatprep.subr.mxu0 0.0
    %2848 = vmatpush2.msra.mxu0 0.0
    %2849 = vmatprep.subr.mxu0 0.0
    %2850 = vmatpush2.msra.mxu0 0.0
    %2851 = vmatprep.subr.mxu0 0.0
    %2852 = vmatpush2.msra.mxu0 0.0
    %2853 = vmatprep.subr.mxu0 0.0
    %2854 = vmatpush2.msra.mxu0 0.0
    %2855 = vmatprep.subr.mxu0 0.0
    %2856 = vmatpush2.msra.mxu0 0.0
    %2857 = vmatprep.subr.mxu0 0.0
    %2858 = vmatpush2.msra.mxu0 0.0
    %2859 = vmatprep.subr.mxu0 0.0
    %2860 = vmatpush2.msra.mxu0 0.0
    %2861 = vmatprep.subr.mxu0 0.0
    %2862 = vmatpush2.msra.mxu0 0.0
    %2863 = vmatprep.subr.mxu0 0.0
    %2864 = vmatpush2.msra.mxu0 0.0
    %2865 = vmatprep.subr.mxu0 0.0
    %2866 = vmatpush2.msra.mxu0 0.0
    %2867 = vmatprep.subr.mxu0 0.0
    %2868 = vmatpush2.msra.mxu0 0.0
    %2869 = vmatprep.subr.mxu0 0.0
    %2870 = vmatpush2.msra.mxu0 0.0
    %2871 = vmatprep.mubr.f32.mxu0 0.0
    %2872 = vmatmul.mubr.f32.gmra.mxu0 %v2735
    %v2873 = vpop.f32.mrf.mxu0
    %v2874 = vadd.f32 0.0, %v2873
    %v2875 = vpop.f32.mrf.mxu0
    %2876 = vdwg.mxu0
    %2877 = vmatprep.subr.mxu0 0.0
    %2878 = vmatpush1.msra.mxu0 0.0
    %2879 = vmatprep.subr.mxu0 0.0
    %2880 = vmatpush1.msra.mxu0 0.0
    %2881 = vmatprep.subr.mxu0 0.0
    %2882 = vmatpush1.msra.mxu0 0.0
    %2883 = vmatprep.subr.mxu0 0.0
    %2884 = vmatpush1.msra.mxu0 0.0
    %2885 = vmatprep.subr.mxu0 0.0
    %2886 = vmatpush1.msra.mxu0 0.0
    %2887 = vmatprep.subr.mxu0 0.0
    %2888 = vmatpush1.msra.mxu0 0.0
    %2889 = vmatprep.subr.mxu0 0.0
    %2890 = vmatpush1.msra.mxu0 0.0
    %2891 = vmatprep.subr.mxu0 0.0
    %2892 = vmatpush1.msra.mxu0 0.0
    %2893 = vmatprep.subr.mxu0 0.0
    %2894 = vmatpush1.msra.mxu0 0.0
    %2895 = vmatprep.subr.mxu0 0.0
    %2896 = vmatpush1.msra.mxu0 0.0
    %2897 = vmatprep.subr.mxu0 0.0
    %2898 = vmatpush1.msra.mxu0 0.0
    %2899 = vmatprep.subr.mxu0 0.0
    %2900 = vmatpush1.msra.mxu0 0.0
    %2901 = vmatprep.subr.mxu0 0.0
    %2902 = vmatpush1.msra.mxu0 0.0
    %2903 = vmatprep.subr.mxu0 0.0
    %2904 = vmatpush1.msra.mxu0 0.0
    %2905 = vmatprep.subr.mxu0 0.0
    %2906 = vmatpush1.msra.mxu0 %v410
    %2907 = vmatprep.subr.mxu0 0.0
    %2908 = vmatpush1.msra.mxu0 %v409
    %2909 = vmatprep.subr.mxu0 0.0
    %2910 = vmatpush2.msra.mxu0 0.0
    %2911 = vmatprep.subr.mxu0 0.0
    %2912 = vmatpush2.msra.mxu0 0.0
    %2913 = vmatprep.subr.mxu0 0.0
    %2914 = vmatpush2.msra.mxu0 0.0
    %2915 = vmatprep.subr.mxu0 0.0
    %2916 = vmatpush2.msra.mxu0 0.0
    %2917 = vmatprep.subr.mxu0 0.0
    %2918 = vmatpush2.msra.mxu0 0.0
    %2919 = vmatprep.subr.mxu0 0.0
    %2920 = vmatpush2.msra.mxu0 0.0
    %2921 = vmatprep.subr.mxu0 0.0
    %2922 = vmatpush2.msra.mxu0 0.0
    %2923 = vmatprep.subr.mxu0 0.0
    %2924 = vmatpush2.msra.mxu0 0.0
    %2925 = vmatprep.subr.mxu0 0.0
    %2926 = vmatpush2.msra.mxu0 0.0
    %2927 = vmatprep.subr.mxu0 0.0
    %2928 = vmatpush2.msra.mxu0 0.0
    %2929 = vmatprep.subr.mxu0 0.0
    %2930 = vmatpush2.msra.mxu0 0.0
    %2931 = vmatprep.subr.mxu0 0.0
    %2932 = vmatpush2.msra.mxu0 0.0
    %2933 = vmatprep.subr.mxu0 0.0
    %2934 = vmatpush2.msra.mxu0 0.0
    %2935 = vmatprep.subr.mxu0 0.0
    %2936 = vmatpush2.msra.mxu0 0.0
    %2937 = vmatprep.subr.mxu0 0.0
    %2938 = vmatpush2.msra.mxu0 0.0
    %2939 = vmatprep.subr.mxu0 0.0
    %2940 = vmatpush2.msra.mxu0 0.0
    %2941 = vmatprep.mubr.f32.mxu0 0.0
    %2942 = vmatmul.mubr.f32.gmra.mxu0 %v2735
    %v2943 = vpop.f32.mrf.mxu0
    %v2944 = vadd.f32 0.0, %v2943
    %v2945 = vpop.f32.mrf.mxu0
    %2946 = vdwg.mxu0
    %2947 = vmatprep.subr.mxu0 0.0
    %2948 = vmatpush1.msra.mxu0 0.0
    %2949 = vmatprep.subr.mxu0 0.0
    %2950 = vmatpush1.msra.mxu0 0.0
    %2951 = vmatprep.subr.mxu0 0.0
    %2952 = vmatpush1.msra.mxu0 0.0
    %2953 = vmatprep.subr.mxu0 0.0
    %2954 = vmatpush1.msra.mxu0 0.0
    %2955 = vmatprep.subr.mxu0 0.0
    %2956 = vmatpush1.msra.mxu0 0.0
    %2957 = vmatprep.subr.mxu0 0.0
    %2958 = vmatpush1.msra.mxu0 0.0
    %2959 = vmatprep.subr.mxu0 0.0
    %2960 = vmatpush1.msra.mxu0 0.0
    %2961 = vmatprep.subr.mxu0 0.0
    %2962 = vmatpush1.msra.mxu0 0.0
    %2963 = vmatprep.subr.mxu0 0.0
    %2964 = vmatpush1.msra.mxu0 0.0
    %2965 = vmatprep.subr.mxu0 0.0
    %2966 = vmatpush1.msra.mxu0 0.0
    %2967 = vmatprep.subr.mxu0 0.0
    %2968 = vmatpush1.msra.mxu0 0.0
    %2969 = vmatprep.subr.mxu0 0.0
    %2970 = vmatpush1.msra.mxu0 0.0
    %2971 = vmatprep.subr.mxu0 0.0
    %2972 = vmatpush1.msra.mxu0 0.0
    %2973 = vmatprep.subr.mxu0 0.0
    %2974 = vmatpush1.msra.mxu0 0.0
    %2975 = vmatprep.subr.mxu0 0.0
    %2976 = vmatpush1.msra.mxu0 %v413
    %2977 = vmatprep.subr.mxu0 0.0
    %2978 = vmatpush1.msra.mxu0 %v412
    %2979 = vmatprep.subr.mxu0 0.0
    %2980 = vmatpush2.msra.mxu0 0.0
    %2981 = vmatprep.subr.mxu0 0.0
    %2982 = vmatpush2.msra.mxu0 0.0
    %2983 = vmatprep.subr.mxu0 0.0
    %2984 = vmatpush2.msra.mxu0 0.0
    %2985 = vmatprep.subr.mxu0 0.0
    %2986 = vmatpush2.msra.mxu0 0.0
    %2987 = vmatprep.subr.mxu0 0.0
    %2988 = vmatpush2.msra.mxu0 0.0
    %2989 = vmatprep.subr.mxu0 0.0
    %2990 = vmatpush2.msra.mxu0 0.0
    %2991 = vmatprep.subr.mxu0 0.0
    %2992 = vmatpush2.msra.mxu0 0.0
    %2993 = vmatprep.subr.mxu0 0.0
    %2994 = vmatpush2.msra.mxu0 0.0
    %2995 = vmatprep.subr.mxu0 0.0
    %2996 = vmatpush2.msra.mxu0 0.0
    %2997 = vmatprep.subr.mxu0 0.0
    %2998 = vmatpush2.msra.mxu0 0.0
    %2999 = vmatprep.subr.mxu0 0.0
    %3000 = vmatpush2.msra.mxu0 0.0
    %3001 = vmatprep.subr.mxu0 0.0
    %3002 = vmatpush2.msra.mxu0 0.0
    %3003 = vmatprep.subr.mxu0 0.0
    %3004 = vmatpush2.msra.mxu0 0.0
    %3005 = vmatprep.subr.mxu0 0.0
    %3006 = vmatpush2.msra.mxu0 0.0
    %3007 = vmatprep.subr.mxu0 0.0
    %3008 = vmatpush2.msra.mxu0 0.0
    %3009 = vmatprep.subr.mxu0 0.0
    %3010 = vmatpush2.msra.mxu0 0.0
    %3011 = vmatprep.mubr.f32.mxu0 0.0
    %3012 = vmatmul.mubr.f32.gmra.mxu0 %v2735
    %v3013 = vpop.f32.mrf.mxu0
    %v3014 = vadd.f32 0.0, %v3013
    %v3015 = vpop.f32.mrf.mxu0
    %3016 = vdwg.mxu0
    %v3018 = vrot.slane %v2804, 2
    %v3020 = vadd.f32 %v145, %v3018
    %v3021 = vxor.u32 %v3020, 2147483648
    %v3022 = vmul.f32 %v3021, 1.442695
    %v3023 = vpow.pop %v3022
    %v3024 = vadd.f32 %v3023, 1.0
    %v3025 = vrcp.pop %v3024
    %v3026 = vmul.f32 1.0, %v3025
    %v3028 = vrot.slane %v2874, 2
    %v3030 = vadd.f32 %v230, %v3028
    %v3031 = vxor.u32 %v3030, 2147483648
    %v3032 = vmul.f32 %v3031, 1.442695
    %v3033 = vpow.pop %v3032
    %v3034 = vadd.f32 %v3033, 1.0
    %v3035 = vrcp.pop %v3034
    %v3036 = vmul.f32 1.0, %v3035
    %v3038 = vrot.slane %v2944, 2
    %v3040 = vadd.f32 %v315, %v3038
    %v3041 = vtanh.pop %v3040
    %v3043 = vrot.slane %v3014, 2
    %v3045 = vadd.f32 %v400, %v3043
    %v3046 = vxor.u32 %v3045, 2147483648
    %v3047 = vmul.f32 %v3046, 1.442695
    %v3048 = vpow.pop %v3047
    %v3049 = vadd.f32 %v3048, 1.0
    %v3050 = vrcp.pop %v3049
    %v3051 = vmul.f32 1.0, %v3050
    %v3053 = vrot.slane %v2721, 6
    %v3055 = vmul.f32 %v3036, %v3053
    %v3056 = vmul.f32 %v3026, %v3041
    %v3057 = vadd.f32 %v3055, %v3056
    %v3058 = vtanh.pop %v3057
    %v3059 = vmul.f32 %v3051, %v3058
    %vm3060 = vcmp.gt.s32.totalorder %v55, 7
    %v3061 = vsel %vm3060, 1, 0
    %3062 = vset.pattern.permute.xlu0 0
    %3063 = vperm.xlu0 %3062, %v3061
    %v3064 = vpop.permute.xlu0 %3063
    %vm3065 = vcmp.eq.s32.totalorder %v3064, 1
    %v3067 = vrot.slane %v3059, 6
    %v3069 = vsel %vm3065, %v3067, %v2733
    %v3070 = vld [vmem:[#allocation5] sm:$0xff]
    %v3071 = vld [vmem:[#allocation5 + $0x8] sm:$0xff]
    %v3072 = vld [vmem:[%s6] sm:$0x1]
    %v3074 = vlaneseq
    %v3075 = vshrl.u32 %v3074, 7
    %v3076 = vsub.s32 0, %v3075
    %v3077 = vrot.slane %v3072, %v3076
    %v3080 = vsel %vm414, %v3069, 0
    %3082 = vmatprep.subr.mxu0 0.0
    %3083 = vmatpush1.msra.mxu0 0.0
    %3084 = vmatprep.subr.mxu0 0.0
    %3085 = vmatpush1.msra.mxu0 0.0
    %3086 = vmatprep.subr.mxu0 0.0
    %3087 = vmatpush1.msra.mxu0 0.0
    %3088 = vmatprep.subr.mxu0 0.0
    %3089 = vmatpush1.msra.mxu0 0.0
    %3090 = vmatprep.subr.mxu0 0.0
    %3091 = vmatpush1.msra.mxu0 0.0
    %3092 = vmatprep.subr.mxu0 0.0
    %3093 = vmatpush1.msra.mxu0 0.0
    %3094 = vmatprep.subr.mxu0 0.0
    %3095 = vmatpush1.msra.mxu0 0.0
    %3096 = vmatprep.subr.mxu0 0.0
    %3097 = vmatpush1.msra.mxu0 0.0
    %3098 = vmatprep.subr.mxu0 0.0
    %3099 = vmatpush1.msra.mxu0 0.0
    %3100 = vmatprep.subr.mxu0 0.0
    %3101 = vmatpush1.msra.mxu0 0.0
    %3102 = vmatprep.subr.mxu0 0.0
    %3103 = vmatpush1.msra.mxu0 0.0
    %3104 = vmatprep.subr.mxu0 0.0
    %3105 = vmatpush1.msra.mxu0 0.0
    %3106 = vmatprep.subr.mxu0 0.0
    %3107 = vmatpush1.msra.mxu0 0.0
    %3108 = vmatprep.subr.mxu0 0.0
    %3109 = vmatpush1.msra.mxu0 0.0
    %3110 = vmatprep.subr.mxu0 0.0
    %3111 = vmatpush1.msra.mxu0 %v3071
    %3112 = vmatprep.subr.mxu0 0.0
    %3113 = vmatpush1.msra.mxu0 %v3070
    %3114 = vmatprep.subr.mxu0 0.0
    %3115 = vmatpush2.msra.mxu0 0.0
    %3116 = vmatprep.subr.mxu0 0.0
    %3117 = vmatpush2.msra.mxu0 0.0
    %3118 = vmatprep.subr.mxu0 0.0
    %3119 = vmatpush2.msra.mxu0 0.0
    %3120 = vmatprep.subr.mxu0 0.0
    %3121 = vmatpush2.msra.mxu0 0.0
    %3122 = vmatprep.subr.mxu0 0.0
    %3123 = vmatpush2.msra.mxu0 0.0
    %3124 = vmatprep.subr.mxu0 0.0
    %3125 = vmatpush2.msra.mxu0 0.0
    %3126 = vmatprep.subr.mxu0 0.0
    %3127 = vmatpush2.msra.mxu0 0.0
    %3128 = vmatprep.subr.mxu0 0.0
    %3129 = vmatpush2.msra.mxu0 0.0
    %3130 = vmatprep.subr.mxu0 0.0
    %3131 = vmatpush2.msra.mxu0 0.0
    %3132 = vmatprep.subr.mxu0 0.0
    %3133 = vmatpush2.msra.mxu0 0.0
    %3134 = vmatprep.subr.mxu0 0.0
    %3135 = vmatpush2.msra.mxu0 0.0
    %3136 = vmatprep.subr.mxu0 0.0
    %3137 = vmatpush2.msra.mxu0 0.0
    %3138 = vmatprep.subr.mxu0 0.0
    %3139 = vmatpush2.msra.mxu0 0.0
    %3140 = vmatprep.subr.mxu0 0.0
    %3141 = vmatpush2.msra.mxu0 0.0
    %3142 = vmatprep.subr.mxu0 0.0
    %3143 = vmatpush2.msra.mxu0 0.0
    %3144 = vmatprep.subr.mxu0 0.0
    %3145 = vmatpush2.msra.mxu0 0.0
    %3146 = vmatprep.mubr.f32.mxu0 0.0
    %3147 = vmatmul.mubr.f32.gmra.mxu0 %v3080
    %v3148 = vpop.f32.mrf.mxu0
    %v3149 = vadd.f32 %v3077, %v3148
    %v3150 = vpop.f32.mrf.mxu0
    %3151 = vdwg.mxu0
    %vm3152 = vcmask 123904
    %3153 = vst.msk [vmem:[#allocation7] sm:$0x3] %vm3152, %v3149
    // Predicated region
    $region38: #{auvi_subnet_forward.1} parent=1 // pred_check
      _
    $region39: #{auvi_subnet_forward.1} parent=1 // pred_check_branch
      %3155 = sbr.rel (0) target = $region41
    $region40: #{auvi_subnet_forward.1} parent=1 // pred_region
      %s3157 = ssub.s32 32, 32
      %3158 = vsyncadd [#allocation4], %s3157
      %s3160 = sshll.u32 [#allocation7], 4
      %s3161 = int_to_ptr.vmem [resolvable:$true] %s3160
      %3163 = dma.vmem_to_hbm [thread:$0]  %s3161, 32, %s7, [#allocation4]
    $region41: #{auvi_subnet_forward.1} parent=1 // pred_fallthru
      _
    // Predicated region
    $region42: #{auvi_subnet_forward.1} parent=1 // pred_check
      _
    $region43: #{auvi_subnet_forward.1} parent=1 // pred_check_branch
      %3165 = sbr.rel (0) target = $region45
    $region44: #{auvi_subnet_forward.1} parent=1 // pred_region
      %3166 = dma.done [#allocation4], 32
    $region45: #{auvi_subnet_forward.1} parent=1 // pred_fallthru
      _
    %3167 = vsyncpa [#allocation3], 1
    %3168 = vsyncpa [#allocation6], 1
    %3169 = vsyncpa [#allocation4], 1

</llo_original>
